<compile_context>
chip_gen: v6e
topology: v6e:2x2x1
jax: 0.10.0
libtpu: 0.0.40
codegen_flags: <defaults>
</compile_context>

<pallas_src>
import functools

import jax
import jax.numpy as jnp
import numpy as np
from jax.experimental import pallas as pl
from jax.experimental.pallas import tpu as pltpu


_COMPILER_PARAMS = pltpu.CompilerParams(dimension_semantics=("arbitrary",))


def _full_spec(shape):
    nd = len(shape)
    return pl.BlockSpec(tuple(shape), lambda i, _nd=nd: (0,) * _nd)


def _cost_estimate(args, out_shapes, flops, transcendentals):
    nbytes = 0
    for a in args:
        nbytes += int(np.prod(a.shape)) * np.dtype(a.dtype).itemsize
    for s in out_shapes:
        nbytes += int(np.prod(s.shape)) * np.dtype(s.dtype).itemsize
    return pl.CostEstimate(flops=int(flops), transcendentals=int(transcendentals),
                           bytes_accessed=int(nbytes))


# ----------------------------------------------------------------------------
# Fused per-layer kernel: all linears + both edge directions + node updates.
# When `final` is True the edge predictor tail is fused in and the only output
# is the (E, out_dim) prediction (the last layer's backward message is dead).
# ----------------------------------------------------------------------------
def _gas_layer_kernel(*refs, act, final):
    if final:
        (f_ref, b_ref, u_ref, v_ref,
         wu_ref, bu_ref, wv_ref, bv_ref, we_ref, be_ref,
         wwu_s_ref, wwu_e_ref, bwu_ref, wwv_s_ref, wwv_e_ref, bwv_ref,
         wpe_ref, wpuv_ref, wpun_ref, wpvv_ref, wpvn_ref, bp_ref,
         out_ref) = refs
    else:
        (f_ref, b_ref, u_ref, v_ref,
         wu_ref, bu_ref, wv_ref, bv_ref, we_ref, be_ref,
         wwu_s_ref, wwu_e_ref, bwu_ref, wwv_s_ref, wwv_e_ref, bwv_ref,
         hf_ref, hb_ref, huv_ref, hun_ref, hvv_ref, hvn_ref) = refs

    f32, bf16 = jnp.float32, jnp.bfloat16
    Nu = u_ref.shape[0]
    Nv = v_ref.shape[0]
    E, e_in = f_ref.shape
    u_in = u_ref.shape[-1]
    v_in = v_ref.shape[-1]
    eo = we_ref.shape[-1]
    attu = v_in + e_in                     # W_ATTN_u output width
    attv = u_in + e_in                     # W_ATTN_v output width
    relu = (lambda x: jnp.maximum(x, 0.0)) if act else (lambda x: x)

    u_bf = u_ref[...]                                  # (Nu, u_in) bf16
    v_bf = v_ref[...]                                  # (Nv, v_in) bf16
    f2_bf = f_ref[...]                                 # (E, e_in)  bf16
    b2_bf = b_ref[...]
    # 3-D f32 views for dense per-edge VPU work (pure relabel when Nv % 8 == 0;
    # element-wise math kept in f32 since v5e has no bf16 VPU/EUP).
    f3 = f2_bf.astype(f32).reshape(Nu, Nv, e_in)
    b3 = b2_bf.astype(f32).reshape(Nu, Nv, e_in)

    # ---- fused node projections: one wide bf16 MXU pass per node side -------
    # u columns = [u_linear | W_ATTN_u | Vu], v columns = [v_linear | W_ATTN_v | Vv]
    hu_all = (jnp.dot(u_bf, wu_ref[...], preferred_element_type=f32)
              + bu_ref[...].astype(f32))
    hv_all = (jnp.dot(v_bf, wv_ref[...], preferred_element_type=f32)
              + bv_ref[...].astype(f32))
    he_u = hu_all[:, :eo]
    att_u_s = hu_all[:, eo:eo + v_in]
    att_u_e = hu_all[:, eo + v_in:eo + attu]
    vu = hu_all[:, eo + attu:]                         # Vu(u_feat)
    he_v = hv_all[:, :eo]
    att_v_s = hv_all[:, eo:eo + u_in]
    att_v_e = hv_all[:, eo + u_in:eo + attv]
    vv = hv_all[:, eo + attv:]                         # Vv(v_feat)

    # per-edge node sum he_u[i] + he_v[j], flattened back to the (E, eo) layout
    node_sum2 = (he_u[:, None, :] + he_v[None, :, :]).reshape(E, eo)

    we = we_ref[...]
    be = be_ref[...].astype(f32)
    # forward edge message (needed by the next layer or by the predictor)
    hf2 = relu(jnp.dot(f2_bf, we, preferred_element_type=f32) + be + node_sum2)

    # ---- forward direction: src u (rows) -> dst v (cols); softmax over rows --
    # score[i,j] = <u[i], att_v_s[j]> + <f[i,j], att_v_e[j]>
    score_f = jax.lax.dot_general(u_bf, att_v_s.astype(bf16),
                                  (((1,), (1,)), ((), ())),
                                  preferred_element_type=f32)           # (Nu, Nv)
    score_f = score_f + jnp.sum(f3 * att_v_e[None, :, :], axis=-1)
    ex_f = jnp.exp(score_f - jnp.max(score_f, axis=0, keepdims=True))
    sfm_f = ex_f / jnp.sum(ex_f, axis=0, keepdims=True)     # exact normalizer
    # aggregation kept transposed so the big (Nu, Nv) matrix is never transposed
    agg_v_sT = jax.lax.dot_general(u_bf, sfm_f.astype(bf16),
                                   (((0,), (0,)), ((), ())),
                                   preferred_element_type=f32)          # (u_in, Nv)
    agg_v_e = jnp.sum(f3 * sfm_f[:, :, None], axis=0)                   # (Nv, e_in)

    # ---- backward direction: src v (cols) -> dst u (rows); softmax over cols -
    # score[i,j] = <v[j], att_u_s[i]> + <b[i,j], att_u_e[i]>
    score_b = jax.lax.dot_general(att_u_s.astype(bf16), v_bf,
                                  (((1,), (1,)), ((), ())),
                                  preferred_element_type=f32)           # (Nu, Nv)
    score_b = score_b + jnp.sum(b3 * att_u_e[:, None, :], axis=-1)
    ex_b = jnp.exp(score_b - jnp.max(score_b, axis=1, keepdims=True))
    sfm_b = ex_b / jnp.sum(ex_b, axis=1, keepdims=True)
    agg_u_s = jax.lax.dot_general(sfm_b.astype(bf16), v_bf,
                                  (((1,), (0,)), ((), ())),
                                  preferred_element_type=f32)           # (Nu, v_in)
    agg_u_e = jnp.sum(b3 * sfm_b[:, :, None], axis=1)                   # (Nu, e_in)

    # ---- node updates (W_u / W_v pre-split: no aggregation concat needed) ----
    h_nu = relu(jnp.dot(agg_u_s.astype(bf16), wwu_s_ref[...],
                        preferred_element_type=f32)
                + jnp.dot(agg_u_e.astype(bf16), wwu_e_ref[...],
                          preferred_element_type=f32)
                + bwu_ref[...].astype(f32))
    h_nv = relu(jax.lax.dot_general(agg_v_sT.astype(bf16), wwv_s_ref[...],
                                    (((0,), (0,)), ((), ())),
                                    preferred_element_type=f32)
                + jnp.dot(agg_v_e.astype(bf16), wwv_e_ref[...],
                          preferred_element_type=f32)
                + bwv_ref[...].astype(f32))

    # dropout(p=0.0) is the identity everywhere.
    if final:
        # Edge predictor fused in: out = [hf | Vu(u),h_nu | Vv(v),h_nv] @ Wp + bp,
        # decomposed per source so no (E, hidden) gather/concatenate is built.
        pe = jnp.dot(hf2.astype(bf16), wpe_ref[...], preferred_element_type=f32)
        pu = (jnp.dot(vu.astype(bf16), wpuv_ref[...], preferred_element_type=f32)
              + jnp.dot(h_nu.astype(bf16), wpun_ref[...], preferred_element_type=f32))
        pv = (jnp.dot(vv.astype(bf16), wpvv_ref[...], preferred_element_type=f32)
              + jnp.dot(h_nv.astype(bf16), wpvn_ref[...], preferred_element_type=f32)
              + bp_ref[...].astype(f32))
        out_dim = pe.shape[-1]
        out3 = pe.reshape(Nu, Nv, out_dim) + pu[:, None, :] + pv[None, :, :]
        out_ref[...] = out3.reshape(E, out_dim).astype(out_ref.dtype)
    else:
        # backward edge message is only needed when another layer follows
        hb2 = relu(jnp.dot(b2_bf, we, preferred_element_type=f32) + be + node_sum2)
        hf_ref[...] = hf2.astype(hf_ref.dtype)
        hb_ref[...] = hb2.astype(hb_ref.dtype)
        # lane-dense offset-0 stores: Vu/Vv and the aggregated halves go out as
        # separate outputs (wrapper concatenates) -> no masked mid-lane vst.
        huv_ref[...] = vu.astype(huv_ref.dtype)
        hun_ref[...] = h_nu.astype(hun_ref.dtype)
        hvv_ref[...] = vv.astype(hvv_ref.dtype)
        hvn_ref[...] = h_nv.astype(hvn_ref.dtype)


def gas_layer_pallas(lp, f2, b2, u, v, *, act, final, pp=None):
    Nu = u.shape[0]
    Nv = v.shape[0]
    E, e_in = f2.shape
    u_in = u.shape[-1]
    v_in = v.shape[-1]
    eo = lp["we"].shape[-1]
    nu = lp["wwu_e"].shape[-1]
    nv = lp["wwv_e"].shape[-1]
    vu_w = lp["wu"].shape[-1] - eo - (v_in + e_in)
    vv_w = lp["wv"].shape[-1] - eo - (u_in + e_in)

    args = [f2, b2, u, v,
            lp["wu"], lp["bu"], lp["wv"], lp["bv"], lp["we"], lp["be"],
            lp["wwu_s"], lp["wwu_e"], lp["bwu"],
            lp["wwv_s"], lp["wwv_e"], lp["bwv"]]

    flops = (2 * Nu * u_in * lp["wu"].shape[-1]
             + 2 * Nv * v_in * lp["wv"].shape[-1]
             + 2 * E * e_in * eo * (1 if final else 2)
             + 4 * E * (u_in + e_in) + 4 * E * (v_in + e_in)
             + 2 * Nu * (v_in + e_in) * nu + 2 * Nv * (u_in + e_in) * nv)
    transcendentals = 2 * E

    if final:
        out_dim = pp["bp"].shape[-1]
        args += [pp["wp_e"], pp["wp_uv"], pp["wp_un"],
                 pp["wp_vv"], pp["wp_vn"], pp["bp"]]
        flops += (2 * E * eo * out_dim + 2 * Nu * (vu_w + nu) * out_dim
                  + 2 * Nv * (vv_w + nv) * out_dim)
        out_shape = jax.ShapeDtypeStruct((E, out_dim), jnp.float32)
        out_specs = _full_spec(out_shape.shape)
        out_list = [out_shape]
    else:
        out_shape = (jax.ShapeDtypeStruct((E, eo), jnp.bfloat16),
                     jax.ShapeDtypeStruct((E, eo), jnp.bfloat16),
                     jax.ShapeDtypeStruct((Nu, vu_w), jnp.bfloat16),
                     jax.ShapeDtypeStruct((Nu, nu), jnp.bfloat16),
                     jax.ShapeDtypeStruct((Nv, vv_w), jnp.bfloat16),
                     jax.ShapeDtypeStruct((Nv, nv), jnp.bfloat16))
        out_specs = tuple(_full_spec(s.shape) for s in out_shape)
        out_list = list(out_shape)

    kernel = functools.partial(_gas_layer_kernel, act=act, final=final)
    return pl.pallas_call(
        kernel,
        out_shape=out_shape,
        grid=(1,),
        in_specs=[_full_spec(a.shape) for a in args],
        out_specs=out_specs,
        compiler_params=_COMPILER_PARAMS,
        cost_estimate=_cost_estimate(args, out_list, flops, transcendentals),
    )(*args)


# ----------------------------------------------------------------------------
# One-time parameter packing: transpose to (in, out), fuse linears that share
# an input, pre-split W_u / W_v / predictor weights, cast everything to bf16.
# ----------------------------------------------------------------------------
def prepare_gas_params(params, dtype=jnp.bfloat16):
    def t(p):
        return (jnp.asarray(p["w"], jnp.float32).T.astype(dtype),
                jnp.asarray(p["b"], jnp.float32).reshape(1, -1).astype(dtype))

    prepared = {"layers": []}
    for lp in params["layers"]:
        wu_e, bu_e = t(lp["u_linear"])
        wu_a, bu_a = t(lp["W_ATTN_u"])
        wu_v, bu_v = t(lp["Vu"])
        wv_e, bv_e = t(lp["v_linear"])
        wv_a, bv_a = t(lp["W_ATTN_v"])
        wv_v, bv_v = t(lp["Vv"])
        we, be = t(lp["e_linear"])
        wwu, bwu = t(lp["W_u"])            # ((v_in + e_in), nu)
        wwv, bwv = t(lp["W_v"])            # ((u_in + e_in), nv)
        u_in = wu_e.shape[0]
        v_in = wv_e.shape[0]
        prepared["layers"].append(dict(
            wu=jnp.concatenate([wu_e, wu_a, wu_v], axis=1),
            bu=jnp.concatenate([bu_e, bu_a, bu_v], axis=1),
            wv=jnp.concatenate([wv_e, wv_a, wv_v], axis=1),
            bv=jnp.concatenate([bv_e, bv_a, bv_v], axis=1),
            we=we, be=be,
            wwu_s=wwu[:v_in], wwu_e=wwu[v_in:], bwu=bwu,
            wwv_s=wwv[:u_in], wwv_e=wwv[u_in:], bwv=bwv,
        ))

    last = params["layers"][-1]
    e_hid = last["e_linear"]["w"].shape[0]
    vu_w = last["Vu"]["w"].shape[0]
    nu = last["W_u"]["w"].shape[0]
    vv_w = last["Vv"]["w"].shape[0]
    nv = last["W_v"]["w"].shape[0]
    wp, bp = t(params["predictor"])        # input order: [h_e | h_u | h_v]
    o = 0
    wp_e = wp[o:o + e_hid]; o += e_hid
    wp_uv = wp[o:o + vu_w]; o += vu_w      # pairs with Vu(u) half of h_u
    wp_un = wp[o:o + nu]; o += nu          # pairs with W_u(agg_u) half of h_u
    wp_vv = wp[o:o + vv_w]; o += vv_w
    wp_vn = wp[o:o + nv]
    prepared["predictor"] = dict(wp_e=wp_e, wp_uv=wp_uv, wp_un=wp_un,
                                 wp_vv=wp_vv, wp_vn=wp_vn, bp=bp)
    return prepared


# ----------------------------------------------------------------------------
# GAS forward: one fused pallas_call per layer, predictor fused into the last.
# ----------------------------------------------------------------------------
@functools.partial(jax.jit, static_argnames=("act",))
def gas_forward_pallas(prepared, f_feat, b_feat, u_feat, v_feat, act=True):
    f2 = f_feat.astype(jnp.bfloat16)
    b2 = b_feat.astype(jnp.bfloat16)
    u = u_feat.astype(jnp.bfloat16)
    v = v_feat.astype(jnp.bfloat16)
    layers = prepared["layers"]
    n = len(layers)
    out = None
    for li, lp in enumerate(layers):
        if li == n - 1:
            out = gas_layer_pallas(lp, f2, b2, u, v, act=act, final=True,
                                   pp=prepared["predictor"])
        else:
            f2, b2, huv, hun, hvv, hvn = gas_layer_pallas(
                lp, f2, b2, u, v, act=act, final=False)
            u = jnp.concatenate([huv, hun], axis=-1)
            v = jnp.concatenate([hvv, hvn], axis=-1)
    return out


# ----------------------------------------------------------------------------
# Pure-JAX reference (edge-list / segment-op formulation of the DGL semantics)
# ----------------------------------------------------------------------------
def _ref_linear(x, p):
    return x @ p["w"].T + p["b"]


def _ref_edge_softmax(scores, dst, num_dst):
    m = jax.ops.segment_max(scores, dst, num_segments=num_dst)
    ex = jnp.exp(scores - m[dst])
    s = jax.ops.segment_sum(ex, dst, num_segments=num_dst)
    return ex / s[dst]


def _ref_gasconv(p, f_feat, b_feat, u, v, fs, fd, bs, bd, Nu, Nv, act):
    relu = (lambda x: jnp.maximum(x, 0.0)) if act else (lambda x: x)
    he_u = _ref_linear(u, p["u_linear"])
    he_v = _ref_linear(v, p["v_linear"])
    hf = relu(_ref_linear(f_feat, p["e_linear"]) + he_u[fs] + he_v[fd])
    hb = relu(_ref_linear(b_feat, p["e_linear"]) + he_u[bd] + he_v[bs])
    h_ue = jnp.concatenate([u[fs], f_feat], -1)
    h_ve = jnp.concatenate([v[bs], b_feat], -1)
    h_att_u = _ref_linear(u, p["W_ATTN_u"])
    h_att_v = _ref_linear(v, p["W_ATTN_v"])
    sfm_f = _ref_edge_softmax(jnp.sum(h_ue * h_att_v[fd], -1), fd, Nv)
    sfm_b = _ref_edge_softmax(jnp.sum(h_ve * h_att_u[bd], -1), bd, Nu)
    agg_v = jax.ops.segment_sum(h_ue * sfm_f[:, None], fd, num_segments=Nv)
    agg_u = jax.ops.segment_sum(h_ve * sfm_b[:, None], bd, num_segments=Nu)
    h_nu = relu(_ref_linear(agg_u, p["W_u"]))
    h_nv = relu(_ref_linear(agg_v, p["W_v"]))
    hu = jnp.concatenate([_ref_linear(u, p["Vu"]), h_nu], -1)
    hv = jnp.concatenate([_ref_linear(v, p["Vv"]), h_nv], -1)
    return hf, hb, hu, hv


def gas_forward_ref(params, f_feat, b_feat, u_feat, v_feat, Nu, Nv, act=True):
    fs = jnp.repeat(jnp.arange(Nu), Nv)   # forward src u
    fd = jnp.tile(jnp.arange(Nv), Nu)     # forward dst v
    bs, bd = fd, fs                       # backward src v, dst u
    for lp in params["layers"]:
        f_feat, b_feat, u_feat, v_feat = _ref_gasconv(
            lp, f_feat, b_feat, u_feat, v_feat, fs, fd, bs, bd, Nu, Nv, act)
    x = jnp.concatenate([f_feat, u_feat[fs], v_feat[fd]], axis=-1)
    return _ref_linear(x, params["predictor"])


# ----------------------------------------------------------------------------
# Deterministic parameter init (mirrors the nn.Linear shapes in __init__)
# ----------------------------------------------------------------------------
def init_gas_params(key, e_in, u_in, v_in, e_hid, u_hid, v_hid, out_dim, num_layers=2):
    keys = list(jax.random.split(key, 128))
    it = iter(keys)

    def lin(i, o):
        kw, kb = jax.random.split(next(it))
        return {"w": (jax.random.normal(kw, (o, i), jnp.float32) * 0.1),
                "b": (jax.random.normal(kb, (o,), jnp.float32) * 0.01)}

    def conv(ei, ui, vi, eo, uo, vo):
        nu, nv = uo // 2, vo // 2
        return {"e_linear": lin(ei, eo), "u_linear": lin(ui, eo), "v_linear": lin(vi, eo),
                "W_ATTN_u": lin(ui, vi + ei), "W_ATTN_v": lin(vi, ui + ei),
                "W_u": lin(vi + ei, nu), "W_v": lin(ui + ei, nv),
                "Vu": lin(ui, uo - nu), "Vv": lin(vi, vo - nv)}

    layers = [conv(e_in, u_in, v_in, e_hid, u_hid, v_hid)]
    for _ in range(num_layers - 1):
        layers.append(conv(e_hid, u_hid, v_hid, e_hid, u_hid, v_hid))
    return {"layers": layers, "predictor": lin(e_hid + u_hid + v_hid, out_dim)}


# ----------------------------------------------------------------------------
if __name__ == "__main__":
    # Small, module-consistent shapes (Nv kept a multiple of 8 so the in-kernel
    # (E, F) <-> (Nu, Nv, F) f32 reshapes are pure relabels).
    Nu, Nv = 8, 8
    E = Nu * Nv
    e_in, u_in, v_in = 8, 12, 10
    e_hid = u_hid = v_hid = 16
    out_dim = 2
    num_layers = 2

    key = jax.random.PRNGKey(0)
    kp, kf, kb, ku, kv = jax.random.split(key, 5)
    params = init_gas_params(kp, e_in, u_in, v_in, e_hid, u_hid, v_hid,
                             out_dim, num_layers=num_layers)
    prepared = prepare_gas_params(params)   # one-time weight packing (bf16)

    f_feat = jax.random.normal(kf, (E, e_in), jnp.float32)
    b_feat = jax.random.normal(kb, (E, e_in), jnp.float32)
    u_feat = jax.random.normal(ku, (Nu, u_in), jnp.float32)
    v_feat = jax.random.normal(kv, (Nv, v_in), jnp.float32)

    # activation = ReLU (constructor arg of GAS); dropout = 0.0 -> identity.
    out = gas_forward_pallas(prepared, f_feat, b_feat, u_feat, v_feat, act=True)
    out = jax.block_until_ready(out)

    ref = gas_forward_ref(params, f_feat, b_feat, u_feat, v_feat, Nu, Nv, act=True)
    ref = jax.block_until_ready(ref)

    assert out.shape == (E, out_dim), out.shape
    # Tolerance accounts for bf16 storage of weights/activations at kernel
    # boundaries (MXU runs bf16 with f32 accumulation either way).  The softmax
    # normalizer is an exact divide, per the review's correctness note.
    if not np.allclose(np.asarray(out), np.asarray(ref), rtol=3e-2, atol=3e-2):
        raise AssertionError("Pallas GAS forward does not match reference")

    print("KERNEL_OK")
</pallas_src>

<mosaic_0001>
module attributes {stable_mosaic.version = 11 : i64} {
  func.func @_gas_layer_kernel(%arg0: i32, %arg1: memref<64x16xbf16, #tpu.memory_space<vmem>>, %arg2: memref<64x16xbf16, #tpu.memory_space<vmem>>, %arg3: memref<8x16xbf16, #tpu.memory_space<vmem>>, %arg4: memref<8x16xbf16, #tpu.memory_space<vmem>>, %arg5: memref<16x56xbf16, #tpu.memory_space<vmem>>, %arg6: memref<1x56xbf16, #tpu.memory_space<vmem>>, %arg7: memref<16x56xbf16, #tpu.memory_space<vmem>>, %arg8: memref<1x56xbf16, #tpu.memory_space<vmem>>, %arg9: memref<16x16xbf16, #tpu.memory_space<vmem>>, %arg10: memref<1x16xbf16, #tpu.memory_space<vmem>>, %arg11: memref<16x8xbf16, #tpu.memory_space<vmem>>, %arg12: memref<16x8xbf16, #tpu.memory_space<vmem>>, %arg13: memref<1x8xbf16, #tpu.memory_space<vmem>>, %arg14: memref<16x8xbf16, #tpu.memory_space<vmem>>, %arg15: memref<16x8xbf16, #tpu.memory_space<vmem>>, %arg16: memref<1x8xbf16, #tpu.memory_space<vmem>>, %arg17: memref<16x2xbf16, #tpu.memory_space<vmem>>, %arg18: memref<8x2xbf16, #tpu.memory_space<vmem>>, %arg19: memref<8x2xbf16, #tpu.memory_space<vmem>>, %arg20: memref<8x2xbf16, #tpu.memory_space<vmem>>, %arg21: memref<8x2xbf16, #tpu.memory_space<vmem>>, %arg22: memref<1x2xbf16, #tpu.memory_space<vmem>>, %arg23: memref<64x2xf32, #tpu.memory_space<vmem>>) attributes {dimension_semantics = [#tpu.dimension_semantics<arbitrary>], iteration_bounds = array<i64: 1>, scalar_prefetch = 0 : i64, scratch_operands = 0 : i64, tpu.core_type = #tpu.core_type<tc>, window_params = [{pipeline_mode = #tpu.pipeline_mode<synchronous>, transform_indices = @transform_0, window_bounds = array<i64: 64, 16>}, {pipeline_mode = #tpu.pipeline_mode<synchronous>, transform_indices = @transform_1, window_bounds = array<i64: 64, 16>}, {pipeline_mode = #tpu.pipeline_mode<synchronous>, transform_indices = @transform_2, window_bounds = array<i64: 8, 16>}, {pipeline_mode = #tpu.pipeline_mode<synchronous>, transform_indices = @transform_3, window_bounds = array<i64: 8, 16>}, {pipeline_mode = #tpu.pipeline_mode<synchronous>, transform_indices = @transform_4, window_bounds = array<i64: 16, 56>}, {pipeline_mode = #tpu.pipeline_mode<synchronous>, transform_indices = @transform_5, window_bounds = array<i64: 1, 56>}, {pipeline_mode = #tpu.pipeline_mode<synchronous>, transform_indices = @transform_6, window_bounds = array<i64: 16, 56>}, {pipeline_mode = #tpu.pipeline_mode<synchronous>, transform_indices = @transform_7, window_bounds = array<i64: 1, 56>}, {pipeline_mode = #tpu.pipeline_mode<synchronous>, transform_indices = @transform_8, window_bounds = array<i64: 16, 16>}, {pipeline_mode = #tpu.pipeline_mode<synchronous>, transform_indices = @transform_9, window_bounds = array<i64: 1, 16>}, {pipeline_mode = #tpu.pipeline_mode<synchronous>, transform_indices = @transform_10, window_bounds = array<i64: 16, 8>}, {pipeline_mode = #tpu.pipeline_mode<synchronous>, transform_indices = @transform_11, window_bounds = array<i64: 16, 8>}, {pipeline_mode = #tpu.pipeline_mode<synchronous>, transform_indices = @transform_12, window_bounds = array<i64: 1, 8>}, {pipeline_mode = #tpu.pipeline_mode<synchronous>, transform_indices = @transform_13, window_bounds = array<i64: 16, 8>}, {pipeline_mode = #tpu.pipeline_mode<synchronous>, transform_indices = @transform_14, window_bounds = array<i64: 16, 8>}, {pipeline_mode = #tpu.pipeline_mode<synchronous>, transform_indices = @transform_15, window_bounds = array<i64: 1, 8>}, {pipeline_mode = #tpu.pipeline_mode<synchronous>, transform_indices = @transform_16, window_bounds = array<i64: 16, 2>}, {pipeline_mode = #tpu.pipeline_mode<synchronous>, transform_indices = @transform_17, window_bounds = array<i64: 8, 2>}, {pipeline_mode = #tpu.pipeline_mode<synchronous>, transform_indices = @transform_18, window_bounds = array<i64: 8, 2>}, {pipeline_mode = #tpu.pipeline_mode<synchronous>, transform_indices = @transform_19, window_bounds = array<i64: 8, 2>}, {pipeline_mode = #tpu.pipeline_mode<synchronous>, transform_indices = @transform_20, window_bounds = array<i64: 8, 2>}, {pipeline_mode = #tpu.pipeline_mode<synchronous>, transform_indices = @transform_21, window_bounds = array<i64: 1, 2>}, {pipeline_mode = #tpu.pipeline_mode<synchronous>, transform_indices = @transform_22, window_bounds = array<i64: 64, 2>}]} {
    %c0 = arith.constant 0 : index
    %c0_0 = arith.constant 0 : index
    %0 = vector.load %arg3[%c0, %c0_0] : memref<8x16xbf16, #tpu.memory_space<vmem>>, vector<8x16xbf16>
    %c0_1 = arith.constant 0 : index
    %c0_2 = arith.constant 0 : index
    %1 = vector.load %arg4[%c0_1, %c0_2] : memref<8x16xbf16, #tpu.memory_space<vmem>>, vector<8x16xbf16>
    %c0_3 = arith.constant 0 : index
    %c0_4 = arith.constant 0 : index
    %2 = vector.load %arg1[%c0_3, %c0_4] : memref<64x16xbf16, #tpu.memory_space<vmem>>, vector<64x16xbf16>
    %c0_5 = arith.constant 0 : index
    %c0_6 = arith.constant 0 : index
    %3 = vector.load %arg2[%c0_5, %c0_6] : memref<64x16xbf16, #tpu.memory_space<vmem>>, vector<64x16xbf16>
    %4 = arith.extf %2 : vector<64x16xbf16> to vector<64x16xf32>
    %5 = vector.shape_cast %4 : vector<64x16xf32> to vector<8x8x16xf32>
    %6 = arith.extf %3 : vector<64x16xbf16> to vector<64x16xf32>
    %7 = vector.shape_cast %6 : vector<64x16xf32> to vector<8x8x16xf32>
    %c0_7 = arith.constant 0 : index
    %c0_8 = arith.constant 0 : index
    %8 = vector.load %arg5[%c0_7, %c0_8] : memref<16x56xbf16, #tpu.memory_space<vmem>>, vector<16x56xbf16>
    %cst = arith.constant dense<0.000000e+00> : vector<8x56xf32>
    %9 = tpu.matmul %0, %8, %cst {dimension_numbers = #tpu.dot_dimension_numbers<[1], [0], [0], [1], [0, 0, 1, 1], [], []>} : vector<8x16xbf16>, vector<16x56xbf16>, vector<8x56xf32> -> vector<8x56xf32>
    %c0_9 = arith.constant 0 : index
    %c0_10 = arith.constant 0 : index
    %10 = vector.load %arg6[%c0_9, %c0_10] : memref<1x56xbf16, #tpu.memory_space<vmem>>, vector<1x56xbf16>
    %11 = arith.extf %10 : vector<1x56xbf16> to vector<1x56xf32>
    %12 = vector.broadcast %11 : vector<1x56xf32> to vector<8x56xf32>
    %13 = arith.addf %9, %12 : vector<8x56xf32>
    %c0_11 = arith.constant 0 : index
    %c0_12 = arith.constant 0 : index
    %14 = vector.load %arg7[%c0_11, %c0_12] : memref<16x56xbf16, #tpu.memory_space<vmem>>, vector<16x56xbf16>
    %cst_13 = arith.constant dense<0.000000e+00> : vector<8x56xf32>
    %15 = tpu.matmul %1, %14, %cst_13 {dimension_numbers = #tpu.dot_dimension_numbers<[1], [0], [0], [1], [0, 0, 1, 1], [], []>} : vector<8x16xbf16>, vector<16x56xbf16>, vector<8x56xf32> -> vector<8x56xf32>
    %c0_14 = arith.constant 0 : index
    %c0_15 = arith.constant 0 : index
    %16 = vector.load %arg8[%c0_14, %c0_15] : memref<1x56xbf16, #tpu.memory_space<vmem>>, vector<1x56xbf16>
    %17 = arith.extf %16 : vector<1x56xbf16> to vector<1x56xf32>
    %18 = vector.broadcast %17 : vector<1x56xf32> to vector<8x56xf32>
    %19 = arith.addf %15, %18 : vector<8x56xf32>
    %20 = vector.extract_strided_slice %13 {offsets = [0, 0], sizes = [8, 16], strides = [1, 1]} : vector<8x56xf32> to vector<8x16xf32>
    %21 = vector.extract_strided_slice %13 {offsets = [0, 16], sizes = [8, 16], strides = [1, 1]} : vector<8x56xf32> to vector<8x16xf32>
    %22 = vector.extract_strided_slice %13 {offsets = [0, 32], sizes = [8, 16], strides = [1, 1]} : vector<8x56xf32> to vector<8x16xf32>
    %23 = vector.extract_strided_slice %13 {offsets = [0, 48], sizes = [8, 8], strides = [1, 1]} : vector<8x56xf32> to vector<8x8xf32>
    %24 = vector.extract_strided_slice %19 {offsets = [0, 0], sizes = [8, 16], strides = [1, 1]} : vector<8x56xf32> to vector<8x16xf32>
    %25 = vector.extract_strided_slice %19 {offsets = [0, 16], sizes = [8, 16], strides = [1, 1]} : vector<8x56xf32> to vector<8x16xf32>
    %26 = vector.extract_strided_slice %19 {offsets = [0, 32], sizes = [8, 16], strides = [1, 1]} : vector<8x56xf32> to vector<8x16xf32>
    %27 = vector.extract_strided_slice %19 {offsets = [0, 48], sizes = [8, 8], strides = [1, 1]} : vector<8x56xf32> to vector<8x8xf32>
    %28 = vector.shape_cast %20 : vector<8x16xf32> to vector<8x1x16xf32>
    %29 = vector.shape_cast %24 : vector<8x16xf32> to vector<1x8x16xf32>
    %30 = vector.broadcast %28 : vector<8x1x16xf32> to vector<8x8x16xf32>
    %31 = vector.broadcast %29 : vector<1x8x16xf32> to vector<8x8x16xf32>
    %32 = arith.addf %30, %31 : vector<8x8x16xf32>
    %33 = vector.shape_cast %32 : vector<8x8x16xf32> to vector<64x16xf32>
    %c0_16 = arith.constant 0 : index
    %c0_17 = arith.constant 0 : index
    %34 = vector.load %arg9[%c0_16, %c0_17] : memref<16x16xbf16, #tpu.memory_space<vmem>>, vector<16x16xbf16>
    %c0_18 = arith.constant 0 : index
    %c0_19 = arith.constant 0 : index
    %35 = vector.load %arg10[%c0_18, %c0_19] : memref<1x16xbf16, #tpu.memory_space<vmem>>, vector<1x16xbf16>
    %36 = arith.extf %35 : vector<1x16xbf16> to vector<1x16xf32>
    %cst_20 = arith.constant dense<0.000000e+00> : vector<64x16xf32>
    %37 = tpu.matmul %2, %34, %cst_20 {dimension_numbers = #tpu.dot_dimension_numbers<[1], [0], [0], [1], [0, 0, 1, 1], [], []>} : vector<64x16xbf16>, vector<16x16xbf16>, vector<64x16xf32> -> vector<64x16xf32>
    %38 = vector.broadcast %36 : vector<1x16xf32> to vector<64x16xf32>
    %39 = arith.addf %37, %38 : vector<64x16xf32>
    %40 = arith.addf %39, %33 : vector<64x16xf32>
    %cst_21 = arith.constant 0.000000e+00 : f32
    %41 = vector.broadcast %cst_21 : f32 to vector<64x16xf32>
    %42 = arith.maximumf %40, %41 : vector<64x16xf32>
    %43 = arith.truncf %25 : vector<8x16xf32> to vector<8x16xbf16>
    %cst_22 = arith.constant dense<0.000000e+00> : vector<8x8xf32>
    %44 = tpu.matmul %0, %43, %cst_22 {dimension_numbers = #tpu.dot_dimension_numbers<[1], [1], [0], [0], [0, 0, 1, 0], [], []>} : vector<8x16xbf16>, vector<8x16xbf16>, vector<8x8xf32> -> vector<8x8xf32>
    %45 = vector.shape_cast %26 : vector<8x16xf32> to vector<1x8x16xf32>
    %46 = vector.broadcast %45 : vector<1x8x16xf32> to vector<8x8x16xf32>
    %47 = arith.mulf %5, %46 : vector<8x8x16xf32>
    %cst_23 = arith.constant dense<0.000000e+00> : vector<8x8xf32>
    %48 = vector.multi_reduction <add>, %47, %cst_23 [2] : vector<8x8x16xf32> to vector<8x8xf32>
    %49 = arith.addf %44, %48 : vector<8x8xf32>
    %cst_24 = arith.constant dense<0xFF800000> : vector<8xf32>
    %50 = vector.multi_reduction <maximumf>, %49, %cst_24 [0] : vector<8x8xf32> to vector<8xf32>
    %51 = vector.shape_cast %50 : vector<8xf32> to vector<1x8xf32>
    %52 = vector.broadcast %51 : vector<1x8xf32> to vector<8x8xf32>
    %53 = arith.subf %49, %52 : vector<8x8xf32>
    %54 = math.exp %53 : vector<8x8xf32>
    %cst_25 = arith.constant dense<0.000000e+00> : vector<8xf32>
    %55 = vector.multi_reduction <add>, %54, %cst_25 [0] : vector<8x8xf32> to vector<8xf32>
    %56 = vector.shape_cast %55 : vector<8xf32> to vector<1x8xf32>
    %57 = vector.broadcast %56 : vector<1x8xf32> to vector<8x8xf32>
    %58 = arith.divf %54, %57 : vector<8x8xf32>
    %59 = arith.truncf %58 : vector<8x8xf32> to vector<8x8xbf16>
    %cst_26 = arith.constant dense<0.000000e+00> : vector<16x8xf32>
    %60 = tpu.matmul %0, %59, %cst_26 {dimension_numbers = #tpu.dot_dimension_numbers<[0], [0], [1], [1], [0, 1, 1, 1], [], []>} : vector<8x16xbf16>, vector<8x8xbf16>, vector<16x8xf32> -> vector<16x8xf32>
    %61 = vector.shape_cast %58 : vector<8x8xf32> to vector<8x8x1xf32>
    %62 = vector.broadcast %61 : vector<8x8x1xf32> to vector<8x8x16xf32>
    %63 = arith.mulf %5, %62 : vector<8x8x16xf32>
    %cst_27 = arith.constant dense<0.000000e+00> : vector<8x16xf32>
    %64 = vector.multi_reduction <add>, %63, %cst_27 [0] : vector<8x8x16xf32> to vector<8x16xf32>
    %65 = arith.truncf %21 : vector<8x16xf32> to vector<8x16xbf16>
    %cst_28 = arith.constant dense<0.000000e+00> : vector<8x8xf32>
    %66 = tpu.matmul %65, %1, %cst_28 {dimension_numbers = #tpu.dot_dimension_numbers<[1], [1], [0], [0], [0, 0, 1, 0], [], []>} : vector<8x16xbf16>, vector<8x16xbf16>, vector<8x8xf32> -> vector<8x8xf32>
    %67 = vector.shape_cast %22 : vector<8x16xf32> to vector<8x1x16xf32>
    %68 = vector.broadcast %67 : vector<8x1x16xf32> to vector<8x8x16xf32>
    %69 = arith.mulf %7, %68 : vector<8x8x16xf32>
    %cst_29 = arith.constant dense<0.000000e+00> : vector<8x8xf32>
    %70 = vector.multi_reduction <add>, %69, %cst_29 [2] : vector<8x8x16xf32> to vector<8x8xf32>
    %71 = arith.addf %66, %70 : vector<8x8xf32>
    %cst_30 = arith.constant dense<0xFF800000> : vector<8xf32>
    %72 = vector.multi_reduction <maximumf>, %71, %cst_30 [1] : vector<8x8xf32> to vector<8xf32>
    %73 = vector.shape_cast %72 : vector<8xf32> to vector<8x1xf32>
    %74 = vector.broadcast %73 : vector<8x1xf32> to vector<8x8xf32>
    %75 = arith.subf %71, %74 : vector<8x8xf32>
    %76 = math.exp %75 : vector<8x8xf32>
    %cst_31 = arith.constant dense<0.000000e+00> : vector<8xf32>
    %77 = vector.multi_reduction <add>, %76, %cst_31 [1] : vector<8x8xf32> to vector<8xf32>
    %78 = vector.shape_cast %77 : vector<8xf32> to vector<8x1xf32>
    %79 = vector.broadcast %78 : vector<8x1xf32> to vector<8x8xf32>
    %80 = arith.divf %76, %79 : vector<8x8xf32>
    %81 = arith.truncf %80 : vector<8x8xf32> to vector<8x8xbf16>
    %cst_32 = arith.constant dense<0.000000e+00> : vector<8x16xf32>
    %82 = tpu.matmul %81, %1, %cst_32 {dimension_numbers = #tpu.dot_dimension_numbers<[1], [0], [0], [1], [0, 0, 1, 1], [], []>} : vector<8x8xbf16>, vector<8x16xbf16>, vector<8x16xf32> -> vector<8x16xf32>
    %83 = vector.shape_cast %80 : vector<8x8xf32> to vector<8x8x1xf32>
    %84 = vector.broadcast %83 : vector<8x8x1xf32> to vector<8x8x16xf32>
    %85 = arith.mulf %7, %84 : vector<8x8x16xf32>
    %cst_33 = arith.constant dense<0.000000e+00> : vector<8x16xf32>
    %86 = vector.multi_reduction <add>, %85, %cst_33 [1] : vector<8x8x16xf32> to vector<8x16xf32>
    %87 = arith.truncf %82 : vector<8x16xf32> to vector<8x16xbf16>
    %c0_34 = arith.constant 0 : index
    %c0_35 = arith.constant 0 : index
    %88 = vector.load %arg11[%c0_34, %c0_35] : memref<16x8xbf16, #tpu.memory_space<vmem>>, vector<16x8xbf16>
    %cst_36 = arith.constant dense<0.000000e+00> : vector<8x8xf32>
    %89 = tpu.matmul %87, %88, %cst_36 {dimension_numbers = #tpu.dot_dimension_numbers<[1], [0], [0], [1], [0, 0, 1, 1], [], []>} : vector<8x16xbf16>, vector<16x8xbf16>, vector<8x8xf32> -> vector<8x8xf32>
    %90 = arith.truncf %86 : vector<8x16xf32> to vector<8x16xbf16>
    %c0_37 = arith.constant 0 : index
    %c0_38 = arith.constant 0 : index
    %91 = vector.load %arg12[%c0_37, %c0_38] : memref<16x8xbf16, #tpu.memory_space<vmem>>, vector<16x8xbf16>
    %cst_39 = arith.constant dense<0.000000e+00> : vector<8x8xf32>
    %92 = tpu.matmul %90, %91, %cst_39 {dimension_numbers = #tpu.dot_dimension_numbers<[1], [0], [0], [1], [0, 0, 1, 1], [], []>} : vector<8x16xbf16>, vector<16x8xbf16>, vector<8x8xf32> -> vector<8x8xf32>
    %93 = arith.addf %89, %92 : vector<8x8xf32>
    %c0_40 = arith.constant 0 : index
    %c0_41 = arith.constant 0 : index
    %94 = vector.load %arg13[%c0_40, %c0_41] : memref<1x8xbf16, #tpu.memory_space<vmem>>, vector<1x8xbf16>
    %95 = arith.extf %94 : vector<1x8xbf16> to vector<1x8xf32>
    %96 = vector.broadcast %95 : vector<1x8xf32> to vector<8x8xf32>
    %97 = arith.addf %93, %96 : vector<8x8xf32>
    %cst_42 = arith.constant 0.000000e+00 : f32
    %98 = vector.broadcast %cst_42 : f32 to vector<8x8xf32>
    %99 = arith.maximumf %97, %98 : vector<8x8xf32>
    %100 = arith.truncf %60 : vector<16x8xf32> to vector<16x8xbf16>
    %c0_43 = arith.constant 0 : index
    %c0_44 = arith.constant 0 : index
    %101 = vector.load %arg14[%c0_43, %c0_44] : memref<16x8xbf16, #tpu.memory_space<vmem>>, vector<16x8xbf16>
    %cst_45 = arith.constant dense<0.000000e+00> : vector<8x8xf32>
    %102 = tpu.matmul %100, %101, %cst_45 {dimension_numbers = #tpu.dot_dimension_numbers<[0], [0], [1], [1], [0, 1, 1, 1], [], []>} : vector<16x8xbf16>, vector<16x8xbf16>, vector<8x8xf32> -> vector<8x8xf32>
    %103 = arith.truncf %64 : vector<8x16xf32> to vector<8x16xbf16>
    %c0_46 = arith.constant 0 : index
    %c0_47 = arith.constant 0 : index
    %104 = vector.load %arg15[%c0_46, %c0_47] : memref<16x8xbf16, #tpu.memory_space<vmem>>, vector<16x8xbf16>
    %cst_48 = arith.constant dense<0.000000e+00> : vector<8x8xf32>
    %105 = tpu.matmul %103, %104, %cst_48 {dimension_numbers = #tpu.dot_dimension_numbers<[1], [0], [0], [1], [0, 0, 1, 1], [], []>} : vector<8x16xbf16>, vector<16x8xbf16>, vector<8x8xf32> -> vector<8x8xf32>
    %106 = arith.addf %102, %105 : vector<8x8xf32>
    %c0_49 = arith.constant 0 : index
    %c0_50 = arith.constant 0 : index
    %107 = vector.load %arg16[%c0_49, %c0_50] : memref<1x8xbf16, #tpu.memory_space<vmem>>, vector<1x8xbf16>
    %108 = arith.extf %107 : vector<1x8xbf16> to vector<1x8xf32>
    %109 = vector.broadcast %108 : vector<1x8xf32> to vector<8x8xf32>
    %110 = arith.addf %106, %109 : vector<8x8xf32>
    %cst_51 = arith.constant 0.000000e+00 : f32
    %111 = vector.broadcast %cst_51 : f32 to vector<8x8xf32>
    %112 = arith.maximumf %110, %111 : vector<8x8xf32>
    %113 = arith.truncf %42 : vector<64x16xf32> to vector<64x16xbf16>
    %c0_52 = arith.constant 0 : index
    %c0_53 = arith.constant 0 : index
    %114 = vector.load %arg17[%c0_52, %c0_53] : memref<16x2xbf16, #tpu.memory_space<vmem>>, vector<16x2xbf16>
    %cst_54 = arith.constant dense<0.000000e+00> : vector<64x2xf32>
    %115 = tpu.matmul %113, %114, %cst_54 {dimension_numbers = #tpu.dot_dimension_numbers<[1], [0], [0], [1], [0, 0, 1, 1], [], []>} : vector<64x16xbf16>, vector<16x2xbf16>, vector<64x2xf32> -> vector<64x2xf32>
    %116 = arith.truncf %23 : vector<8x8xf32> to vector<8x8xbf16>
    %c0_55 = arith.constant 0 : index
    %c0_56 = arith.constant 0 : index
    %117 = vector.load %arg18[%c0_55, %c0_56] : memref<8x2xbf16, #tpu.memory_space<vmem>>, vector<8x2xbf16>
    %cst_57 = arith.constant dense<0.000000e+00> : vector<8x2xf32>
    %118 = tpu.matmul %116, %117, %cst_57 {dimension_numbers = #tpu.dot_dimension_numbers<[1], [0], [0], [1], [0, 0, 1, 1], [], []>} : vector<8x8xbf16>, vector<8x2xbf16>, vector<8x2xf32> -> vector<8x2xf32>
    %119 = arith.truncf %99 : vector<8x8xf32> to vector<8x8xbf16>
    %c0_58 = arith.constant 0 : index
    %c0_59 = arith.constant 0 : index
    %120 = vector.load %arg19[%c0_58, %c0_59] : memref<8x2xbf16, #tpu.memory_space<vmem>>, vector<8x2xbf16>
    %cst_60 = arith.constant dense<0.000000e+00> : vector<8x2xf32>
    %121 = tpu.matmul %119, %120, %cst_60 {dimension_numbers = #tpu.dot_dimension_numbers<[1], [0], [0], [1], [0, 0, 1, 1], [], []>} : vector<8x8xbf16>, vector<8x2xbf16>, vector<8x2xf32> -> vector<8x2xf32>
    %122 = arith.addf %118, %121 : vector<8x2xf32>
    %123 = arith.truncf %27 : vector<8x8xf32> to vector<8x8xbf16>
    %c0_61 = arith.constant 0 : index
    %c0_62 = arith.constant 0 : index
    %124 = vector.load %arg20[%c0_61, %c0_62] : memref<8x2xbf16, #tpu.memory_space<vmem>>, vector<8x2xbf16>
    %cst_63 = arith.constant dense<0.000000e+00> : vector<8x2xf32>
    %125 = tpu.matmul %123, %124, %cst_63 {dimension_numbers = #tpu.dot_dimension_numbers<[1], [0], [0], [1], [0, 0, 1, 1], [], []>} : vector<8x8xbf16>, vector<8x2xbf16>, vector<8x2xf32> -> vector<8x2xf32>
    %126 = arith.truncf %112 : vector<8x8xf32> to vector<8x8xbf16>
    %c0_64 = arith.constant 0 : index
    %c0_65 = arith.constant 0 : index
    %127 = vector.load %arg21[%c0_64, %c0_65] : memref<8x2xbf16, #tpu.memory_space<vmem>>, vector<8x2xbf16>
    %cst_66 = arith.constant dense<0.000000e+00> : vector<8x2xf32>
    %128 = tpu.matmul %126, %127, %cst_66 {dimension_numbers = #tpu.dot_dimension_numbers<[1], [0], [0], [1], [0, 0, 1, 1], [], []>} : vector<8x8xbf16>, vector<8x2xbf16>, vector<8x2xf32> -> vector<8x2xf32>
    %129 = arith.addf %125, %128 : vector<8x2xf32>
    %c0_67 = arith.constant 0 : index
    %c0_68 = arith.constant 0 : index
    %130 = vector.load %arg22[%c0_67, %c0_68] : memref<1x2xbf16, #tpu.memory_space<vmem>>, vector<1x2xbf16>
    %131 = arith.extf %130 : vector<1x2xbf16> to vector<1x2xf32>
    %132 = vector.broadcast %131 : vector<1x2xf32> to vector<8x2xf32>
    %133 = arith.addf %129, %132 : vector<8x2xf32>
    %134 = vector.shape_cast %115 : vector<64x2xf32> to vector<8x8x2xf32>
    %135 = vector.shape_cast %122 : vector<8x2xf32> to vector<8x1x2xf32>
    %136 = vector.broadcast %135 : vector<8x1x2xf32> to vector<8x8x2xf32>
    %137 = arith.addf %134, %136 : vector<8x8x2xf32>
    %138 = vector.shape_cast %133 : vector<8x2xf32> to vector<1x8x2xf32>
    %139 = vector.broadcast %138 : vector<1x8x2xf32> to vector<8x8x2xf32>
    %140 = arith.addf %137, %139 : vector<8x8x2xf32>
    %141 = vector.shape_cast %140 : vector<8x8x2xf32> to vector<64x2xf32>
    %c0_69 = arith.constant 0 : index
    %c0_70 = arith.constant 0 : index
    %142 = vector.load %arg23[%c0_69, %c0_70] : memref<64x2xf32, #tpu.memory_space<vmem>>, vector<64x2xf32>
    tpu.vector_store %arg23[%c0_69, %c0_70], %141 {strides = array<i32>} : memref<64x2xf32, #tpu.memory_space<vmem>>, vector<64x2xf32>,
    return
  }
  func.func @transform_0(%arg0: i32) -> (i32, i32) {
    %c0_i32 = arith.constant 0 : i32
    %c0_i32_0 = arith.constant 0 : i32
    %c0_i32_1 = arith.constant 0 : i32
    return %c0_i32, %c0_i32_0 : i32, i32
  }
  func.func @transform_1(%arg0: i32) -> (i32, i32) {
    %c0_i32 = arith.constant 0 : i32
    %c0_i32_0 = arith.constant 0 : i32
    %c0_i32_1 = arith.constant 0 : i32
    return %c0_i32, %c0_i32_0 : i32, i32
  }
  func.func @transform_2(%arg0: i32) -> (i32, i32) {
    %c0_i32 = arith.constant 0 : i32
    %c0_i32_0 = arith.constant 0 : i32
    %c0_i32_1 = arith.constant 0 : i32
    return %c0_i32, %c0_i32_0 : i32, i32
  }
  func.func @transform_3(%arg0: i32) -> (i32, i32) {
    %c0_i32 = arith.constant 0 : i32
    %c0_i32_0 = arith.constant 0 : i32
    %c0_i32_1 = arith.constant 0 : i32
    return %c0_i32, %c0_i32_0 : i32, i32
  }
  func.func @transform_4(%arg0: i32) -> (i32, i32) {
    %c0_i32 = arith.constant 0 : i32
    %c0_i32_0 = arith.constant 0 : i32
    %c0_i32_1 = arith.constant 0 : i32
    return %c0_i32, %c0_i32_0 : i32, i32
  }
  func.func @transform_5(%arg0: i32) -> (i32, i32) {
    %c0_i32 = arith.constant 0 : i32
    %c0_i32_0 = arith.constant 0 : i32
    %c0_i32_1 = arith.constant 0 : i32
    return %c0_i32, %c0_i32_0 : i32, i32
  }
  func.func @transform_6(%arg0: i32) -> (i32, i32) {
    %c0_i32 = arith.constant 0 : i32
    %c0_i32_0 = arith.constant 0 : i32
    %c0_i32_1 = arith.constant 0 : i32
    return %c0_i32, %c0_i32_0 : i32, i32
  }
  func.func @transform_7(%arg0: i32) -> (i32, i32) {
    %c0_i32 = arith.constant 0 : i32
    %c0_i32_0 = arith.constant 0 : i32
    %c0_i32_1 = arith.constant 0 : i32
    return %c0_i32, %c0_i32_0 : i32, i32
  }
  func.func @transform_8(%arg0: i32) -> (i32, i32) {
    %c0_i32 = arith.constant 0 : i32
    %c0_i32_0 = arith.constant 0 : i32
    %c0_i32_1 = arith.constant 0 : i32
    return %c0_i32, %c0_i32_0 : i32, i32
  }
  func.func @transform_9(%arg0: i32) -> (i32, i32) {
    %c0_i32 = arith.constant 0 : i32
    %c0_i32_0 = arith.constant 0 : i32
    %c0_i32_1 = arith.constant 0 : i32
    return %c0_i32, %c0_i32_0 : i32, i32
  }
  func.func @transform_10(%arg0: i32) -> (i32, i32) {
    %c0_i32 = arith.constant 0 : i32
    %c0_i32_0 = arith.constant 0 : i32
    %c0_i32_1 = arith.constant 0 : i32
    return %c0_i32, %c0_i32_0 : i32, i32
  }
  func.func @transform_11(%arg0: i32) -> (i32, i32) {
    %c0_i32 = arith.constant 0 : i32
    %c0_i32_0 = arith.constant 0 : i32
    %c0_i32_1 = arith.constant 0 : i32
    return %c0_i32, %c0_i32_0 : i32, i32
  }
  func.func @transform_12(%arg0: i32) -> (i32, i32) {
    %c0_i32 = arith.constant 0 : i32
    %c0_i32_0 = arith.constant 0 : i32
    %c0_i32_1 = arith.constant 0 : i32
    return %c0_i32, %c0_i32_0 : i32, i32
  }
  func.func @transform_13(%arg0: i32) -> (i32, i32) {
    %c0_i32 = arith.constant 0 : i32
    %c0_i32_0 = arith.constant 0 : i32
    %c0_i32_1 = arith.constant 0 : i32
    return %c0_i32, %c0_i32_0 : i32, i32
  }
  func.func @transform_14(%arg0: i32) -> (i32, i32) {
    %c0_i32 = arith.constant 0 : i32
    %c0_i32_0 = arith.constant 0 : i32
    %c0_i32_1 = arith.constant 0 : i32
    return %c0_i32, %c0_i32_0 : i32, i32
  }
  func.func @transform_15(%arg0: i32) -> (i32, i32) {
    %c0_i32 = arith.constant 0 : i32
    %c0_i32_0 = arith.constant 0 : i32
    %c0_i32_1 = arith.constant 0 : i32
    return %c0_i32, %c0_i32_0 : i32, i32
  }
  func.func @transform_16(%arg0: i32) -> (i32, i32) {
    %c0_i32 = arith.constant 0 : i32
    %c0_i32_0 = arith.constant 0 : i32
    %c0_i32_1 = arith.constant 0 : i32
    return %c0_i32, %c0_i32_0 : i32, i32
  }
  func.func @transform_17(%arg0: i32) -> (i32, i32) {
    %c0_i32 = arith.constant 0 : i32
    %c0_i32_0 = arith.constant 0 : i32
    %c0_i32_1 = arith.constant 0 : i32
    return %c0_i32, %c0_i32_0 : i32, i32
  }
  func.func @transform_18(%arg0: i32) -> (i32, i32) {
    %c0_i32 = arith.constant 0 : i32
    %c0_i32_0 = arith.constant 0 : i32
    %c0_i32_1 = arith.constant 0 : i32
    return %c0_i32, %c0_i32_0 : i32, i32
  }
  func.func @transform_19(%arg0: i32) -> (i32, i32) {
    %c0_i32 = arith.constant 0 : i32
    %c0_i32_0 = arith.constant 0 : i32
    %c0_i32_1 = arith.constant 0 : i32
    return %c0_i32, %c0_i32_0 : i32, i32
  }
  func.func @transform_20(%arg0: i32) -> (i32, i32) {
    %c0_i32 = arith.constant 0 : i32
    %c0_i32_0 = arith.constant 0 : i32
    %c0_i32_1 = arith.constant 0 : i32
    return %c0_i32, %c0_i32_0 : i32, i32
  }
  func.func @transform_21(%arg0: i32) -> (i32, i32) {
    %c0_i32 = arith.constant 0 : i32
    %c0_i32_0 = arith.constant 0 : i32
    %c0_i32_1 = arith.constant 0 : i32
    return %c0_i32, %c0_i32_0 : i32, i32
  }
  func.func @transform_22(%arg0: i32) -> (i32, i32) {
    %c0_i32 = arith.constant 0 : i32
    %c0_i32_0 = arith.constant 0 : i32
    %c0_i32_1 = arith.constant 0 : i32
    return %c0_i32, %c0_i32_0 : i32, i32
  }
}

module attributes {stable_mosaic.version = 11 : i64} {
  func.func @_gas_layer_kernel(%arg0: i32, %arg1: memref<64x8xbf16, #tpu.memory_space<vmem>>, %arg2: memref<64x8xbf16, #tpu.memory_space<vmem>>, %arg3: memref<8x12xbf16, #tpu.memory_space<vmem>>, %arg4: memref<8x10xbf16, #tpu.memory_space<vmem>>, %arg5: memref<12x42xbf16, #tpu.memory_space<vmem>>, %arg6: memref<1x42xbf16, #tpu.memory_space<vmem>>, %arg7: memref<10x44xbf16, #tpu.memory_space<vmem>>, %arg8: memref<1x44xbf16, #tpu.memory_space<vmem>>, %arg9: memref<8x16xbf16, #tpu.memory_space<vmem>>, %arg10: memref<1x16xbf16, #tpu.memory_space<vmem>>, %arg11: memref<10x8xbf16, #tpu.memory_space<vmem>>, %arg12: memref<8x8xbf16, #tpu.memory_space<vmem>>, %arg13: memref<1x8xbf16, #tpu.memory_space<vmem>>, %arg14: memref<12x8xbf16, #tpu.memory_space<vmem>>, %arg15: memref<8x8xbf16, #tpu.memory_space<vmem>>, %arg16: memref<1x8xbf16, #tpu.memory_space<vmem>>, %arg17: memref<64x16xbf16, #tpu.memory_space<vmem>>, %arg18: memref<64x16xbf16, #tpu.memory_space<vmem>>, %arg19: memref<8x8xbf16, #tpu.memory_space<vmem>>, %arg20: memref<8x8xbf16, #tpu.memory_space<vmem>>, %arg21: memref<8x8xbf16, #tpu.memory_space<vmem>>, %arg22: memref<8x8xbf16, #tpu.memory_space<vmem>>) attributes {dimension_semantics = [#tpu.dimension_semantics<arbitrary>], iteration_bounds = array<i64: 1>, scalar_prefetch = 0 : i64, scratch_operands = 0 : i64, tpu.core_type = #tpu.core_type<tc>, window_params = [{pipeline_mode = #tpu.pipeline_mode<synchronous>, transform_indices = @transform_0, window_bounds = array<i64: 64, 8>}, {pipeline_mode = #tpu.pipeline_mode<synchronous>, transform_indices = @transform_1, window_bounds = array<i64: 64, 8>}, {pipeline_mode = #tpu.pipeline_mode<synchronous>, transform_indices = @transform_2, window_bounds = array<i64: 8, 12>}, {pipeline_mode = #tpu.pipeline_mode<synchronous>, transform_indices = @transform_3, window_bounds = array<i64: 8, 10>}, {pipeline_mode = #tpu.pipeline_mode<synchronous>, transform_indices = @transform_4, window_bounds = array<i64: 12, 42>}, {pipeline_mode = #tpu.pipeline_mode<synchronous>, transform_indices = @transform_5, window_bounds = array<i64: 1, 42>}, {pipeline_mode = #tpu.pipeline_mode<synchronous>, transform_indices = @transform_6, window_bounds = array<i64: 10, 44>}, {pipeline_mode = #tpu.pipeline_mode<synchronous>, transform_indices = @transform_7, window_bounds = array<i64: 1, 44>}, {pipeline_mode = #tpu.pipeline_mode<synchronous>, transform_indices = @transform_8, window_bounds = array<i64: 8, 16>}, {pipeline_mode = #tpu.pipeline_mode<synchronous>, transform_indices = @transform_9, window_bounds = array<i64: 1, 16>}, {pipeline_mode = #tpu.pipeline_mode<synchronous>, transform_indices = @transform_10, window_bounds = array<i64: 10, 8>}, {pipeline_mode = #tpu.pipeline_mode<synchronous>, transform_indices = @transform_11, window_bounds = array<i64: 8, 8>}, {pipeline_mode = #tpu.pipeline_mode<synchronous>, transform_indices = @transform_12, window_bounds = array<i64: 1, 8>}, {pipeline_mode = #tpu.pipeline_mode<synchronous>, transform_indices = @transform_13, window_bounds = array<i64: 12, 8>}, {pipeline_mode = #tpu.pipeline_mode<synchronous>, transform_indices = @transform_14, window_bounds = array<i64: 8, 8>}, {pipeline_mode = #tpu.pipeline_mode<synchronous>, transform_indices = @transform_15, window_bounds = array<i64: 1, 8>}, {pipeline_mode = #tpu.pipeline_mode<synchronous>, transform_indices = @transform_16, window_bounds = array<i64: 64, 16>}, {pipeline_mode = #tpu.pipeline_mode<synchronous>, transform_indices = @transform_17, window_bounds = array<i64: 64, 16>}, {pipeline_mode = #tpu.pipeline_mode<synchronous>, transform_indices = @transform_18, window_bounds = array<i64: 8, 8>}, {pipeline_mode = #tpu.pipeline_mode<synchronous>, transform_indices = @transform_19, window_bounds = array<i64: 8, 8>}, {pipeline_mode = #tpu.pipeline_mode<synchronous>, transform_indices = @transform_20, window_bounds = array<i64: 8, 8>}, {pipeline_mode = #tpu.pipeline_mode<synchronous>, transform_indices = @transform_21, window_bounds = array<i64: 8, 8>}]} {
    %c0 = arith.constant 0 : index
    %c0_0 = arith.constant 0 : index
    %0 = vector.load %arg3[%c0, %c0_0] : memref<8x12xbf16, #tpu.memory_space<vmem>>, vector<8x12xbf16>
    %c0_1 = arith.constant 0 : index
    %c0_2 = arith.constant 0 : index
    %1 = vector.load %arg4[%c0_1, %c0_2] : memref<8x10xbf16, #tpu.memory_space<vmem>>, vector<8x10xbf16>
    %c0_3 = arith.constant 0 : index
    %c0_4 = arith.constant 0 : index
    %2 = vector.load %arg1[%c0_3, %c0_4] : memref<64x8xbf16, #tpu.memory_space<vmem>>, vector<64x8xbf16>
    %c0_5 = arith.constant 0 : index
    %c0_6 = arith.constant 0 : index
    %3 = vector.load %arg2[%c0_5, %c0_6] : memref<64x8xbf16, #tpu.memory_space<vmem>>, vector<64x8xbf16>
    %4 = arith.extf %2 : vector<64x8xbf16> to vector<64x8xf32>
    %5 = vector.shape_cast %4 : vector<64x8xf32> to vector<8x8x8xf32>
    %6 = arith.extf %3 : vector<64x8xbf16> to vector<64x8xf32>
    %7 = vector.shape_cast %6 : vector<64x8xf32> to vector<8x8x8xf32>
    %c0_7 = arith.constant 0 : index
    %c0_8 = arith.constant 0 : index
    %8 = vector.load %arg5[%c0_7, %c0_8] : memref<12x42xbf16, #tpu.memory_space<vmem>>, vector<12x42xbf16>
    %cst = arith.constant dense<0.000000e+00> : vector<8x42xf32>
    %9 = tpu.matmul %0, %8, %cst {dimension_numbers = #tpu.dot_dimension_numbers<[1], [0], [0], [1], [0, 0, 1, 1], [], []>} : vector<8x12xbf16>, vector<12x42xbf16>, vector<8x42xf32> -> vector<8x42xf32>
    %c0_9 = arith.constant 0 : index
    %c0_10 = arith.constant 0 : index
    %10 = vector.load %arg6[%c0_9, %c0_10] : memref<1x42xbf16, #tpu.memory_space<vmem>>, vector<1x42xbf16>
    %11 = arith.extf %10 : vector<1x42xbf16> to vector<1x42xf32>
    %12 = vector.broadcast %11 : vector<1x42xf32> to vector<8x42xf32>
    %13 = arith.addf %9, %12 : vector<8x42xf32>
    %c0_11 = arith.constant 0 : index
    %c0_12 = arith.constant 0 : index
    %14 = vector.load %arg7[%c0_11, %c0_12] : memref<10x44xbf16, #tpu.memory_space<vmem>>, vector<10x44xbf16>
    %cst_13 = arith.constant dense<0.000000e+00> : vector<8x44xf32>
    %15 = tpu.matmul %1, %14, %cst_13 {dimension_numbers = #tpu.dot_dimension_numbers<[1], [0], [0], [1], [0, 0, 1, 1], [], []>} : vector<8x10xbf16>, vector<10x44xbf16>, vector<8x44xf32> -> vector<8x44xf32>
    %c0_14 = arith.constant 0 : index
    %c0_15 = arith.constant 0 : index
    %16 = vector.load %arg8[%c0_14, %c0_15] : memref<1x44xbf16, #tpu.memory_space<vmem>>, vector<1x44xbf16>
    %17 = arith.extf %16 : vector<1x44xbf16> to vector<1x44xf32>
    %18 = vector.broadcast %17 : vector<1x44xf32> to vector<8x44xf32>
    %19 = arith.addf %15, %18 : vector<8x44xf32>
    %20 = vector.extract_strided_slice %13 {offsets = [0, 0], sizes = [8, 16], strides = [1, 1]} : vector<8x42xf32> to vector<8x16xf32>
    %21 = vector.extract_strided_slice %13 {offsets = [0, 16], sizes = [8, 10], strides = [1, 1]} : vector<8x42xf32> to vector<8x10xf32>
    %22 = vector.extract_strided_slice %13 {offsets = [0, 26], sizes = [8, 8], strides = [1, 1]} : vector<8x42xf32> to vector<8x8xf32>
    %23 = vector.extract_strided_slice %13 {offsets = [0, 34], sizes = [8, 8], strides = [1, 1]} : vector<8x42xf32> to vector<8x8xf32>
    %24 = vector.extract_strided_slice %19 {offsets = [0, 0], sizes = [8, 16], strides = [1, 1]} : vector<8x44xf32> to vector<8x16xf32>
    %25 = vector.extract_strided_slice %19 {offsets = [0, 16], sizes = [8, 12], strides = [1, 1]} : vector<8x44xf32> to vector<8x12xf32>
    %26 = vector.extract_strided_slice %19 {offsets = [0, 28], sizes = [8, 8], strides = [1, 1]} : vector<8x44xf32> to vector<8x8xf32>
    %27 = vector.extract_strided_slice %19 {offsets = [0, 36], sizes = [8, 8], strides = [1, 1]} : vector<8x44xf32> to vector<8x8xf32>
    %28 = vector.shape_cast %20 : vector<8x16xf32> to vector<8x1x16xf32>
    %29 = vector.shape_cast %24 : vector<8x16xf32> to vector<1x8x16xf32>
    %30 = vector.broadcast %28 : vector<8x1x16xf32> to vector<8x8x16xf32>
    %31 = vector.broadcast %29 : vector<1x8x16xf32> to vector<8x8x16xf32>
    %32 = arith.addf %30, %31 : vector<8x8x16xf32>
    %33 = vector.shape_cast %32 : vector<8x8x16xf32> to vector<64x16xf32>
    %c0_16 = arith.constant 0 : index
    %c0_17 = arith.constant 0 : index
    %34 = vector.load %arg9[%c0_16, %c0_17] : memref<8x16xbf16, #tpu.memory_space<vmem>>, vector<8x16xbf16>
    %c0_18 = arith.constant 0 : index
    %c0_19 = arith.constant 0 : index
    %35 = vector.load %arg10[%c0_18, %c0_19] : memref<1x16xbf16, #tpu.memory_space<vmem>>, vector<1x16xbf16>
    %36 = arith.extf %35 : vector<1x16xbf16> to vector<1x16xf32>
    %cst_20 = arith.constant dense<0.000000e+00> : vector<64x16xf32>
    %37 = tpu.matmul %2, %34, %cst_20 {dimension_numbers = #tpu.dot_dimension_numbers<[1], [0], [0], [1], [0, 0, 1, 1], [], []>} : vector<64x8xbf16>, vector<8x16xbf16>, vector<64x16xf32> -> vector<64x16xf32>
    %38 = vector.broadcast %36 : vector<1x16xf32> to vector<64x16xf32>
    %39 = arith.addf %37, %38 : vector<64x16xf32>
    %40 = arith.addf %39, %33 : vector<64x16xf32>
    %cst_21 = arith.constant 0.000000e+00 : f32
    %41 = vector.broadcast %cst_21 : f32 to vector<64x16xf32>
    %42 = arith.maximumf %40, %41 : vector<64x16xf32>
    %43 = arith.truncf %25 : vector<8x12xf32> to vector<8x12xbf16>
    %cst_22 = arith.constant dense<0.000000e+00> : vector<8x8xf32>
    %44 = tpu.matmul %0, %43, %cst_22 {dimension_numbers = #tpu.dot_dimension_numbers<[1], [1], [0], [0], [0, 0, 1, 0], [], []>} : vector<8x12xbf16>, vector<8x12xbf16>, vector<8x8xf32> -> vector<8x8xf32>
    %45 = vector.shape_cast %26 : vector<8x8xf32> to vector<1x8x8xf32>
    %46 = vector.broadcast %45 : vector<1x8x8xf32> to vector<8x8x8xf32>
    %47 = arith.mulf %5, %46 : vector<8x8x8xf32>
    %cst_23 = arith.constant dense<0.000000e+00> : vector<8x8xf32>
    %48 = vector.multi_reduction <add>, %47, %cst_23 [2] : vector<8x8x8xf32> to vector<8x8xf32>
    %49 = arith.addf %44, %48 : vector<8x8xf32>
    %cst_24 = arith.constant dense<0xFF800000> : vector<8xf32>
    %50 = vector.multi_reduction <maximumf>, %49, %cst_24 [0] : vector<8x8xf32> to vector<8xf32>
    %51 = vector.shape_cast %50 : vector<8xf32> to vector<1x8xf32>
    %52 = vector.broadcast %51 : vector<1x8xf32> to vector<8x8xf32>
    %53 = arith.subf %49, %52 : vector<8x8xf32>
    %54 = math.exp %53 : vector<8x8xf32>
    %cst_25 = arith.constant dense<0.000000e+00> : vector<8xf32>
    %55 = vector.multi_reduction <add>, %54, %cst_25 [0] : vector<8x8xf32> to vector<8xf32>
    %56 = vector.shape_cast %55 : vector<8xf32> to vector<1x8xf32>
    %57 = vector.broadcast %56 : vector<1x8xf32> to vector<8x8xf32>
    %58 = arith.divf %54, %57 : vector<8x8xf32>
    %59 = arith.truncf %58 : vector<8x8xf32> to vector<8x8xbf16>
    %cst_26 = arith.constant dense<0.000000e+00> : vector<12x8xf32>
    %60 = tpu.matmul %0, %59, %cst_26 {dimension_numbers = #tpu.dot_dimension_numbers<[0], [0], [1], [1], [0, 1, 1, 1], [], []>} : vector<8x12xbf16>, vector<8x8xbf16>, vector<12x8xf32> -> vector<12x8xf32>
    %61 = vector.shape_cast %58 : vector<8x8xf32> to vector<8x8x1xf32>
    %62 = vector.broadcast %61 : vector<8x8x1xf32> to vector<8x8x8xf32>
    %63 = arith.mulf %5, %62 : vector<8x8x8xf32>
    %cst_27 = arith.constant dense<0.000000e+00> : vector<8x8xf32>
    %64 = vector.multi_reduction <add>, %63, %cst_27 [0] : vector<8x8x8xf32> to vector<8x8xf32>
    %65 = arith.truncf %21 : vector<8x10xf32> to vector<8x10xbf16>
    %cst_28 = arith.constant dense<0.000000e+00> : vector<8x8xf32>
    %66 = tpu.matmul %65, %1, %cst_28 {dimension_numbers = #tpu.dot_dimension_numbers<[1], [1], [0], [0], [0, 0, 1, 0], [], []>} : vector<8x10xbf16>, vector<8x10xbf16>, vector<8x8xf32> -> vector<8x8xf32>
    %67 = vector.shape_cast %22 : vector<8x8xf32> to vector<8x1x8xf32>
    %68 = vector.broadcast %67 : vector<8x1x8xf32> to vector<8x8x8xf32>
    %69 = arith.mulf %7, %68 : vector<8x8x8xf32>
    %cst_29 = arith.constant dense<0.000000e+00> : vector<8x8xf32>
    %70 = vector.multi_reduction <add>, %69, %cst_29 [2] : vector<8x8x8xf32> to vector<8x8xf32>
    %71 = arith.addf %66, %70 : vector<8x8xf32>
    %cst_30 = arith.constant dense<0xFF800000> : vector<8xf32>
    %72 = vector.multi_reduction <maximumf>, %71, %cst_30 [1] : vector<8x8xf32> to vector<8xf32>
    %73 = vector.shape_cast %72 : vector<8xf32> to vector<8x1xf32>
    %74 = vector.broadcast %73 : vector<8x1xf32> to vector<8x8xf32>
    %75 = arith.subf %71, %74 : vector<8x8xf32>
    %76 = math.exp %75 : vector<8x8xf32>
    %cst_31 = arith.constant dense<0.000000e+00> : vector<8xf32>
    %77 = vector.multi_reduction <add>, %76, %cst_31 [1] : vector<8x8xf32> to vector<8xf32>
    %78 = vector.shape_cast %77 : vector<8xf32> to vector<8x1xf32>
    %79 = vector.broadcast %78 : vector<8x1xf32> to vector<8x8xf32>
    %80 = arith.divf %76, %79 : vector<8x8xf32>
    %81 = arith.truncf %80 : vector<8x8xf32> to vector<8x8xbf16>
    %cst_32 = arith.constant dense<0.000000e+00> : vector<8x10xf32>
    %82 = tpu.matmul %81, %1, %cst_32 {dimension_numbers = #tpu.dot_dimension_numbers<[1], [0], [0], [1], [0, 0, 1, 1], [], []>} : vector<8x8xbf16>, vector<8x10xbf16>, vector<8x10xf32> -> vector<8x10xf32>
    %83 = vector.shape_cast %80 : vector<8x8xf32> to vector<8x8x1xf32>
    %84 = vector.broadcast %83 : vector<8x8x1xf32> to vector<8x8x8xf32>
    %85 = arith.mulf %7, %84 : vector<8x8x8xf32>
    %cst_33 = arith.constant dense<0.000000e+00> : vector<8x8xf32>
    %86 = vector.multi_reduction <add>, %85, %cst_33 [1] : vector<8x8x8xf32> to vector<8x8xf32>
    %87 = arith.truncf %82 : vector<8x10xf32> to vector<8x10xbf16>
    %c0_34 = arith.constant 0 : index
    %c0_35 = arith.constant 0 : index
    %88 = vector.load %arg11[%c0_34, %c0_35] : memref<10x8xbf16, #tpu.memory_space<vmem>>, vector<10x8xbf16>
    %cst_36 = arith.constant dense<0.000000e+00> : vector<8x8xf32>
    %89 = tpu.matmul %87, %88, %cst_36 {dimension_numbers = #tpu.dot_dimension_numbers<[1], [0], [0], [1], [0, 0, 1, 1], [], []>} : vector<8x10xbf16>, vector<10x8xbf16>, vector<8x8xf32> -> vector<8x8xf32>
    %90 = arith.truncf %86 : vector<8x8xf32> to vector<8x8xbf16>
    %c0_37 = arith.constant 0 : index
    %c0_38 = arith.constant 0 : index
    %91 = vector.load %arg12[%c0_37, %c0_38] : memref<8x8xbf16, #tpu.memory_space<vmem>>, vector<8x8xbf16>
    %cst_39 = arith.constant dense<0.000000e+00> : vector<8x8xf32>
    %92 = tpu.matmul %90, %91, %cst_39 {dimension_numbers = #tpu.dot_dimension_numbers<[1], [0], [0], [1], [0, 0, 1, 1], [], []>} : vector<8x8xbf16>, vector<8x8xbf16>, vector<8x8xf32> -> vector<8x8xf32>
    %93 = arith.addf %89, %92 : vector<8x8xf32>
    %c0_40 = arith.constant 0 : index
    %c0_41 = arith.constant 0 : index
    %94 = vector.load %arg13[%c0_40, %c0_41] : memref<1x8xbf16, #tpu.memory_space<vmem>>, vector<1x8xbf16>
    %95 = arith.extf %94 : vector<1x8xbf16> to vector<1x8xf32>
    %96 = vector.broadcast %95 : vector<1x8xf32> to vector<8x8xf32>
    %97 = arith.addf %93, %96 : vector<8x8xf32>
    %cst_42 = arith.constant 0.000000e+00 : f32
    %98 = vector.broadcast %cst_42 : f32 to vector<8x8xf32>
    %99 = arith.maximumf %97, %98 : vector<8x8xf32>
    %100 = arith.truncf %60 : vector<12x8xf32> to vector<12x8xbf16>
    %c0_43 = arith.constant 0 : index
    %c0_44 = arith.constant 0 : index
    %101 = vector.load %arg14[%c0_43, %c0_44] : memref<12x8xbf16, #tpu.memory_space<vmem>>, vector<12x8xbf16>
    %cst_45 = arith.constant dense<0.000000e+00> : vector<8x8xf32>
    %102 = tpu.matmul %100, %101, %cst_45 {dimension_numbers = #tpu.dot_dimension_numbers<[0], [0], [1], [1], [0, 1, 1, 1], [], []>} : vector<12x8xbf16>, vector<12x8xbf16>, vector<8x8xf32> -> vector<8x8xf32>
    %103 = arith.truncf %64 : vector<8x8xf32> to vector<8x8xbf16>
    %c0_46 = arith.constant 0 : index
    %c0_47 = arith.constant 0 : index
    %104 = vector.load %arg15[%c0_46, %c0_47] : memref<8x8xbf16, #tpu.memory_space<vmem>>, vector<8x8xbf16>
    %cst_48 = arith.constant dense<0.000000e+00> : vector<8x8xf32>
    %105 = tpu.matmul %103, %104, %cst_48 {dimension_numbers = #tpu.dot_dimension_numbers<[1], [0], [0], [1], [0, 0, 1, 1], [], []>} : vector<8x8xbf16>, vector<8x8xbf16>, vector<8x8xf32> -> vector<8x8xf32>
    %106 = arith.addf %102, %105 : vector<8x8xf32>
    %c0_49 = arith.constant 0 : index
    %c0_50 = arith.constant 0 : index
    %107 = vector.load %arg16[%c0_49, %c0_50] : memref<1x8xbf16, #tpu.memory_space<vmem>>, vector<1x8xbf16>
    %108 = arith.extf %107 : vector<1x8xbf16> to vector<1x8xf32>
    %109 = vector.broadcast %108 : vector<1x8xf32> to vector<8x8xf32>
    %110 = arith.addf %106, %109 : vector<8x8xf32>
    %cst_51 = arith.constant 0.000000e+00 : f32
    %111 = vector.broadcast %cst_51 : f32 to vector<8x8xf32>
    %112 = arith.maximumf %110, %111 : vector<8x8xf32>
    %cst_52 = arith.constant dense<0.000000e+00> : vector<64x16xf32>
    %113 = tpu.matmul %3, %34, %cst_52 {dimension_numbers = #tpu.dot_dimension_numbers<[1], [0], [0], [1], [0, 0, 1, 1], [], []>} : vector<64x8xbf16>, vector<8x16xbf16>, vector<64x16xf32> -> vector<64x16xf32>
    %114 = vector.broadcast %36 : vector<1x16xf32> to vector<64x16xf32>
    %115 = arith.addf %113, %114 : vector<64x16xf32>
    %116 = arith.addf %115, %33 : vector<64x16xf32>
    %cst_53 = arith.constant 0.000000e+00 : f32
    %117 = vector.broadcast %cst_53 : f32 to vector<64x16xf32>
    %118 = arith.maximumf %116, %117 : vector<64x16xf32>
    %119 = arith.truncf %42 : vector<64x16xf32> to vector<64x16xbf16>
    %c0_54 = arith.constant 0 : index
    %c0_55 = arith.constant 0 : index
    %120 = vector.load %arg17[%c0_54, %c0_55] : memref<64x16xbf16, #tpu.memory_space<vmem>>, vector<64x16xbf16>
    tpu.vector_store %arg17[%c0_54, %c0_55], %119 {strides = array<i32>} : memref<64x16xbf16, #tpu.memory_space<vmem>>, vector<64x16xbf16>,
    %121 = arith.truncf %118 : vector<64x16xf32> to vector<64x16xbf16>
    %c0_56 = arith.constant 0 : index
    %c0_57 = arith.constant 0 : index
    %122 = vector.load %arg18[%c0_56, %c0_57] : memref<64x16xbf16, #tpu.memory_space<vmem>>, vector<64x16xbf16>
    tpu.vector_store %arg18[%c0_56, %c0_57], %121 {strides = array<i32>} : memref<64x16xbf16, #tpu.memory_space<vmem>>, vector<64x16xbf16>,
    %123 = arith.truncf %23 : vector<8x8xf32> to vector<8x8xbf16>
    %c0_58 = arith.constant 0 : index
    %c0_59 = arith.constant 0 : index
    %124 = vector.load %arg19[%c0_58, %c0_59] : memref<8x8xbf16, #tpu.memory_space<vmem>>, vector<8x8xbf16>
    tpu.vector_store %arg19[%c0_58, %c0_59], %123 {strides = array<i32>} : memref<8x8xbf16, #tpu.memory_space<vmem>>, vector<8x8xbf16>,
    %125 = arith.truncf %99 : vector<8x8xf32> to vector<8x8xbf16>
    %c0_60 = arith.constant 0 : index
    %c0_61 = arith.constant 0 : index
    %126 = vector.load %arg20[%c0_60, %c0_61] : memref<8x8xbf16, #tpu.memory_space<vmem>>, vector<8x8xbf16>
    tpu.vector_store %arg20[%c0_60, %c0_61], %125 {strides = array<i32>} : memref<8x8xbf16, #tpu.memory_space<vmem>>, vector<8x8xbf16>,
    %127 = arith.truncf %27 : vector<8x8xf32> to vector<8x8xbf16>
    %c0_62 = arith.constant 0 : index
    %c0_63 = arith.constant 0 : index
    %128 = vector.load %arg21[%c0_62, %c0_63] : memref<8x8xbf16, #tpu.memory_space<vmem>>, vector<8x8xbf16>
    tpu.vector_store %arg21[%c0_62, %c0_63], %127 {strides = array<i32>} : memref<8x8xbf16, #tpu.memory_space<vmem>>, vector<8x8xbf16>,
    %129 = arith.truncf %112 : vector<8x8xf32> to vector<8x8xbf16>
    %c0_64 = arith.constant 0 : index
    %c0_65 = arith.constant 0 : index
    %130 = vector.load %arg22[%c0_64, %c0_65] : memref<8x8xbf16, #tpu.memory_space<vmem>>, vector<8x8xbf16>
    tpu.vector_store %arg22[%c0_64, %c0_65], %129 {strides = array<i32>} : memref<8x8xbf16, #tpu.memory_space<vmem>>, vector<8x8xbf16>,
    return
  }
  func.func @transform_0(%arg0: i32) -> (i32, i32) {
    %c0_i32 = arith.constant 0 : i32
    %c0_i32_0 = arith.constant 0 : i32
    %c0_i32_1 = arith.constant 0 : i32
    return %c0_i32, %c0_i32_0 : i32, i32
  }
  func.func @transform_1(%arg0: i32) -> (i32, i32) {
    %c0_i32 = arith.constant 0 : i32
    %c0_i32_0 = arith.constant 0 : i32
    %c0_i32_1 = arith.constant 0 : i32
    return %c0_i32, %c0_i32_0 : i32, i32
  }
  func.func @transform_2(%arg0: i32) -> (i32, i32) {
    %c0_i32 = arith.constant 0 : i32
    %c0_i32_0 = arith.constant 0 : i32
    %c0_i32_1 = arith.constant 0 : i32
    return %c0_i32, %c0_i32_0 : i32, i32
  }
  func.func @transform_3(%arg0: i32) -> (i32, i32) {
    %c0_i32 = arith.constant 0 : i32
    %c0_i32_0 = arith.constant 0 : i32
    %c0_i32_1 = arith.constant 0 : i32
    return %c0_i32, %c0_i32_0 : i32, i32
  }
  func.func @transform_4(%arg0: i32) -> (i32, i32) {
    %c0_i32 = arith.constant 0 : i32
    %c0_i32_0 = arith.constant 0 : i32
    %c0_i32_1 = arith.constant 0 : i32
    return %c0_i32, %c0_i32_0 : i32, i32
  }
  func.func @transform_5(%arg0: i32) -> (i32, i32) {
    %c0_i32 = arith.constant 0 : i32
    %c0_i32_0 = arith.constant 0 : i32
    %c0_i32_1 = arith.constant 0 : i32
    return %c0_i32, %c0_i32_0 : i32, i32
  }
  func.func @transform_6(%arg0: i32) -> (i32, i32) {
    %c0_i32 = arith.constant 0 : i32
    %c0_i32_0 = arith.constant 0 : i32
    %c0_i32_1 = arith.constant 0 : i32
    return %c0_i32, %c0_i32_0 : i32, i32
  }
  func.func @transform_7(%arg0: i32) -> (i32, i32) {
    %c0_i32 = arith.constant 0 : i32
    %c0_i32_0 = arith.constant 0 : i32
    %c0_i32_1 = arith.constant 0 : i32
    return %c0_i32, %c0_i32_0 : i32, i32
  }
  func.func @transform_8(%arg0: i32) -> (i32, i32) {
    %c0_i32 = arith.constant 0 : i32
    %c0_i32_0 = arith.constant 0 : i32
    %c0_i32_1 = arith.constant 0 : i32
    return %c0_i32, %c0_i32_0 : i32, i32
  }
  func.func @transform_9(%arg0: i32) -> (i32, i32) {
    %c0_i32 = arith.constant 0 : i32
    %c0_i32_0 = arith.constant 0 : i32
    %c0_i32_1 = arith.constant 0 : i32
    return %c0_i32, %c0_i32_0 : i32, i32
  }
  func.func @transform_10(%arg0: i32) -> (i32, i32) {
    %c0_i32 = arith.constant 0 : i32
    %c0_i32_0 = arith.constant 0 : i32
    %c0_i32_1 = arith.constant 0 : i32
    return %c0_i32, %c0_i32_0 : i32, i32
  }
  func.func @transform_11(%arg0: i32) -> (i32, i32) {
    %c0_i32 = arith.constant 0 : i32
    %c0_i32_0 = arith.constant 0 : i32
    %c0_i32_1 = arith.constant 0 : i32
    return %c0_i32, %c0_i32_0 : i32, i32
  }
  func.func @transform_12(%arg0: i32) -> (i32, i32) {
    %c0_i32 = arith.constant 0 : i32
    %c0_i32_0 = arith.constant 0 : i32
    %c0_i32_1 = arith.constant 0 : i32
    return %c0_i32, %c0_i32_0 : i32, i32
  }
  func.func @transform_13(%arg0: i32) -> (i32, i32) {
    %c0_i32 = arith.constant 0 : i32
    %c0_i32_0 = arith.constant 0 : i32
    %c0_i32_1 = arith.constant 0 : i32
    return %c0_i32, %c0_i32_0 : i32, i32
  }
  func.func @transform_14(%arg0: i32) -> (i32, i32) {
    %c0_i32 = arith.constant 0 : i32
    %c0_i32_0 = arith.constant 0 : i32
    %c0_i32_1 = arith.constant 0 : i32
    return %c0_i32, %c0_i32_0 : i32, i32
  }
  func.func @transform_15(%arg0: i32) -> (i32, i32) {
    %c0_i32 = arith.constant 0 : i32
    %c0_i32_0 = arith.constant 0 : i32
    %c0_i32_1 = arith.constant 0 : i32
    return %c0_i32, %c0_i32_0 : i32, i32
  }
  func.func @transform_16(%arg0: i32) -> (i32, i32) {
    %c0_i32 = arith.constant 0 : i32
    %c0_i32_0 = arith.constant 0 : i32
    %c0_i32_1 = arith.constant 0 : i32
    return %c0_i32, %c0_i32_0 : i32, i32
  }
  func.func @transform_17(%arg0: i32) -> (i32, i32) {
    %c0_i32 = arith.constant 0 : i32
    %c0_i32_0 = arith.constant 0 : i32
    %c0_i32_1 = arith.constant 0 : i32
    return %c0_i32, %c0_i32_0 : i32, i32
  }
  func.func @transform_18(%arg0: i32) -> (i32, i32) {
    %c0_i32 = arith.constant 0 : i32
    %c0_i32_0 = arith.constant 0 : i32
    %c0_i32_1 = arith.constant 0 : i32
    return %c0_i32, %c0_i32_0 : i32, i32
  }
  func.func @transform_19(%arg0: i32) -> (i32, i32) {
    %c0_i32 = arith.constant 0 : i32
    %c0_i32_0 = arith.constant 0 : i32
    %c0_i32_1 = arith.constant 0 : i32
    return %c0_i32, %c0_i32_0 : i32, i32
  }
  func.func @transform_20(%arg0: i32) -> (i32, i32) {
    %c0_i32 = arith.constant 0 : i32
    %c0_i32_0 = arith.constant 0 : i32
    %c0_i32_1 = arith.constant 0 : i32
    return %c0_i32, %c0_i32_0 : i32, i32
  }
  func.func @transform_21(%arg0: i32) -> (i32, i32) {
    %c0_i32 = arith.constant 0 : i32
    %c0_i32_0 = arith.constant 0 : i32
    %c0_i32_1 = arith.constant 0 : i32
    return %c0_i32, %c0_i32_0 : i32, i32
  }
}

</mosaic_0001>

<llo_original>
// kernel: gas_forward_pallas.2
$region0: #{gas_forward_pallas.2}
  #allocation0 [shape = 'u32[]', space=smem, size = 0x4, offset = 0x4, fixed_abs, tag = 'smem constant byte address 0x4 - core index']
  #allocation1 [shape = 'u32[144,128]{1,0:T(1,128)}', space=vmem, size = 0x12000, scoped, tag = 'internal scratch']
  %s0 = inlined_call_operand.vmem [shape: bf16[64,8], index: 0, kind: input, shape index: {}]
  %s1 = inlined_call_operand.vmem [shape: bf16[64,8], index: 1, kind: input, shape index: {}]
  %s2 = inlined_call_operand.vmem [shape: bf16[8,12], index: 2, kind: input, shape index: {}]
  %s3 = inlined_call_operand.vmem [shape: bf16[8,10], index: 3, kind: input, shape index: {}]
  %s4 = inlined_call_operand.vmem [shape: bf16[12,42], index: 4, kind: input, shape index: {}]
  %s5 = inlined_call_operand.vmem [shape: bf16[1,42], index: 5, kind: input, shape index: {}]
  %s6 = inlined_call_operand.vmem [shape: bf16[10,44], index: 6, kind: input, shape index: {}]
  %s7 = inlined_call_operand.vmem [shape: bf16[1,44], index: 7, kind: input, shape index: {}]
  %s8 = inlined_call_operand.vmem [shape: bf16[8,16], index: 8, kind: input, shape index: {}]
  %s9 = inlined_call_operand.vmem [shape: bf16[1,16], index: 9, kind: input, shape index: {}]
  %s10 = inlined_call_operand.vmem [shape: bf16[10,8], index: 10, kind: input, shape index: {}]
  %s11 = inlined_call_operand.vmem [shape: bf16[8,8], index: 11, kind: input, shape index: {}]
  %s12 = inlined_call_operand.vmem [shape: bf16[1,8], index: 12, kind: input, shape index: {}]
  %s13 = inlined_call_operand.vmem [shape: bf16[12,8], index: 13, kind: input, shape index: {}]
  %s14 = inlined_call_operand.vmem [shape: bf16[8,8], index: 14, kind: input, shape index: {}]
  %s15 = inlined_call_operand.vmem [shape: bf16[1,8], index: 15, kind: input, shape index: {}]
  %s16 = inlined_call_operand.vmem [shape: bf16[64,16], index: 16, kind: output, shape index: {0}]
  %s17 = inlined_call_operand.vmem [shape: bf16[64,16], index: 17, kind: output, shape index: {1}]
  %s18 = inlined_call_operand.vmem [shape: bf16[8,8], index: 18, kind: output, shape index: {2}]
  %s19 = inlined_call_operand.vmem [shape: bf16[8,8], index: 19, kind: output, shape index: {3}]
  %s20 = inlined_call_operand.vmem [shape: bf16[8,8], index: 20, kind: output, shape index: {4}]
  %s21 = inlined_call_operand.vmem [shape: bf16[8,8], index: 21, kind: output, shape index: {5}]
  %22 = xla_tuple %s16, %s17, %s18, %s19, %s20, %s21
  %s23 = sld [smem:[#allocation0]]
  $region114: #{gas_forward_pallas.2} parent=0
    _
  %s25 = ssub.s32 1, %s23
  %s26 = scalar_select 0, %s25, %s23
  // Predicated region
  $region2: #{gas_forward_pallas.2} parent=0 // pred_check
    _
  $region3: #{gas_forward_pallas.2} parent=0 // pred_check_branch
    %28 = sbr.rel (0) target = $region5
  $region4: #{gas_forward_pallas.2} parent=0 // pred_region
    _
  $region5: #{gas_forward_pallas.2} parent=0 // pred_fallthru
    _
  // Predicated region
  $region6: #{gas_forward_pallas.2} parent=0 // pred_check
    _
  $region7: #{gas_forward_pallas.2} parent=0 // pred_check_branch
    %30 = sbr.rel (0) target = $region9
  $region8: #{gas_forward_pallas.2} parent=0 // pred_region
    _
  $region9: #{gas_forward_pallas.2} parent=0 // pred_fallthru
    _
  // Predicated region
  $region10: #{gas_forward_pallas.2} parent=0 // pred_check
    _
  $region11: #{gas_forward_pallas.2} parent=0 // pred_check_branch
    %32 = sbr.rel (0) target = $region13
  $region12: #{gas_forward_pallas.2} parent=0 // pred_region
    _
  $region13: #{gas_forward_pallas.2} parent=0 // pred_fallthru
    _
  // Predicated region
  $region14: #{gas_forward_pallas.2} parent=0 // pred_check
    _
  $region15: #{gas_forward_pallas.2} parent=0 // pred_check_branch
    %34 = sbr.rel (0) target = $region17
  $region16: #{gas_forward_pallas.2} parent=0 // pred_region
    _
  $region17: #{gas_forward_pallas.2} parent=0 // pred_fallthru
    _
  // Predicated region
  $region18: #{gas_forward_pallas.2} parent=0 // pred_check
    _
  $region19: #{gas_forward_pallas.2} parent=0 // pred_check_branch
    %36 = sbr.rel (0) target = $region21
  $region20: #{gas_forward_pallas.2} parent=0 // pred_region
    _
  $region21: #{gas_forward_pallas.2} parent=0 // pred_fallthru
    _
  // Predicated region
  $region22: #{gas_forward_pallas.2} parent=0 // pred_check
    _
  $region23: #{gas_forward_pallas.2} parent=0 // pred_check_branch
    %38 = sbr.rel (0) target = $region25
  $region24: #{gas_forward_pallas.2} parent=0 // pred_region
    _
  $region25: #{gas_forward_pallas.2} parent=0 // pred_fallthru
    _
  // Predicated region
  $region26: #{gas_forward_pallas.2} parent=0 // pred_check
    _
  $region27: #{gas_forward_pallas.2} parent=0 // pred_check_branch
    %40 = sbr.rel (0) target = $region29
  $region28: #{gas_forward_pallas.2} parent=0 // pred_region
    _
  $region29: #{gas_forward_pallas.2} parent=0 // pred_fallthru
    _
  // Predicated region
  $region30: #{gas_forward_pallas.2} parent=0 // pred_check
    _
  $region31: #{gas_forward_pallas.2} parent=0 // pred_check_branch
    %42 = sbr.rel (0) target = $region33
  $region32: #{gas_forward_pallas.2} parent=0 // pred_region
    _
  $region33: #{gas_forward_pallas.2} parent=0 // pred_fallthru
    _
  // Predicated region
  $region34: #{gas_forward_pallas.2} parent=0 // pred_check
    _
  $region35: #{gas_forward_pallas.2} parent=0 // pred_check_branch
    %44 = sbr.rel (0) target = $region37
  $region36: #{gas_forward_pallas.2} parent=0 // pred_region
    _
  $region37: #{gas_forward_pallas.2} parent=0 // pred_fallthru
    _
  // Predicated region
  $region38: #{gas_forward_pallas.2} parent=0 // pred_check
    _
  $region39: #{gas_forward_pallas.2} parent=0 // pred_check_branch
    %46 = sbr.rel (0) target = $region41
  $region40: #{gas_forward_pallas.2} parent=0 // pred_region
    _
  $region41: #{gas_forward_pallas.2} parent=0 // pred_fallthru
    _
  // Predicated region
  $region42: #{gas_forward_pallas.2} parent=0 // pred_check
    _
  $region43: #{gas_forward_pallas.2} parent=0 // pred_check_branch
    %48 = sbr.rel (0) target = $region45
  $region44: #{gas_forward_pallas.2} parent=0 // pred_region
    _
  $region45: #{gas_forward_pallas.2} parent=0 // pred_fallthru
    _
  // Predicated region
  $region46: #{gas_forward_pallas.2} parent=0 // pred_check
    _
  $region47: #{gas_forward_pallas.2} parent=0 // pred_check_branch
    %50 = sbr.rel (0) target = $region49
  $region48: #{gas_forward_pallas.2} parent=0 // pred_region
    _
  $region49: #{gas_forward_pallas.2} parent=0 // pred_fallthru
    _
  // Predicated region
  $region50: #{gas_forward_pallas.2} parent=0 // pred_check
    _
  $region51: #{gas_forward_pallas.2} parent=0 // pred_check_branch
    %52 = sbr.rel (0) target = $region53
  $region52: #{gas_forward_pallas.2} parent=0 // pred_region
    _
  $region53: #{gas_forward_pallas.2} parent=0 // pred_fallthru
    _
  // Predicated region
  $region54: #{gas_forward_pallas.2} parent=0 // pred_check
    _
  $region55: #{gas_forward_pallas.2} parent=0 // pred_check_branch
    %54 = sbr.rel (0) target = $region57
  $region56: #{gas_forward_pallas.2} parent=0 // pred_region
    _
  $region57: #{gas_forward_pallas.2} parent=0 // pred_fallthru
    _
  // Predicated region
  $region58: #{gas_forward_pallas.2} parent=0 // pred_check
    _
  $region59: #{gas_forward_pallas.2} parent=0 // pred_check_branch
    %56 = sbr.rel (0) target = $region61
  $region60: #{gas_forward_pallas.2} parent=0 // pred_region
    _
  $region61: #{gas_forward_pallas.2} parent=0 // pred_fallthru
    _
  // Predicated region
  $region62: #{gas_forward_pallas.2} parent=0 // pred_check
    _
  $region63: #{gas_forward_pallas.2} parent=0 // pred_check_branch
    %58 = sbr.rel (0) target = $region65
  $region64: #{gas_forward_pallas.2} parent=0 // pred_region
    _
  $region65: #{gas_forward_pallas.2} parent=0 // pred_fallthru
    _
  %v60 = vld [vmem:[%s2] sm:$0xf]
  %v61 = vld [vmem:[%s3] sm:$0xf]
  %v62 = vld [vmem:[%s0] sm:$0xf]
  %v63 = vld [vmem:[%s0 + $0x4] sm:$0xf]
  %v64 = vld [vmem:[%s0 + $0x8] sm:$0xf]
  %v65 = vld [vmem:[%s0 + $0xc] sm:$0xf]
  %v66 = vld [vmem:[%s0 + $0x10] sm:$0xf]
  %v67 = vld [vmem:[%s0 + $0x14] sm:$0xf]
  %v68 = vld [vmem:[%s0 + $0x18] sm:$0xf]
  %v69 = vld [vmem:[%s0 + $0x1c] sm:$0xf]
  %v70 = vld [vmem:[%s1] sm:$0xf]
  %v71 = vld [vmem:[%s1 + $0x4] sm:$0xf]
  %v72 = vld [vmem:[%s1 + $0x8] sm:$0xf]
  %v73 = vld [vmem:[%s1 + $0xc] sm:$0xf]
  %v74 = vld [vmem:[%s1 + $0x10] sm:$0xf]
  %v75 = vld [vmem:[%s1 + $0x14] sm:$0xf]
  %v76 = vld [vmem:[%s1 + $0x18] sm:$0xf]
  %v77 = vld [vmem:[%s1 + $0x1c] sm:$0xf]
  %v78 = vunpack.c.l.bf16 %v62
  %v79 = vunpack.c.l.bf16 %v63
  %v80 = vunpack.c.l.bf16 %v64
  %v81 = vunpack.c.l.bf16 %v65
  %v82 = vunpack.c.l.bf16 %v66
  %v83 = vunpack.c.l.bf16 %v67
  %v84 = vunpack.c.l.bf16 %v68
  %v85 = vunpack.c.l.bf16 %v69
  %v86 = vunpack.c.l.bf16 %v70
  %v87 = vunpack.c.l.bf16 %v71
  %v88 = vunpack.c.l.bf16 %v72
  %v89 = vunpack.c.l.bf16 %v73
  %v90 = vunpack.c.l.bf16 %v74
  %v91 = vunpack.c.l.bf16 %v75
  %v92 = vunpack.c.l.bf16 %v76
  %v93 = vunpack.c.l.bf16 %v77
  %v94 = vld [vmem:[%s4] sm:$0xf]
  %v95 = vld [vmem:[%s4 + $0x4] sm:$0x3]
  %v96 = vld [vmem:[%s5] sm:$0x1]
  %v97 = vunpack.c.l.bf16 %v96
  %v98 = vlaneseq
  %v99 = vshrl.u32 %v98, 7
  %v100 = vsub.s32 0, %v99
  %v101 = vrot.slane %v97, %v100
  %v104 = vunpack.c.l.b16 %v94
  %v105 = vunpack.c.l.b16 %v95
  %v106 = vpack.c.b16 %v105, %v104
  %vm107 = vcmask 97280
  %v109 = vsel %vm107, %v60, 0
  %vm111 = vcmask 1045504
  %v113 = vsel %vm111, %v106, 0
  %115 = vmatprep.subr.bf16.mxu0 0
  %116 = vmatpush1.bf16.msra.mxu0 0
  %117 = vmatprep.subr.bf16.mxu0 0
  %118 = vmatpush1.bf16.msra.mxu0 0
  %119 = vmatprep.subr.bf16.mxu0 0
  %120 = vmatpush1.bf16.msra.mxu0 0
  %121 = vmatprep.subr.bf16.mxu0 0
  %122 = vmatpush1.bf16.msra.mxu0 0
  %123 = vmatprep.subr.bf16.mxu0 0
  %124 = vmatpush1.bf16.msra.mxu0 0
  %125 = vmatprep.subr.bf16.mxu0 0
  %126 = vmatpush1.bf16.msra.mxu0 0
  %127 = vmatprep.subr.bf16.mxu0 0
  %128 = vmatpush1.bf16.msra.mxu0 0
  %129 = vmatprep.subr.bf16.mxu0 0
  %130 = vmatpush1.bf16.msra.mxu0 %v113
  %131 = vmatprep.subr.bf16.mxu0 0
  %132 = vmatpush2.bf16.msra.mxu0 0
  %133 = vmatprep.subr.bf16.mxu0 0
  %134 = vmatpush2.bf16.msra.mxu0 0
  %135 = vmatprep.subr.bf16.mxu0 0
  %136 = vmatpush2.bf16.msra.mxu0 0
  %137 = vmatprep.subr.bf16.mxu0 0
  %138 = vmatpush2.bf16.msra.mxu0 0
  %139 = vmatprep.subr.bf16.mxu0 0
  %140 = vmatpush2.bf16.msra.mxu0 0
  %141 = vmatprep.subr.bf16.mxu0 0
  %142 = vmatpush2.bf16.msra.mxu0 0
  %143 = vmatprep.subr.bf16.mxu0 0
  %144 = vmatpush2.bf16.msra.mxu0 0
  %145 = vmatprep.subr.bf16.mxu0 0
  %146 = vmatpush2.bf16.msra.mxu0 0
  %147 = vmatprep.mubr.bf16.mxu0 0
  %148 = vmatmul.mubr.bf16.gmra.mxu0 %v109
  %v149 = vpop.f32.mrf.mxu0
  %v150 = vadd.f32 %v101, %v149
  %v151 = vpop.f32.mrf.mxu0
  %v152 = vpop.f32.mrf.mxu0
  %v153 = vpop.f32.mrf.mxu0
  %154 = vdwg.mxu0
  %v155 = vld [vmem:[%s6] sm:$0xf]
  %v156 = vld [vmem:[%s6 + $0x4] sm:$0x1]
  %v157 = vld [vmem:[%s7] sm:$0x1]
  %v158 = vunpack.c.l.bf16 %v157
  %v159 = vlaneseq
  %v160 = vshrl.u32 %v159, 7
  %v161 = vsub.s32 0, %v160
  %v162 = vrot.slane %v158, %v161
  %v165 = vunpack.c.l.b16 %v155
  %v166 = vunpack.c.l.b16 %v156
  %v167 = vpack.c.b16 %v166, %v165
  %vm168 = vcmask 80896
  %v170 = vsel %vm168, %v61, 0
  %vm172 = vcmask 1044480
  %v174 = vsel %vm172, %v167, 0
  %176 = vmatprep.subr.bf16.mxu0 0
  %177 = vmatpush1.bf16.msra.mxu0 0
  %178 = vmatprep.subr.bf16.mxu0 0
  %179 = vmatpush1.bf16.msra.mxu0 0
  %180 = vmatprep.subr.bf16.mxu0 0
  %181 = vmatpush1.bf16.msra.mxu0 0
  %182 = vmatprep.subr.bf16.mxu0 0
  %183 = vmatpush1.bf16.msra.mxu0 0
  %184 = vmatprep.subr.bf16.mxu0 0
  %185 = vmatpush1.bf16.msra.mxu0 0
  %186 = vmatprep.subr.bf16.mxu0 0
  %187 = vmatpush1.bf16.msra.mxu0 0
  %188 = vmatprep.subr.bf16.mxu0 0
  %189 = vmatpush1.bf16.msra.mxu0 0
  %190 = vmatprep.subr.bf16.mxu0 0
  %191 = vmatpush1.bf16.msra.mxu0 %v174
  %192 = vmatprep.subr.bf16.mxu0 0
  %193 = vmatpush2.bf16.msra.mxu0 0
  %194 = vmatprep.subr.bf16.mxu0 0
  %195 = vmatpush2.bf16.msra.mxu0 0
  %196 = vmatprep.subr.bf16.mxu0 0
  %197 = vmatpush2.bf16.msra.mxu0 0
  %198 = vmatprep.subr.bf16.mxu0 0
  %199 = vmatpush2.bf16.msra.mxu0 0
  %200 = vmatprep.subr.bf16.mxu0 0
  %201 = vmatpush2.bf16.msra.mxu0 0
  %202 = vmatprep.subr.bf16.mxu0 0
  %203 = vmatpush2.bf16.msra.mxu0 0
  %204 = vmatprep.subr.bf16.mxu0 0
  %205 = vmatpush2.bf16.msra.mxu0 0
  %206 = vmatprep.subr.bf16.mxu0 0
  %207 = vmatpush2.bf16.msra.mxu0 0
  %208 = vmatprep.mubr.bf16.mxu0 0
  %209 = vmatmul.mubr.bf16.gmra.mxu0 %v170
  %v210 = vpop.f32.mrf.mxu0
  %v211 = vadd.f32 %v162, %v210
  %v212 = vpop.f32.mrf.mxu0
  %v213 = vpop.f32.mrf.mxu0
  %v214 = vpop.f32.mrf.mxu0
  %215 = vdwg.mxu0
  %v217 = vcombine.high %v150, %v150
  %v219 = vunpack.c.l.s4 1966171168
  %v220 = vunpack.c.0.s8 %v219
  %v221 = vlaneseq
  %v222 = vshrl.u32 %v221, 7
  %v223 = vsub.s32 %v220, %v222
  %v224 = vrot.slane %v150, %v223
  %v226 = vunpack.c.l.s4 1966171168
  %v227 = vunpack.c.0.s8 %v226
  %v228 = vlaneseq
  %v229 = vshrl.u32 %v228, 7
  %v230 = vsub.s32 %v227, %v229
  %v231 = vrot.slane %v217, %v230
  %v232 = vcombine.high %v224, %v224
  %v233 = vcombine.high %v231, %v231
  %v235 = vunpack.c.l.s4 1966171168
  %v236 = vunpack.c.0.s8 %v235
  %v237 = vlaneseq
  %v238 = vshrl.u32 %v237, 7
  %v239 = vsub.s32 %v236, %v238
  %v240 = vrot.slane %v224, %v239
  %v242 = vunpack.c.l.s4 1966171168
  %v243 = vunpack.c.0.s8 %v242
  %v244 = vlaneseq
  %v245 = vshrl.u32 %v244, 7
  %v246 = vsub.s32 %v243, %v245
  %v247 = vrot.slane %v231, %v246
  %v249 = vunpack.c.l.s4 1966171168
  %v250 = vunpack.c.0.s8 %v249
  %v251 = vlaneseq
  %v252 = vshrl.u32 %v251, 7
  %v253 = vsub.s32 %v250, %v252
  %v254 = vrot.slane %v232, %v253
  %v256 = vunpack.c.l.s4 1966171168
  %v257 = vunpack.c.0.s8 %v256
  %v258 = vlaneseq
  %v259 = vshrl.u32 %v258, 7
  %v260 = vsub.s32 %v257, %v259
  %v261 = vrot.slane %v233, %v260
  %v262 = vcombine.high %v240, %v240
  %v263 = vcombine.high %v247, %v247
  %v264 = vcombine.high %v254, %v254
  %v265 = vcombine.high %v261, %v261
  %v266 = vlaneseq
  %v267 = vshrl.u32 %v266, 7
  %v268 = vsub.s32 0, %v267
  %v269 = vrot.slane %v240, %v268
  %v270 = vlaneseq
  %v271 = vshrl.u32 %v270, 7
  %v272 = vsub.s32 0, %v271
  %v273 = vrot.slane %v254, %v272
  %v274 = vlaneseq
  %v275 = vshrl.u32 %v274, 7
  %v276 = vsub.s32 0, %v275
  %v277 = vrot.slane %v262, %v276
  %v278 = vlaneseq
  %v279 = vshrl.u32 %v278, 7
  %v280 = vsub.s32 0, %v279
  %v281 = vrot.slane %v264, %v280
  %v282 = vlaneseq
  %v283 = vshrl.u32 %v282, 7
  %v284 = vsub.s32 0, %v283
  %v285 = vrot.slane %v247, %v284
  %v286 = vlaneseq
  %v287 = vshrl.u32 %v286, 7
  %v288 = vsub.s32 0, %v287
  %v289 = vrot.slane %v261, %v288
  %v290 = vlaneseq
  %v291 = vshrl.u32 %v290, 7
  %v292 = vsub.s32 0, %v291
  %v293 = vrot.slane %v263, %v292
  %v294 = vlaneseq
  %v295 = vshrl.u32 %v294, 7
  %v296 = vsub.s32 0, %v295
  %v297 = vrot.slane %v265, %v296
  %v306 = vadd.f32 %v269, %v211
  %v307 = vadd.f32 %v273, %v211
  %v308 = vadd.f32 %v277, %v211
  %v309 = vadd.f32 %v281, %v211
  %v310 = vadd.f32 %v285, %v211
  %v311 = vadd.f32 %v289, %v211
  %v312 = vadd.f32 %v293, %v211
  %v313 = vadd.f32 %v297, %v211
  %v314 = vld [vmem:[%s8] sm:$0xf]
  %v315 = vld [vmem:[%s9] sm:$0x1]
  %v316 = vunpack.c.l.bf16 %v315
  %v317 = vlaneseq
  %v318 = vshrl.u32 %v317, 7
  %v319 = vsub.s32 0, %v318
  %v320 = vrot.slane %v316, %v319
  %v329 = vunpack.c.l.b16 %v62
  %v330 = vunpack.c.l.b16 %v63
  %v331 = vunpack.c.l.b16 %v64
  %v332 = vunpack.c.l.b16 %v65
  %v333 = vunpack.c.l.b16 %v66
  %v334 = vunpack.c.l.b16 %v67
  %v335 = vunpack.c.l.b16 %v68
  %v336 = vunpack.c.l.b16 %v69
  %v337 = vpack.c.b16 %v330, %v329
  %v338 = vpack.c.b16 %v332, %v331
  %v339 = vpack.c.b16 %v334, %v333
  %v340 = vpack.c.b16 %v336, %v335
  %vm341 = vcmask 64512
  %v343 = vsel %vm341, %v337, 0
  %v346 = vsel %vm341, %v338, 0
  %v349 = vsel %vm341, %v339, 0
  %v352 = vsel %vm341, %v340, 0
  %vm354 = vcmask 1043456
  %v356 = vsel %vm354, %v314, 0
  %358 = vmatprep.subr.bf16.mxu0 0
  %359 = vmatpush1.bf16.msra.mxu0 0
  %360 = vmatprep.subr.bf16.mxu0 0
  %361 = vmatpush1.bf16.msra.mxu0 0
  %362 = vmatprep.subr.bf16.mxu0 0
  %363 = vmatpush1.bf16.msra.mxu0 0
  %364 = vmatprep.subr.bf16.mxu0 0
  %365 = vmatpush1.bf16.msra.mxu0 0
  %366 = vmatprep.subr.bf16.mxu0 0
  %367 = vmatpush1.bf16.msra.mxu0 0
  %368 = vmatprep.subr.bf16.mxu0 0
  %369 = vmatpush1.bf16.msra.mxu0 0
  %370 = vmatprep.subr.bf16.mxu0 0
  %371 = vmatpush1.bf16.msra.mxu0 0
  %372 = vmatprep.subr.bf16.mxu0 0
  %373 = vmatpush1.bf16.msra.mxu0 %v356
  %374 = vmatprep.subr.bf16.mxu0 0
  %375 = vmatpush2.bf16.msra.mxu0 0
  %376 = vmatprep.subr.bf16.mxu0 0
  %377 = vmatpush2.bf16.msra.mxu0 0
  %378 = vmatprep.subr.bf16.mxu0 0
  %379 = vmatpush2.bf16.msra.mxu0 0
  %380 = vmatprep.subr.bf16.mxu0 0
  %381 = vmatpush2.bf16.msra.mxu0 0
  %382 = vmatprep.subr.bf16.mxu0 0
  %383 = vmatpush2.bf16.msra.mxu0 0
  %384 = vmatprep.subr.bf16.mxu0 0
  %385 = vmatpush2.bf16.msra.mxu0 0
  %386 = vmatprep.subr.bf16.mxu0 0
  %387 = vmatpush2.bf16.msra.mxu0 0
  %388 = vmatprep.subr.bf16.mxu0 0
  %389 = vmatpush2.bf16.msra.mxu0 0
  %390 = vmatprep.mubr.bf16.mxu0 0
  %391 = vmatmul.mubr.bf16.gmra.mxu0 %v343
  %v392 = vpop.f32.mrf.mxu0
  %v393 = vadd.f32 %v320, %v392
  %v394 = vpop.f32.mrf.mxu0
  %v395 = vpop.f32.mrf.mxu0
  %v396 = vadd.f32 %v320, %v395
  %v397 = vpop.f32.mrf.mxu0
  %398 = vmatprep.mubr.bf16.mxu0 0
  %399 = vmatmul.mubr.bf16.gmra.mxu0 %v346
  %v400 = vpop.f32.mrf.mxu0
  %v401 = vadd.f32 %v320, %v400
  %v402 = vpop.f32.mrf.mxu0
  %v403 = vpop.f32.mrf.mxu0
  %v404 = vadd.f32 %v320, %v403
  %v405 = vpop.f32.mrf.mxu0
  %406 = vmatprep.mubr.bf16.mxu0 0
  %407 = vmatmul.mubr.bf16.gmra.mxu0 %v349
  %v408 = vpop.f32.mrf.mxu0
  %v409 = vadd.f32 %v320, %v408
  %v410 = vpop.f32.mrf.mxu0
  %v411 = vpop.f32.mrf.mxu0
  %v412 = vadd.f32 %v320, %v411
  %v413 = vpop.f32.mrf.mxu0
  %414 = vmatprep.mubr.bf16.mxu0 0
  %415 = vmatmul.mubr.bf16.gmra.mxu0 %v352
  %v416 = vpop.f32.mrf.mxu0
  %v417 = vadd.f32 %v320, %v416
  %v418 = vpop.f32.mrf.mxu0
  %v419 = vpop.f32.mrf.mxu0
  %v420 = vadd.f32 %v320, %v419
  %v421 = vpop.f32.mrf.mxu0
  %422 = vdwg.mxu0
  %v423 = vadd.f32 %v393, %v306
  %v424 = vadd.f32 %v396, %v307
  %v425 = vadd.f32 %v401, %v308
  %v426 = vadd.f32 %v404, %v309
  %v427 = vadd.f32 %v409, %v310
  %v428 = vadd.f32 %v412, %v311
  %v429 = vadd.f32 %v417, %v312
  %v430 = vadd.f32 %v420, %v313
  %v431 = vmax.f32 %v423, 0.0
  %v432 = vmax.f32 %v424, 0.0
  %v433 = vmax.f32 %v425, 0.0
  %v434 = vmax.f32 %v426, 0.0
  %v435 = vmax.f32 %v427, 0.0
  %v436 = vmax.f32 %v428, 0.0
  %v437 = vmax.f32 %v429, 0.0
  %v438 = vmax.f32 %v430, 0.0
  %v439 = vpack.c.bf16 %v211, %v211
  %441 = vrot.lane.b32.xlu0 %v211, 100
  %v442 = vpop.permute.xlu0 %441
  %v444 = vmul.f32 %v78, %v442
  %v445 = vmul.f32 %v79, %v442
  %v446 = vmul.f32 %v80, %v442
  %v447 = vmul.f32 %v81, %v442
  %v448 = vmul.f32 %v82, %v442
  %v449 = vmul.f32 %v83, %v442
  %v450 = vmul.f32 %v84, %v442
  %v451 = vmul.f32 %v85, %v442
  %v452 = vsel %vm341, %v444, 0.0
  %453 = vadd.xlane.f32.xlu0 %v452
  %v454 = vpop.xlane.xlu0 %453
  %v455 = vsel %vm341, %v445, 0.0
  %456 = vadd.xlane.f32.xlu0 %v455
  %v457 = vpop.xlane.xlu0 %456
  %v458 = vsel %vm341, %v446, 0.0
  %459 = vadd.xlane.f32.xlu0 %v458
  %v460 = vpop.xlane.xlu0 %459
  %v461 = vsel %vm341, %v447, 0.0
  %462 = vadd.xlane.f32.xlu0 %v461
  %v463 = vpop.xlane.xlu0 %462
  %v464 = vsel %vm341, %v448, 0.0
  %465 = vadd.xlane.f32.xlu0 %v464
  %v466 = vpop.xlane.xlu0 %465
  %v467 = vsel %vm341, %v449, 0.0
  %468 = vadd.xlane.f32.xlu0 %v467
  %v469 = vpop.xlane.xlu0 %468
  %v470 = vsel %vm341, %v450, 0.0
  %471 = vadd.xlane.f32.xlu0 %v470
  %v472 = vpop.xlane.xlu0 %471
  %v473 = vsel %vm341, %v451, 0.0
  %474 = vadd.xlane.f32.xlu0 %v473
  %v475 = vpop.xlane.xlu0 %474
  %477 = vrot.lane.b32.xlu0 %v439, 112
  %v478 = vpop.permute.xlu0 %477
  %v487 = vlaneseq
  %v488 = vand.u32 %v487, 127
  %v489 = vlaneseq
  %v490 = vshrl.u32 %v489, 7
  %v491 = vsub.s32 %v488, %v490
  %v492 = vrot.slane %v454, %v491
  %v493 = vlaneseq
  %v494 = vshrl.u32 %v493, 7
  %v495 = vsub.s32 %v488, %v494
  %v496 = vrot.slane %v457, %v495
  %v497 = vlaneseq
  %v498 = vshrl.u32 %v497, 7
  %v499 = vsub.s32 %v488, %v498
  %v500 = vrot.slane %v460, %v499
  %v501 = vlaneseq
  %v502 = vshrl.u32 %v501, 7
  %v503 = vsub.s32 %v488, %v502
  %v504 = vrot.slane %v463, %v503
  %v505 = vlaneseq
  %v506 = vshrl.u32 %v505, 7
  %v507 = vsub.s32 %v488, %v506
  %v508 = vrot.slane %v466, %v507
  %v509 = vlaneseq
  %v510 = vshrl.u32 %v509, 7
  %v511 = vsub.s32 %v488, %v510
  %v512 = vrot.slane %v469, %v511
  %v513 = vlaneseq
  %v514 = vshrl.u32 %v513, 7
  %v515 = vsub.s32 %v488, %v514
  %v516 = vrot.slane %v472, %v515
  %v517 = vlaneseq
  %v518 = vshrl.u32 %v517, 7
  %v519 = vsub.s32 %v488, %v518
  %v520 = vrot.slane %v475, %v519
  %vm521 = vcmask 1041409
  %v522 = vsel %vm521, %v496, %v492
  %vm523 = vcmask 1042434
  %v524 = vsel %vm523, %v500, %v522
  %vm525 = vcmask 1043459
  %v526 = vsel %vm525, %v504, %v524
  %vm527 = vcmask 1044484
  %v528 = vsel %vm527, %v508, %v526
  %vm529 = vcmask 1045509
  %v530 = vsel %vm529, %v512, %v528
  %vm531 = vcmask 1046534
  %v532 = vsel %vm531, %v516, %v530
  %vm533 = vcmask 1047559
  %v534 = vsel %vm533, %v520, %v532
  %v537 = vsel %vm107, %v478, 0
  %539 = vmatprep.subr.bf16.mxu0 0
  %540 = vmatpush1.bf16.xpose.msra.mxu0 0
  %541 = vmatprep.subr.bf16.mxu0 0
  %542 = vmatpush1.bf16.xpose.msra.mxu0 0
  %543 = vmatprep.subr.bf16.mxu0 0
  %544 = vmatpush1.bf16.xpose.msra.mxu0 0
  %545 = vmatprep.subr.bf16.mxu0 0
  %546 = vmatpush1.bf16.xpose.msra.mxu0 0
  %547 = vmatprep.subr.bf16.mxu0 0
  %548 = vmatpush1.bf16.xpose.msra.mxu0 0
  %549 = vmatprep.subr.bf16.mxu0 0
  %550 = vmatpush1.bf16.xpose.msra.mxu0 0
  %551 = vmatprep.subr.bf16.mxu0 0
  %552 = vmatpush1.bf16.xpose.msra.mxu0 0
  %553 = vmatprep.subr.bf16.mxu0 0
  %554 = vmatpush1.bf16.xpose.msra.mxu0 %v537
  %555 = vmatprep.subr.bf16.mxu0 0
  %556 = vmatpush2.bf16.xpose.msra.mxu0 0
  %557 = vmatprep.subr.bf16.mxu0 0
  %558 = vmatpush2.bf16.xpose.msra.mxu0 0
  %559 = vmatprep.subr.bf16.mxu0 0
  %560 = vmatpush2.bf16.xpose.msra.mxu0 0
  %561 = vmatprep.subr.bf16.mxu0 0
  %562 = vmatpush2.bf16.xpose.msra.mxu0 0
  %563 = vmatprep.subr.bf16.mxu0 0
  %564 = vmatpush2.bf16.xpose.msra.mxu0 0
  %565 = vmatprep.subr.bf16.mxu0 0
  %566 = vmatpush2.bf16.xpose.msra.mxu0 0
  %567 = vmatprep.subr.bf16.mxu0 0
  %568 = vmatpush2.bf16.xpose.msra.mxu0 0
  %569 = vmatprep.subr.bf16.mxu0 0
  %570 = vmatpush2.bf16.xpose.msra.mxu0 0
  %571 = vmatprep.mubr.bf16.mxu0 0
  %572 = vmatmul.mubr.bf16.gmra.mxu0 %v109
  %v573 = vpop.f32.mrf.mxu0
  %v574 = vadd.f32 %v534, %v573
  %v575 = vpop.f32.mrf.mxu0
  %v576 = vpop.f32.mrf.mxu0
  %v577 = vpop.f32.mrf.mxu0
  %578 = vdwg.mxu0
  %v579 = vsel %vm341, %v574, -inf
  %v580 = vrot.slane %v579, 4
  %v581 = vmax.f32 %v579, %v580
  %v582 = vrot.slane %v581, 2
  %v583 = vmax.f32 %v581, %v582
  %v584 = vrot.slane %v583, 1
  %v585 = vmax.f32 %v583, %v584
  %v586 = vsub.f32 %v574, %v585
  %v587 = vmul.f32 %v586, 1.442695
  %v588 = vpow.pop %v587
  %v589 = vsel %vm341, %v588, 0.0
  %v590 = vrot.slane %v589, 4
  %v591 = vadd.f32 %v589, %v590
  %v592 = vrot.slane %v591, 2
  %v593 = vadd.f32 %v591, %v592
  %v594 = vrot.slane %v593, 1
  %v595 = vadd.f32 %v593, %v594
  %v596 = vrcp.pop %v595
  %v597 = vmul.f32 %v588, %v596
  %v598 = vpack.c.bf16 %v597, %v597
  %599 = vxpose.xlu0.c.b16.start [1/8] %v60, 128
  %600 = vxpose.xlu0.c.b16.cont [2/8] 0, 128
  %601 = vxpose.xlu0.c.b16.cont [3/8] 0, 128
  %602 = vxpose.xlu0.c.b16.cont [4/8] 0, 128
  %603 = vxpose.xlu0.c.b16.cont [5/8] 0, 128
  %604 = vxpose.xlu0.c.b16.cont [6/8] 0, 128
  %605 = vxpose.xlu0.c.b16.cont [7/8] 0, 128
  %606 = vxpose.xlu0.c.b16.end [8/8] 0, 128
  %v607 = vpop.trf.xlu0
  %v608 = vpop.trf.xlu0
  %v609 = vpop.trf.xlu0
  %v610 = vpop.trf.xlu0
  %v611 = vpop.trf.xlu0
  %v612 = vpop.trf.xlu0
  %v613 = vpop.trf.xlu0
  %v614 = vpop.trf.xlu0
  %v616 = vsel %vm341, %v607, 0
  %v619 = vsel %vm354, %v598, 0
  %621 = vmatprep.subr.bf16.mxu0 0
  %622 = vmatpush1.bf16.msra.mxu0 0
  %623 = vmatprep.subr.bf16.mxu0 0
  %624 = vmatpush1.bf16.msra.mxu0 0
  %625 = vmatprep.subr.bf16.mxu0 0
  %626 = vmatpush1.bf16.msra.mxu0 0
  %627 = vmatprep.subr.bf16.mxu0 0
  %628 = vmatpush1.bf16.msra.mxu0 0
  %629 = vmatprep.subr.bf16.mxu0 0
  %630 = vmatpush1.bf16.msra.mxu0 0
  %631 = vmatprep.subr.bf16.mxu0 0
  %632 = vmatpush1.bf16.msra.mxu0 0
  %633 = vmatprep.subr.bf16.mxu0 0
  %634 = vmatpush1.bf16.msra.mxu0 0
  %635 = vmatprep.subr.bf16.mxu0 0
  %636 = vmatpush1.bf16.msra.mxu0 %v619
  %637 = vmatprep.subr.bf16.mxu0 0
  %638 = vmatpush2.bf16.msra.mxu0 0
  %639 = vmatprep.subr.bf16.mxu0 0
  %640 = vmatpush2.bf16.msra.mxu0 0
  %641 = vmatprep.subr.bf16.mxu0 0
  %642 = vmatpush2.bf16.msra.mxu0 0
  %643 = vmatprep.subr.bf16.mxu0 0
  %644 = vmatpush2.bf16.msra.mxu0 0
  %645 = vmatprep.subr.bf16.mxu0 0
  %646 = vmatpush2.bf16.msra.mxu0 0
  %647 = vmatprep.subr.bf16.mxu0 0
  %648 = vmatpush2.bf16.msra.mxu0 0
  %649 = vmatprep.subr.bf16.mxu0 0
  %650 = vmatpush2.bf16.msra.mxu0 0
  %651 = vmatprep.subr.bf16.mxu0 0
  %652 = vmatpush2.bf16.msra.mxu0 0
  %653 = vmatprep.mubr.bf16.mxu0 0
  %654 = vmatmul.mubr.bf16.gmra.mxu0 %v616
  %v655 = vpop.f32.mrf.mxu0
  %v656 = vadd.f32 0.0, %v655
  %v657 = vpop.f32.mrf.mxu0
  %v658 = vpop.f32.mrf.mxu0
  %v659 = vadd.f32 0.0, %v658
  %v660 = vpop.f32.mrf.mxu0
  %661 = vdwg.mxu0
  %v662 = vlaneseq
  %v663 = vshrl.u32 %v662, 7
  %v664 = vsub.s32 0, %v663
  %v665 = vrot.slane %v597, %v664
  %667 = vbcast.lane.b32.xlu0 %v665, 256
  %v668 = vpop.permute.xlu0 %667
  %v669 = vlaneseq
  %v670 = vshrl.u32 %v669, 7
  %v671 = vsub.s32 1, %v670
  %v672 = vrot.slane %v597, %v671
  %674 = vbcast.lane.b32.xlu0 %v672, 256
  %v675 = vpop.permute.xlu0 %674
  %v676 = vlaneseq
  %v677 = vshrl.u32 %v676, 7
  %v678 = vsub.s32 2, %v677
  %v679 = vrot.slane %v597, %v678
  %681 = vbcast.lane.b32.xlu0 %v679, 256
  %v682 = vpop.permute.xlu0 %681
  %v683 = vlaneseq
  %v684 = vshrl.u32 %v683, 7
  %v685 = vsub.s32 3, %v684
  %v686 = vrot.slane %v597, %v685
  %688 = vbcast.lane.b32.xlu0 %v686, 256
  %v689 = vpop.permute.xlu0 %688
  %v690 = vlaneseq
  %v691 = vshrl.u32 %v690, 7
  %v692 = vsub.s32 4, %v691
  %v693 = vrot.slane %v597, %v692
  %695 = vbcast.lane.b32.xlu0 %v693, 256
  %v696 = vpop.permute.xlu0 %695
  %v697 = vlaneseq
  %v698 = vshrl.u32 %v697, 7
  %v699 = vsub.s32 5, %v698
  %v700 = vrot.slane %v597, %v699
  %702 = vbcast.lane.b32.xlu0 %v700, 256
  %v703 = vpop.permute.xlu0 %702
  %v704 = vlaneseq
  %v705 = vshrl.u32 %v704, 7
  %v706 = vsub.s32 6, %v705
  %v707 = vrot.slane %v597, %v706
  %709 = vbcast.lane.b32.xlu0 %v707, 256
  %v710 = vpop.permute.xlu0 %709
  %v711 = vlaneseq
  %v712 = vshrl.u32 %v711, 7
  %v713 = vsub.s32 7, %v712
  %v714 = vrot.slane %v597, %v713
  %716 = vbcast.lane.b32.xlu0 %v714, 256
  %v717 = vpop.permute.xlu0 %716
  %v718 = vmul.f32 %v78, %v668
  %v719 = vmul.f32 %v79, %v675
  %v720 = vmul.f32 %v80, %v682
  %v721 = vmul.f32 %v81, %v689
  %v722 = vmul.f32 %v82, %v696
  %v723 = vmul.f32 %v83, %v703
  %v724 = vmul.f32 %v84, %v710
  %v725 = vmul.f32 %v85, %v717
  %v726 = vsel %vm341, %v718, 0.0
  %v727 = vsel %vm341, %v719, 0.0
  %v728 = vadd.f32 %v726, %v727
  %v729 = vsel %vm341, %v720, 0.0
  %v730 = vadd.f32 %v728, %v729
  %v731 = vsel %vm341, %v721, 0.0
  %v732 = vadd.f32 %v730, %v731
  %v733 = vsel %vm341, %v722, 0.0
  %v734 = vadd.f32 %v732, %v733
  %v735 = vsel %vm341, %v723, 0.0
  %v736 = vadd.f32 %v734, %v735
  %v737 = vsel %vm341, %v724, 0.0
  %v738 = vadd.f32 %v736, %v737
  %v739 = vsel %vm341, %v725, 0.0
  %v740 = vadd.f32 %v738, %v739
  %v741 = vpack.c.bf16 %v150, %v150
  %742 = vrot.lane.b32.xlu0 %v269, 102
  %v743 = vpop.permute.xlu0 %742
  %744 = vrot.lane.b32.xlu0 %v273, 102
  %v745 = vpop.permute.xlu0 %744
  %746 = vrot.lane.b32.xlu0 %v277, 102
  %v747 = vpop.permute.xlu0 %746
  %748 = vrot.lane.b32.xlu0 %v281, 102
  %v749 = vpop.permute.xlu0 %748
  %750 = vrot.lane.b32.xlu0 %v285, 102
  %v751 = vpop.permute.xlu0 %750
  %752 = vrot.lane.b32.xlu0 %v289, 102
  %v753 = vpop.permute.xlu0 %752
  %754 = vrot.lane.b32.xlu0 %v293, 102
  %v755 = vpop.permute.xlu0 %754
  %756 = vrot.lane.b32.xlu0 %v297, 102
  %v757 = vpop.permute.xlu0 %756
  %v766 = vmul.f32 %v86, %v743
  %v767 = vmul.f32 %v87, %v745
  %v768 = vmul.f32 %v88, %v747
  %v769 = vmul.f32 %v89, %v749
  %v770 = vmul.f32 %v90, %v751
  %v771 = vmul.f32 %v91, %v753
  %v772 = vmul.f32 %v92, %v755
  %v773 = vmul.f32 %v93, %v757
  %v774 = vsel %vm341, %v766, 0.0
  %775 = vadd.xlane.f32.xlu0 %v774
  %v776 = vpop.xlane.xlu0 %775
  %v777 = vsel %vm341, %v767, 0.0
  %778 = vadd.xlane.f32.xlu0 %v777
  %v779 = vpop.xlane.xlu0 %778
  %v780 = vsel %vm341, %v768, 0.0
  %781 = vadd.xlane.f32.xlu0 %v780
  %v782 = vpop.xlane.xlu0 %781
  %v783 = vsel %vm341, %v769, 0.0
  %784 = vadd.xlane.f32.xlu0 %v783
  %v785 = vpop.xlane.xlu0 %784
  %v786 = vsel %vm341, %v770, 0.0
  %787 = vadd.xlane.f32.xlu0 %v786
  %v788 = vpop.xlane.xlu0 %787
  %v789 = vsel %vm341, %v771, 0.0
  %790 = vadd.xlane.f32.xlu0 %v789
  %v791 = vpop.xlane.xlu0 %790
  %v792 = vsel %vm341, %v772, 0.0
  %793 = vadd.xlane.f32.xlu0 %v792
  %v794 = vpop.xlane.xlu0 %793
  %v795 = vsel %vm341, %v773, 0.0
  %796 = vadd.xlane.f32.xlu0 %v795
  %v797 = vpop.xlane.xlu0 %796
  %799 = vrot.lane.b32.xlu0 %v741, 112
  %v800 = vpop.permute.xlu0 %799
  %v809 = vlaneseq
  %v810 = vshrl.u32 %v809, 7
  %v811 = vsub.s32 %v488, %v810
  %v812 = vrot.slane %v776, %v811
  %v813 = vlaneseq
  %v814 = vshrl.u32 %v813, 7
  %v815 = vsub.s32 %v488, %v814
  %v816 = vrot.slane %v779, %v815
  %v817 = vlaneseq
  %v818 = vshrl.u32 %v817, 7
  %v819 = vsub.s32 %v488, %v818
  %v820 = vrot.slane %v782, %v819
  %v821 = vlaneseq
  %v822 = vshrl.u32 %v821, 7
  %v823 = vsub.s32 %v488, %v822
  %v824 = vrot.slane %v785, %v823
  %v825 = vlaneseq
  %v826 = vshrl.u32 %v825, 7
  %v827 = vsub.s32 %v488, %v826
  %v828 = vrot.slane %v788, %v827
  %v829 = vlaneseq
  %v830 = vshrl.u32 %v829, 7
  %v831 = vsub.s32 %v488, %v830
  %v832 = vrot.slane %v791, %v831
  %v833 = vlaneseq
  %v834 = vshrl.u32 %v833, 7
  %v835 = vsub.s32 %v488, %v834
  %v836 = vrot.slane %v794, %v835
  %v837 = vlaneseq
  %v838 = vshrl.u32 %v837, 7
  %v839 = vsub.s32 %v488, %v838
  %v840 = vrot.slane %v797, %v839
  %v841 = vsel %vm521, %v816, %v812
  %v842 = vsel %vm523, %v820, %v841
  %v843 = vsel %vm525, %v824, %v842
  %v844 = vsel %vm527, %v828, %v843
  %v845 = vsel %vm529, %v832, %v844
  %v846 = vsel %vm531, %v836, %v845
  %v847 = vsel %vm533, %v840, %v846
  %v850 = vsel %vm168, %v800, 0
  %852 = vmatprep.subr.bf16.mxu0 0
  %853 = vmatpush1.bf16.xpose.msra.mxu0 0
  %854 = vmatprep.subr.bf16.mxu0 0
  %855 = vmatpush1.bf16.xpose.msra.mxu0 0
  %856 = vmatprep.subr.bf16.mxu0 0
  %857 = vmatpush1.bf16.xpose.msra.mxu0 0
  %858 = vmatprep.subr.bf16.mxu0 0
  %859 = vmatpush1.bf16.xpose.msra.mxu0 0
  %860 = vmatprep.subr.bf16.mxu0 0
  %861 = vmatpush1.bf16.xpose.msra.mxu0 0
  %862 = vmatprep.subr.bf16.mxu0 0
  %863 = vmatpush1.bf16.xpose.msra.mxu0 0
  %864 = vmatprep.subr.bf16.mxu0 0
  %865 = vmatpush1.bf16.xpose.msra.mxu0 0
  %866 = vmatprep.subr.bf16.mxu0 0
  %867 = vmatpush1.bf16.xpose.msra.mxu0 %v170
  %868 = vmatprep.subr.bf16.mxu0 0
  %869 = vmatpush2.bf16.xpose.msra.mxu0 0
  %870 = vmatprep.subr.bf16.mxu0 0
  %871 = vmatpush2.bf16.xpose.msra.mxu0 0
  %872 = vmatprep.subr.bf16.mxu0 0
  %873 = vmatpush2.bf16.xpose.msra.mxu0 0
  %874 = vmatprep.subr.bf16.mxu0 0
  %875 = vmatpush2.bf16.xpose.msra.mxu0 0
  %876 = vmatprep.subr.bf16.mxu0 0
  %877 = vmatpush2.bf16.xpose.msra.mxu0 0
  %878 = vmatprep.subr.bf16.mxu0 0
  %879 = vmatpush2.bf16.xpose.msra.mxu0 0
  %880 = vmatprep.subr.bf16.mxu0 0
  %881 = vmatpush2.bf16.xpose.msra.mxu0 0
  %882 = vmatprep.subr.bf16.mxu0 0
  %883 = vmatpush2.bf16.xpose.msra.mxu0 0
  %884 = vmatprep.mubr.bf16.mxu0 0
  %885 = vmatmul.mubr.bf16.gmra.mxu0 %v850
  %v886 = vpop.f32.mrf.mxu0
  %v887 = vadd.f32 %v847, %v886
  %v888 = vpop.f32.mrf.mxu0
  %v889 = vpop.f32.mrf.mxu0
  %v890 = vpop.f32.mrf.mxu0
  %891 = vdwg.mxu0
  %v892 = vsel %vm341, %v887, -inf
  %893 = vmax.xlane.f32.xlu0 %v892
  %v894 = vpop.xlane.xlu0 %893
  %v895 = vsub.f32 %v887, %v894
  %v896 = vmul.f32 %v895, 1.442695
  %v897 = vpow.pop %v896
  %v898 = vsel %vm341, %v897, 0.0
  %899 = vadd.xlane.f32.xlu0 %v898
  %v900 = vpop.xlane.xlu0 %899
  %v901 = vrcp.pop %v900
  %v902 = vmul.f32 %v897, %v901
  %v903 = vpack.c.bf16 %v902, %v902
  %v905 = vsel %vm341, %v903, 0
  %v907 = vsel %vm354, %v61, 0
  %909 = vmatprep.subr.bf16.mxu0 0
  %910 = vmatpush1.bf16.msra.mxu0 0
  %911 = vmatprep.subr.bf16.mxu0 0
  %912 = vmatpush1.bf16.msra.mxu0 0
  %913 = vmatprep.subr.bf16.mxu0 0
  %914 = vmatpush1.bf16.msra.mxu0 0
  %915 = vmatprep.subr.bf16.mxu0 0
  %916 = vmatpush1.bf16.msra.mxu0 0
  %917 = vmatprep.subr.bf16.mxu0 0
  %918 = vmatpush1.bf16.msra.mxu0 0
  %919 = vmatprep.subr.bf16.mxu0 0
  %920 = vmatpush1.bf16.msra.mxu0 0
  %921 = vmatprep.subr.bf16.mxu0 0
  %922 = vmatpush1.bf16.msra.mxu0 0
  %923 = vmatprep.subr.bf16.mxu0 0
  %924 = vmatpush1.bf16.msra.mxu0 %v907
  %925 = vmatprep.subr.bf16.mxu0 0
  %926 = vmatpush2.bf16.msra.mxu0 0
  %927 = vmatprep.subr.bf16.mxu0 0
  %928 = vmatpush2.bf16.msra.mxu0 0
  %929 = vmatprep.subr.bf16.mxu0 0
  %930 = vmatpush2.bf16.msra.mxu0 0
  %931 = vmatprep.subr.bf16.mxu0 0
  %932 = vmatpush2.bf16.msra.mxu0 0
  %933 = vmatprep.subr.bf16.mxu0 0
  %934 = vmatpush2.bf16.msra.mxu0 0
  %935 = vmatprep.subr.bf16.mxu0 0
  %936 = vmatpush2.bf16.msra.mxu0 0
  %937 = vmatprep.subr.bf16.mxu0 0
  %938 = vmatpush2.bf16.msra.mxu0 0
  %939 = vmatprep.subr.bf16.mxu0 0
  %940 = vmatpush2.bf16.msra.mxu0 0
  %941 = vmatprep.mubr.bf16.mxu0 0
  %942 = vmatmul.mubr.bf16.gmra.mxu0 %v905
  %v943 = vpop.f32.mrf.mxu0
  %v944 = vadd.f32 0.0, %v943
  %v945 = vpop.f32.mrf.mxu0
  %v946 = vpop.f32.mrf.mxu0
  %v947 = vpop.f32.mrf.mxu0
  %948 = vdwg.mxu0
  %v949 = vlaneseq
  %v950 = vshrl.u32 %v949, 7
  %v951 = vsub.s32 0, %v950
  %v952 = vrot.slane %v902, %v951
  %954 = vbcast.lane.b32.xlu0 %v952, 256
  %v955 = vpop.permute.xlu0 %954
  %v956 = vlaneseq
  %v957 = vshrl.u32 %v956, 7
  %v958 = vsub.s32 1, %v957
  %v959 = vrot.slane %v902, %v958
  %961 = vbcast.lane.b32.xlu0 %v959, 256
  %v962 = vpop.permute.xlu0 %961
  %v963 = vlaneseq
  %v964 = vshrl.u32 %v963, 7
  %v965 = vsub.s32 2, %v964
  %v966 = vrot.slane %v902, %v965
  %968 = vbcast.lane.b32.xlu0 %v966, 256
  %v969 = vpop.permute.xlu0 %968
  %v970 = vlaneseq
  %v971 = vshrl.u32 %v970, 7
  %v972 = vsub.s32 3, %v971
  %v973 = vrot.slane %v902, %v972
  %975 = vbcast.lane.b32.xlu0 %v973, 256
  %v976 = vpop.permute.xlu0 %975
  %v977 = vlaneseq
  %v978 = vshrl.u32 %v977, 7
  %v979 = vsub.s32 4, %v978
  %v980 = vrot.slane %v902, %v979
  %982 = vbcast.lane.b32.xlu0 %v980, 256
  %v983 = vpop.permute.xlu0 %982
  %v984 = vlaneseq
  %v985 = vshrl.u32 %v984, 7
  %v986 = vsub.s32 5, %v985
  %v987 = vrot.slane %v902, %v986
  %989 = vbcast.lane.b32.xlu0 %v987, 256
  %v990 = vpop.permute.xlu0 %989
  %v991 = vlaneseq
  %v992 = vshrl.u32 %v991, 7
  %v993 = vsub.s32 6, %v992
  %v994 = vrot.slane %v902, %v993
  %996 = vbcast.lane.b32.xlu0 %v994, 256
  %v997 = vpop.permute.xlu0 %996
  %v998 = vlaneseq
  %v999 = vshrl.u32 %v998, 7
  %v1000 = vsub.s32 7, %v999
  %v1001 = vrot.slane %v902, %v1000
  %1003 = vbcast.lane.b32.xlu0 %v1001, 256
  %v1004 = vpop.permute.xlu0 %1003
  %v1005 = vmul.f32 %v86, %v955
  %v1006 = vmul.f32 %v87, %v962
  %v1007 = vmul.f32 %v88, %v969
  %v1008 = vmul.f32 %v89, %v976
  %v1009 = vmul.f32 %v90, %v983
  %v1010 = vmul.f32 %v91, %v990
  %v1011 = vmul.f32 %v92, %v997
  %v1012 = vmul.f32 %v93, %v1004
  %v1013 = vsel %vm341, %v1005, 0.0
  %v1014 = vrot.slane %v1013, 4
  %v1015 = vadd.f32 %v1013, %v1014
  %v1016 = vrot.slane %v1015, 2
  %v1017 = vadd.f32 %v1015, %v1016
  %v1018 = vrot.slane %v1017, 1
  %v1019 = vadd.f32 %v1017, %v1018
  %v1020 = vsel %vm341, %v1006, 0.0
  %v1021 = vrot.slane %v1020, 4
  %v1022 = vadd.f32 %v1020, %v1021
  %v1023 = vrot.slane %v1022, 2
  %v1024 = vadd.f32 %v1022, %v1023
  %v1025 = vrot.slane %v1024, 1
  %v1026 = vadd.f32 %v1024, %v1025
  %v1027 = vsel %vm341, %v1007, 0.0
  %v1028 = vrot.slane %v1027, 4
  %v1029 = vadd.f32 %v1027, %v1028
  %v1030 = vrot.slane %v1029, 2
  %v1031 = vadd.f32 %v1029, %v1030
  %v1032 = vrot.slane %v1031, 1
  %v1033 = vadd.f32 %v1031, %v1032
  %v1034 = vsel %vm341, %v1008, 0.0
  %v1035 = vrot.slane %v1034, 4
  %v1036 = vadd.f32 %v1034, %v1035
  %v1037 = vrot.slane %v1036, 2
  %v1038 = vadd.f32 %v1036, %v1037
  %v1039 = vrot.slane %v1038, 1
  %v1040 = vadd.f32 %v1038, %v1039
  %v1041 = vsel %vm341, %v1009, 0.0
  %v1042 = vrot.slane %v1041, 4
  %v1043 = vadd.f32 %v1041, %v1042
  %v1044 = vrot.slane %v1043, 2
  %v1045 = vadd.f32 %v1043, %v1044
  %v1046 = vrot.slane %v1045, 1
  %v1047 = vadd.f32 %v1045, %v1046
  %v1048 = vsel %vm341, %v1010, 0.0
  %v1049 = vrot.slane %v1048, 4
  %v1050 = vadd.f32 %v1048, %v1049
  %v1051 = vrot.slane %v1050, 2
  %v1052 = vadd.f32 %v1050, %v1051
  %v1053 = vrot.slane %v1052, 1
  %v1054 = vadd.f32 %v1052, %v1053
  %v1055 = vsel %vm341, %v1011, 0.0
  %v1056 = vrot.slane %v1055, 4
  %v1057 = vadd.f32 %v1055, %v1056
  %v1058 = vrot.slane %v1057, 2
  %v1059 = vadd.f32 %v1057, %v1058
  %v1060 = vrot.slane %v1059, 1
  %v1061 = vadd.f32 %v1059, %v1060
  %v1062 = vsel %vm341, %v1012, 0.0
  %v1063 = vrot.slane %v1062, 4
  %v1064 = vadd.f32 %v1062, %v1063
  %v1065 = vrot.slane %v1064, 2
  %v1066 = vadd.f32 %v1064, %v1065
  %v1067 = vrot.slane %v1066, 1
  %v1068 = vadd.f32 %v1066, %v1067
  %v1069 = vpack.c.bf16 %v944, %v944
  %v1070 = vld [vmem:[%s10] sm:$0xf]
  %v1071 = vld [vmem:[%s10 + $0x4] sm:$0x1]
  %v1072 = vpack.c.bf16 %v1019, %v1019
  %v1073 = vpack.c.bf16 %v1026, %v1026
  %v1074 = vpack.c.bf16 %v1033, %v1033
  %v1075 = vpack.c.bf16 %v1040, %v1040
  %v1076 = vpack.c.bf16 %v1047, %v1047
  %v1077 = vpack.c.bf16 %v1054, %v1054
  %v1078 = vpack.c.bf16 %v1061, %v1061
  %v1079 = vpack.c.bf16 %v1068, %v1068
  %v1080 = vld [vmem:[%s11] sm:$0xf]
  %v1089 = vunpack.c.l.b16 %v1072
  %v1090 = vunpack.c.l.b16 %v1073
  %v1091 = vunpack.c.l.b16 %v1074
  %v1092 = vunpack.c.l.b16 %v1075
  %v1093 = vunpack.c.l.b16 %v1076
  %v1094 = vunpack.c.l.b16 %v1077
  %v1095 = vunpack.c.l.b16 %v1078
  %v1096 = vunpack.c.l.b16 %v1079
  %v1097 = vsel %vm521, %v1090, %v1089
  %v1098 = vsel %vm523, %v1091, %v1097
  %v1099 = vsel %vm525, %v1092, %v1098
  %v1100 = vsel %vm527, %v1093, %v1099
  %v1101 = vsel %vm529, %v1094, %v1100
  %v1102 = vsel %vm531, %v1095, %v1101
  %v1103 = vsel %vm533, %v1096, %v1102
  %v1104 = vpack.c.b16 %v1103, %v1103
  %v1106 = vsel %vm341, %v1104, 0
  %v1109 = vsel %vm354, %v1080, 0
  %1111 = vmatprep.subr.bf16.mxu0 0
  %1112 = vmatpush1.bf16.msra.mxu0 0
  %1113 = vmatprep.subr.bf16.mxu0 0
  %1114 = vmatpush1.bf16.msra.mxu0 0
  %1115 = vmatprep.subr.bf16.mxu0 0
  %1116 = vmatpush1.bf16.msra.mxu0 0
  %1117 = vmatprep.subr.bf16.mxu0 0
  %1118 = vmatpush1.bf16.msra.mxu0 0
  %1119 = vmatprep.subr.bf16.mxu0 0
  %1120 = vmatpush1.bf16.msra.mxu0 0
  %1121 = vmatprep.subr.bf16.mxu0 0
  %1122 = vmatpush1.bf16.msra.mxu0 0
  %1123 = vmatprep.subr.bf16.mxu0 0
  %1124 = vmatpush1.bf16.msra.mxu0 0
  %1125 = vmatprep.subr.bf16.mxu0 0
  %1126 = vmatpush1.bf16.msra.mxu0 %v1109
  %1127 = vmatprep.subr.bf16.mxu0 0
  %1128 = vmatpush2.bf16.msra.mxu0 0
  %1129 = vmatprep.subr.bf16.mxu0 0
  %1130 = vmatpush2.bf16.msra.mxu0 0
  %1131 = vmatprep.subr.bf16.mxu0 0
  %1132 = vmatpush2.bf16.msra.mxu0 0
  %1133 = vmatprep.subr.bf16.mxu0 0
  %1134 = vmatpush2.bf16.msra.mxu0 0
  %1135 = vmatprep.subr.bf16.mxu0 0
  %1136 = vmatpush2.bf16.msra.mxu0 0
  %1137 = vmatprep.subr.bf16.mxu0 0
  %1138 = vmatpush2.bf16.msra.mxu0 0
  %1139 = vmatprep.subr.bf16.mxu0 0
  %1140 = vmatpush2.bf16.msra.mxu0 0
  %1141 = vmatprep.subr.bf16.mxu0 0
  %1142 = vmatpush2.bf16.msra.mxu0 0
  %1143 = vmatprep.mubr.bf16.mxu0 0
  %1144 = vmatmul.mubr.bf16.gmra.mxu0 %v1106
  %v1145 = vpop.f32.mrf.mxu0
  %v1146 = vadd.f32 0.0, %v1145
  %v1147 = vpop.f32.mrf.mxu0
  %v1148 = vpop.f32.mrf.mxu0
  %v1149 = vpop.f32.mrf.mxu0
  %1150 = vdwg.mxu0
  %v1153 = vunpack.c.l.b16 %v1070
  %v1154 = vunpack.c.l.b16 %v1071
  %v1155 = vpack.c.b16 %v1154, %v1153
  %v1157 = vsel %vm168, %v1069, 0
  %v1160 = vsel %vm172, %v1155, 0
  %1162 = vmatprep.subr.bf16.mxu0 0
  %1163 = vmatpush1.bf16.msra.mxu0 0
  %1164 = vmatprep.subr.bf16.mxu0 0
  %1165 = vmatpush1.bf16.msra.mxu0 0
  %1166 = vmatprep.subr.bf16.mxu0 0
  %1167 = vmatpush1.bf16.msra.mxu0 0
  %1168 = vmatprep.subr.bf16.mxu0 0
  %1169 = vmatpush1.bf16.msra.mxu0 0
  %1170 = vmatprep.subr.bf16.mxu0 0
  %1171 = vmatpush1.bf16.msra.mxu0 0
  %1172 = vmatprep.subr.bf16.mxu0 0
  %1173 = vmatpush1.bf16.msra.mxu0 0
  %1174 = vmatprep.subr.bf16.mxu0 0
  %1175 = vmatpush1.bf16.msra.mxu0 0
  %1176 = vmatprep.subr.bf16.mxu0 0
  %1177 = vmatpush1.bf16.msra.mxu0 %v1160
  %1178 = vmatprep.subr.bf16.mxu0 0
  %1179 = vmatpush2.bf16.msra.mxu0 0
  %1180 = vmatprep.subr.bf16.mxu0 0
  %1181 = vmatpush2.bf16.msra.mxu0 0
  %1182 = vmatprep.subr.bf16.mxu0 0
  %1183 = vmatpush2.bf16.msra.mxu0 0
  %1184 = vmatprep.subr.bf16.mxu0 0
  %1185 = vmatpush2.bf16.msra.mxu0 0
  %1186 = vmatprep.subr.bf16.mxu0 0
  %1187 = vmatpush2.bf16.msra.mxu0 0
  %1188 = vmatprep.subr.bf16.mxu0 0
  %1189 = vmatpush2.bf16.msra.mxu0 0
  %1190 = vmatprep.subr.bf16.mxu0 0
  %1191 = vmatpush2.bf16.msra.mxu0 0
  %1192 = vmatprep.subr.bf16.mxu0 0
  %1193 = vmatpush2.bf16.msra.mxu0 0
  %1194 = vmatprep.mubr.bf16.mxu0 0
  %1195 = vmatmul.mubr.bf16.gmra.mxu0 %v1157
  %v1196 = vpop.f32.mrf.mxu0
  %v1197 = vadd.f32 %v1146, %v1196
  %v1198 = vpop.f32.mrf.mxu0
  %v1199 = vpop.f32.mrf.mxu0
  %v1200 = vpop.f32.mrf.mxu0
  %1201 = vdwg.mxu0
  %v1202 = vld [vmem:[%s12] sm:$0x1]
  %v1203 = vunpack.c.l.bf16 %v1202
  %v1204 = vlaneseq
  %v1205 = vshrl.u32 %v1204, 7
  %v1206 = vsub.s32 0, %v1205
  %v1207 = vrot.slane %v1203, %v1206
  %v1208 = vadd.f32 %v1197, %v1207
  %v1209 = vmax.f32 %v1208, 0.0
  %v1210 = vpack.c.bf16 %v659, %v656
  %v1211 = vld [vmem:[%s13] sm:$0xf]
  %v1212 = vld [vmem:[%s13 + $0x4] sm:$0x3]
  %v1213 = vpack.c.bf16 %v740, %v740
  %v1214 = vld [vmem:[%s14] sm:$0xf]
  %v1216 = vsel %vm341, %v1213, 0
  %v1219 = vsel %vm354, %v1214, 0
  %1221 = vmatprep.subr.bf16.mxu0 0
  %1222 = vmatpush1.bf16.msra.mxu0 0
  %1223 = vmatprep.subr.bf16.mxu0 0
  %1224 = vmatpush1.bf16.msra.mxu0 0
  %1225 = vmatprep.subr.bf16.mxu0 0
  %1226 = vmatpush1.bf16.msra.mxu0 0
  %1227 = vmatprep.subr.bf16.mxu0 0
  %1228 = vmatpush1.bf16.msra.mxu0 0
  %1229 = vmatprep.subr.bf16.mxu0 0
  %1230 = vmatpush1.bf16.msra.mxu0 0
  %1231 = vmatprep.subr.bf16.mxu0 0
  %1232 = vmatpush1.bf16.msra.mxu0 0
  %1233 = vmatprep.subr.bf16.mxu0 0
  %1234 = vmatpush1.bf16.msra.mxu0 0
  %1235 = vmatprep.subr.bf16.mxu0 0
  %1236 = vmatpush1.bf16.msra.mxu0 %v1219
  %1237 = vmatprep.subr.bf16.mxu0 0
  %1238 = vmatpush2.bf16.msra.mxu0 0
  %1239 = vmatprep.subr.bf16.mxu0 0
  %1240 = vmatpush2.bf16.msra.mxu0 0
  %1241 = vmatprep.subr.bf16.mxu0 0
  %1242 = vmatpush2.bf16.msra.mxu0 0
  %1243 = vmatprep.subr.bf16.mxu0 0
  %1244 = vmatpush2.bf16.msra.mxu0 0
  %1245 = vmatprep.subr.bf16.mxu0 0
  %1246 = vmatpush2.bf16.msra.mxu0 0
  %1247 = vmatprep.subr.bf16.mxu0 0
  %1248 = vmatpush2.bf16.msra.mxu0 0
  %1249 = vmatprep.subr.bf16.mxu0 0
  %1250 = vmatpush2.bf16.msra.mxu0 0
  %1251 = vmatprep.subr.bf16.mxu0 0
  %1252 = vmatpush2.bf16.msra.mxu0 0
  %1253 = vmatprep.mubr.bf16.mxu0 0
  %1254 = vmatmul.mubr.bf16.gmra.mxu0 %v1216
  %v1255 = vpop.f32.mrf.mxu0
  %v1256 = vadd.f32 0.0, %v1255
  %v1257 = vpop.f32.mrf.mxu0
  %v1258 = vpop.f32.mrf.mxu0
  %v1259 = vpop.f32.mrf.mxu0
  %1260 = vdwg.mxu0
  %1261 = vxpose.xlu0.c.b16.start [1/8] %v1210, 128
  %1262 = vxpose.xlu0.c.b16.cont [2/8] 0, 128
  %1263 = vxpose.xlu0.c.b16.cont [3/8] 0, 128
  %1264 = vxpose.xlu0.c.b16.cont [4/8] 0, 128
  %1265 = vxpose.xlu0.c.b16.cont [5/8] 0, 128
  %1266 = vxpose.xlu0.c.b16.cont [6/8] 0, 128
  %1267 = vxpose.xlu0.c.b16.cont [7/8] 0, 128
  %1268 = vxpose.xlu0.c.b16.end [8/8] 0, 128
  %v1269 = vpop.trf.xlu0
  %v1270 = vpop.trf.xlu0
  %v1271 = vpop.trf.xlu0
  %v1272 = vpop.trf.xlu0
  %v1273 = vpop.trf.xlu0
  %v1274 = vpop.trf.xlu0
  %v1275 = vpop.trf.xlu0
  %v1276 = vpop.trf.xlu0
  %v1279 = vunpack.c.l.b16 %v1211
  %v1280 = vunpack.c.l.b16 %v1212
  %v1281 = vpack.c.b16 %v1280, %v1279
  %v1283 = vsel %vm107, %v1269, 0
  %v1286 = vsel %vm111, %v1281, 0
  %1288 = vmatprep.subr.bf16.mxu0 0
  %1289 = vmatpush1.bf16.msra.mxu0 0
  %1290 = vmatprep.subr.bf16.mxu0 0
  %1291 = vmatpush1.bf16.msra.mxu0 0
  %1292 = vmatprep.subr.bf16.mxu0 0
  %1293 = vmatpush1.bf16.msra.mxu0 0
  %1294 = vmatprep.subr.bf16.mxu0 0
  %1295 = vmatpush1.bf16.msra.mxu0 0
  %1296 = vmatprep.subr.bf16.mxu0 0
  %1297 = vmatpush1.bf16.msra.mxu0 0
  %1298 = vmatprep.subr.bf16.mxu0 0
  %1299 = vmatpush1.bf16.msra.mxu0 0
  %1300 = vmatprep.subr.bf16.mxu0 0
  %1301 = vmatpush1.bf16.msra.mxu0 0
  %1302 = vmatprep.subr.bf16.mxu0 0
  %1303 = vmatpush1.bf16.msra.mxu0 %v1286
  %1304 = vmatprep.subr.bf16.mxu0 0
  %1305 = vmatpush2.bf16.msra.mxu0 0
  %1306 = vmatprep.subr.bf16.mxu0 0
  %1307 = vmatpush2.bf16.msra.mxu0 0
  %1308 = vmatprep.subr.bf16.mxu0 0
  %1309 = vmatpush2.bf16.msra.mxu0 0
  %1310 = vmatprep.subr.bf16.mxu0 0
  %1311 = vmatpush2.bf16.msra.mxu0 0
  %1312 = vmatprep.subr.bf16.mxu0 0
  %1313 = vmatpush2.bf16.msra.mxu0 0
  %1314 = vmatprep.subr.bf16.mxu0 0
  %1315 = vmatpush2.bf16.msra.mxu0 0
  %1316 = vmatprep.subr.bf16.mxu0 0
  %1317 = vmatpush2.bf16.msra.mxu0 0
  %1318 = vmatprep.subr.bf16.mxu0 0
  %1319 = vmatpush2.bf16.msra.mxu0 0
  %1320 = vmatprep.mubr.bf16.mxu0 0
  %1321 = vmatmul.mubr.bf16.gmra.mxu0 %v1283
  %v1322 = vpop.f32.mrf.mxu0
  %v1323 = vadd.f32 %v1256, %v1322
  %v1324 = vpop.f32.mrf.mxu0
  %v1325 = vpop.f32.mrf.mxu0
  %v1326 = vpop.f32.mrf.mxu0
  %1327 = vdwg.mxu0
  %v1328 = vld [vmem:[%s15] sm:$0x1]
  %v1329 = vunpack.c.l.bf16 %v1328
  %v1330 = vlaneseq
  %v1331 = vshrl.u32 %v1330, 7
  %v1332 = vsub.s32 0, %v1331
  %v1333 = vrot.slane %v1329, %v1332
  %v1334 = vadd.f32 %v1323, %v1333
  %v1335 = vmax.f32 %v1334, 0.0
  %v1344 = vunpack.c.l.b16 %v70
  %v1345 = vunpack.c.l.b16 %v71
  %v1346 = vunpack.c.l.b16 %v72
  %v1347 = vunpack.c.l.b16 %v73
  %v1348 = vunpack.c.l.b16 %v74
  %v1349 = vunpack.c.l.b16 %v75
  %v1350 = vunpack.c.l.b16 %v76
  %v1351 = vunpack.c.l.b16 %v77
  %v1352 = vpack.c.b16 %v1345, %v1344
  %v1353 = vpack.c.b16 %v1347, %v1346
  %v1354 = vpack.c.b16 %v1349, %v1348
  %v1355 = vpack.c.b16 %v1351, %v1350
  %v1357 = vsel %vm341, %v1352, 0
  %v1360 = vsel %vm341, %v1353, 0
  %v1363 = vsel %vm341, %v1354, 0
  %v1366 = vsel %vm341, %v1355, 0
  %1368 = vmatprep.subr.bf16.mxu0 0
  %1369 = vmatpush1.bf16.msra.mxu0 0
  %1370 = vmatprep.subr.bf16.mxu0 0
  %1371 = vmatpush1.bf16.msra.mxu0 0
  %1372 = vmatprep.subr.bf16.mxu0 0
  %1373 = vmatpush1.bf16.msra.mxu0 0
  %1374 = vmatprep.subr.bf16.mxu0 0
  %1375 = vmatpush1.bf16.msra.mxu0 0
  %1376 = vmatprep.subr.bf16.mxu0 0
  %1377 = vmatpush1.bf16.msra.mxu0 0
  %1378 = vmatprep.subr.bf16.mxu0 0
  %1379 = vmatpush1.bf16.msra.mxu0 0
  %1380 = vmatprep.subr.bf16.mxu0 0
  %1381 = vmatpush1.bf16.msra.mxu0 0
  %1382 = vmatprep.subr.bf16.mxu0 0
  %1383 = vmatpush1.bf16.msra.mxu0 %v356
  %1384 = vmatprep.subr.bf16.mxu0 0
  %1385 = vmatpush2.bf16.msra.mxu0 0
  %1386 = vmatprep.subr.bf16.mxu0 0
  %1387 = vmatpush2.bf16.msra.mxu0 0
  %1388 = vmatprep.subr.bf16.mxu0 0
  %1389 = vmatpush2.bf16.msra.mxu0 0
  %1390 = vmatprep.subr.bf16.mxu0 0
  %1391 = vmatpush2.bf16.msra.mxu0 0
  %1392 = vmatprep.subr.bf16.mxu0 0
  %1393 = vmatpush2.bf16.msra.mxu0 0
  %1394 = vmatprep.subr.bf16.mxu0 0
  %1395 = vmatpush2.bf16.msra.mxu0 0
  %1396 = vmatprep.subr.bf16.mxu0 0
  %1397 = vmatpush2.bf16.msra.mxu0 0
  %1398 = vmatprep.subr.bf16.mxu0 0
  %1399 = vmatpush2.bf16.msra.mxu0 0
  %1400 = vmatprep.mubr.bf16.mxu0 0
  %1401 = vmatmul.mubr.bf16.gmra.mxu0 %v1357
  %v1402 = vpop.f32.mrf.mxu0
  %v1403 = vadd.f32 %v320, %v1402
  %v1404 = vpop.f32.mrf.mxu0
  %v1405 = vpop.f32.mrf.mxu0
  %v1406 = vadd.f32 %v320, %v1405
  %v1407 = vpop.f32.mrf.mxu0
  %1408 = vmatprep.mubr.bf16.mxu0 0
  %1409 = vmatmul.mubr.bf16.gmra.mxu0 %v1360
  %v1410 = vpop.f32.mrf.mxu0
  %v1411 = vadd.f32 %v320, %v1410
  %v1412 = vpop.f32.mrf.mxu0
  %v1413 = vpop.f32.mrf.mxu0
  %v1414 = vadd.f32 %v320, %v1413
  %v1415 = vpop.f32.mrf.mxu0
  %1416 = vmatprep.mubr.bf16.mxu0 0
  %1417 = vmatmul.mubr.bf16.gmra.mxu0 %v1363
  %v1418 = vpop.f32.mrf.mxu0
  %v1419 = vadd.f32 %v320, %v1418
  %v1420 = vpop.f32.mrf.mxu0
  %v1421 = vpop.f32.mrf.mxu0
  %v1422 = vadd.f32 %v320, %v1421
  %v1423 = vpop.f32.mrf.mxu0
  %1424 = vmatprep.mubr.bf16.mxu0 0
  %1425 = vmatmul.mubr.bf16.gmra.mxu0 %v1366
  %v1426 = vpop.f32.mrf.mxu0
  %v1427 = vadd.f32 %v320, %v1426
  %v1428 = vpop.f32.mrf.mxu0
  %v1429 = vpop.f32.mrf.mxu0
  %v1430 = vadd.f32 %v320, %v1429
  %v1431 = vpop.f32.mrf.mxu0
  %1432 = vdwg.mxu0
  %v1433 = vadd.f32 %v1403, %v306
  %v1434 = vadd.f32 %v1406, %v307
  %v1435 = vadd.f32 %v1411, %v308
  %v1436 = vadd.f32 %v1414, %v309
  %v1437 = vadd.f32 %v1419, %v310
  %v1438 = vadd.f32 %v1422, %v311
  %v1439 = vadd.f32 %v1427, %v312
  %v1440 = vadd.f32 %v1430, %v313
  %v1441 = vmax.f32 %v1433, 0.0
  %v1442 = vmax.f32 %v1434, 0.0
  %v1443 = vmax.f32 %v1435, 0.0
  %v1444 = vmax.f32 %v1436, 0.0
  %v1445 = vmax.f32 %v1437, 0.0
  %v1446 = vmax.f32 %v1438, 0.0
  %v1447 = vmax.f32 %v1439, 0.0
  %v1448 = vmax.f32 %v1440, 0.0
  %v1449 = vpack.c.bf16 %v432, %v431
  %v1450 = vpack.c.bf16 %v434, %v433
  %v1451 = vpack.c.bf16 %v436, %v435
  %v1452 = vpack.c.bf16 %v438, %v437
  %v1457 = vunpack.c.l.b16 %v1449
  %v1458 = vunpack.c.h.b16 %v1449
  %v1459 = vunpack.c.l.b16 %v1450
  %v1460 = vunpack.c.h.b16 %v1450
  %v1461 = vunpack.c.l.b16 %v1451
  %v1462 = vunpack.c.h.b16 %v1451
  %v1463 = vunpack.c.l.b16 %v1452
  %v1464 = vunpack.c.h.b16 %v1452
  %v1465 = vpack.c.b16 %v1457, %v1457
  %v1466 = vpack.c.b16 %v1458, %v1458
  %v1467 = vpack.c.b16 %v1459, %v1459
  %v1468 = vpack.c.b16 %v1460, %v1460
  %v1469 = vpack.c.b16 %v1461, %v1461
  %v1470 = vpack.c.b16 %v1462, %v1462
  %v1471 = vpack.c.b16 %v1463, %v1463
  %v1472 = vpack.c.b16 %v1464, %v1464
  %vm1481 = vcmask 125952
  %1482 = vst.msk [vmem:[%s16] sm:$0xf] %vm1481, %v1465
  %1483 = vst.msk [vmem:[%s16 + $0x4] sm:$0xf] %vm1481, %v1466
  %1484 = vst.msk [vmem:[%s16 + $0x8] sm:$0xf] %vm1481, %v1467
  %1485 = vst.msk [vmem:[%s16 + $0xc] sm:$0xf] %vm1481, %v1468
  %1486 = vst.msk [vmem:[%s16 + $0x10] sm:$0xf] %vm1481, %v1469
  %1487 = vst.msk [vmem:[%s16 + $0x14] sm:$0xf] %vm1481, %v1470
  %1488 = vst.msk [vmem:[%s16 + $0x18] sm:$0xf] %vm1481, %v1471
  %1489 = vst.msk [vmem:[%s16 + $0x1c] sm:$0xf] %vm1481, %v1472
  %v1490 = vpack.c.bf16 %v1442, %v1441
  %v1491 = vpack.c.bf16 %v1444, %v1443
  %v1492 = vpack.c.bf16 %v1446, %v1445
  %v1493 = vpack.c.bf16 %v1448, %v1447
  %v1498 = vunpack.c.l.b16 %v1490
  %v1499 = vunpack.c.h.b16 %v1490
  %v1500 = vunpack.c.l.b16 %v1491
  %v1501 = vunpack.c.h.b16 %v1491
  %v1502 = vunpack.c.l.b16 %v1492
  %v1503 = vunpack.c.h.b16 %v1492
  %v1504 = vunpack.c.l.b16 %v1493
  %v1505 = vunpack.c.h.b16 %v1493
  %v1506 = vpack.c.b16 %v1498, %v1498
  %v1507 = vpack.c.b16 %v1499, %v1499
  %v1508 = vpack.c.b16 %v1500, %v1500
  %v1509 = vpack.c.b16 %v1501, %v1501
  %v1510 = vpack.c.b16 %v1502, %v1502
  %v1511 = vpack.c.b16 %v1503, %v1503
  %v1512 = vpack.c.b16 %v1504, %v1504
  %v1513 = vpack.c.b16 %v1505, %v1505
  %1522 = vst.msk [vmem:[%s17] sm:$0xf] %vm1481, %v1506
  %1523 = vst.msk [vmem:[%s17 + $0x4] sm:$0xf] %vm1481, %v1507
  %1524 = vst.msk [vmem:[%s17 + $0x8] sm:$0xf] %vm1481, %v1508
  %1525 = vst.msk [vmem:[%s17 + $0xc] sm:$0xf] %vm1481, %v1509
  %1526 = vst.msk [vmem:[%s17 + $0x10] sm:$0xf] %vm1481, %v1510
  %1527 = vst.msk [vmem:[%s17 + $0x14] sm:$0xf] %vm1481, %v1511
  %1528 = vst.msk [vmem:[%s17 + $0x18] sm:$0xf] %vm1481, %v1512
  %1529 = vst.msk [vmem:[%s17 + $0x1c] sm:$0xf] %vm1481, %v1513
  %v1530 = vunpack.c.l.b16 %v741
  %v1531 = vpack.c.b16 %v1530, %v1530
  %1532 = vrot.lane.b32.xlu0 %v1531, 94
  %v1533 = vpop.permute.xlu0 %1532
  %vm1535 = vcmask 60416
  %1536 = vst.msk [vmem:[%s18] sm:$0xf] %vm1535, %v1533
  %v1537 = vpack.c.bf16 %v1209, %v1209
  %1538 = vst.msk [vmem:[%s19] sm:$0xf] %vm1535, %v1537
  %v1539 = vunpack.c.l.b16 %v439
  %v1540 = vpack.c.b16 %v1539, %v1539
  %1541 = vrot.lane.b32.xlu0 %v1540, 92
  %v1542 = vpop.permute.xlu0 %1541
  %1544 = vst.msk [vmem:[%s20] sm:$0xf] %vm1535, %v1542
  %v1545 = vpack.c.bf16 %v1335, %v1335
  %1546 = vst.msk [vmem:[%s21] sm:$0xf] %vm1535, %v1545
  // Predicated region
  $region66: #{gas_forward_pallas.2} parent=0 // pred_check
    _
  $region67: #{gas_forward_pallas.2} parent=0 // pred_check_branch
    %1548 = sbr.rel (0) target = $region69
  $region68: #{gas_forward_pallas.2} parent=0 // pred_region
    _
  $region69: #{gas_forward_pallas.2} parent=0 // pred_fallthru
    _
  // Predicated region
  $region70: #{gas_forward_pallas.2} parent=0 // pred_check
    _
  $region71: #{gas_forward_pallas.2} parent=0 // pred_check_branch
    %1550 = sbr.rel (0) target = $region73
  $region72: #{gas_forward_pallas.2} parent=0 // pred_region
    _
  $region73: #{gas_forward_pallas.2} parent=0 // pred_fallthru
    _
  // Predicated region
  $region74: #{gas_forward_pallas.2} parent=0 // pred_check
    _
  $region75: #{gas_forward_pallas.2} parent=0 // pred_check_branch
    %1552 = sbr.rel (0) target = $region77
  $region76: #{gas_forward_pallas.2} parent=0 // pred_region
    _
  $region77: #{gas_forward_pallas.2} parent=0 // pred_fallthru
    _
  // Predicated region
  $region78: #{gas_forward_pallas.2} parent=0 // pred_check
    _
  $region79: #{gas_forward_pallas.2} parent=0 // pred_check_branch
    %1554 = sbr.rel (0) target = $region81
  $region80: #{gas_forward_pallas.2} parent=0 // pred_region
    _
  $region81: #{gas_forward_pallas.2} parent=0 // pred_fallthru
    _
  // Predicated region
  $region82: #{gas_forward_pallas.2} parent=0 // pred_check
    _
  $region83: #{gas_forward_pallas.2} parent=0 // pred_check_branch
    %1556 = sbr.rel (0) target = $region85
  $region84: #{gas_forward_pallas.2} parent=0 // pred_region
    _
  $region85: #{gas_forward_pallas.2} parent=0 // pred_fallthru
    _
  // Predicated region
  $region86: #{gas_forward_pallas.2} parent=0 // pred_check
    _
  $region87: #{gas_forward_pallas.2} parent=0 // pred_check_branch
    %1558 = sbr.rel (0) target = $region89
  $region88: #{gas_forward_pallas.2} parent=0 // pred_region
    _
  $region89: #{gas_forward_pallas.2} parent=0 // pred_fallthru
    _
  // Predicated region
  $region90: #{gas_forward_pallas.2} parent=0 // pred_check
    _
  $region91: #{gas_forward_pallas.2} parent=0 // pred_check_branch
    %1560 = sbr.rel (0) target = $region93
  $region92: #{gas_forward_pallas.2} parent=0 // pred_region
    _
  $region93: #{gas_forward_pallas.2} parent=0 // pred_fallthru
    _
  // Predicated region
  $region94: #{gas_forward_pallas.2} parent=0 // pred_check
    _
  $region95: #{gas_forward_pallas.2} parent=0 // pred_check_branch
    %1562 = sbr.rel (0) target = $region97
  $region96: #{gas_forward_pallas.2} parent=0 // pred_region
    _
  $region97: #{gas_forward_pallas.2} parent=0 // pred_fallthru
    _
  // Predicated region
  $region98: #{gas_forward_pallas.2} parent=0 // pred_check
    _
  $region99: #{gas_forward_pallas.2} parent=0 // pred_check_branch
    %1564 = sbr.rel (0) target = $region101
  $region100: #{gas_forward_pallas.2} parent=0 // pred_region
    _
  $region101: #{gas_forward_pallas.2} parent=0 // pred_fallthru
    _
  // Predicated region
  $region102: #{gas_forward_pallas.2} parent=0 // pred_check
    _
  $region103: #{gas_forward_pallas.2} parent=0 // pred_check_branch
    %1566 = sbr.rel (0) target = $region105
  $region104: #{gas_forward_pallas.2} parent=0 // pred_region
    _
  $region105: #{gas_forward_pallas.2} parent=0 // pred_fallthru
    _
  // Predicated region
  $region106: #{gas_forward_pallas.2} parent=0 // pred_check
    _
  $region107: #{gas_forward_pallas.2} parent=0 // pred_check_branch
    %1568 = sbr.rel (0) target = $region109
  $region108: #{gas_forward_pallas.2} parent=0 // pred_region
    _
  $region109: #{gas_forward_pallas.2} parent=0 // pred_fallthru
    _
  // Predicated region
  $region110: #{gas_forward_pallas.2} parent=0 // pred_check
    _
  $region111: #{gas_forward_pallas.2} parent=0 // pred_check_branch
    %1570 = sbr.rel (0) target = $region113
  $region112: #{gas_forward_pallas.2} parent=0 // pred_region
    _
  $region113: #{gas_forward_pallas.2} parent=0 // pred_fallthru
    _

// kernel: gas_forward_pallas.3
$region0: #{gas_forward_pallas.3}
  #allocation0 [shape = 'u32[]', space=smem, size = 0x4, offset = 0x4, fixed_abs, tag = 'smem constant byte address 0x4 - core index']
  #allocation1 [shape = 'u32[144,128]{1,0:T(1,128)}', space=vmem, size = 0x12000, scoped, tag = 'internal scratch']
  %s0 = inlined_call_operand.vmem [shape: bf16[64,16], index: 0, kind: input, shape index: {}]
  %s1 = inlined_call_operand.vmem [shape: bf16[64,16], index: 1, kind: input, shape index: {}]
  %s2 = inlined_call_operand.vmem [shape: bf16[8,16], index: 2, kind: input, shape index: {}]
  %s3 = inlined_call_operand.vmem [shape: bf16[8,16], index: 3, kind: input, shape index: {}]
  %s4 = inlined_call_operand.vmem [shape: bf16[16,56], index: 4, kind: input, shape index: {}]
  %s5 = inlined_call_operand.vmem [shape: bf16[1,56], index: 5, kind: input, shape index: {}]
  %s6 = inlined_call_operand.vmem [shape: bf16[16,56], index: 6, kind: input, shape index: {}]
  %s7 = inlined_call_operand.vmem [shape: bf16[1,56], index: 7, kind: input, shape index: {}]
  %s8 = inlined_call_operand.vmem [shape: bf16[16,16], index: 8, kind: input, shape index: {}]
  %s9 = inlined_call_operand.vmem [shape: bf16[1,16], index: 9, kind: input, shape index: {}]
  %s10 = inlined_call_operand.vmem [shape: bf16[16,8], index: 10, kind: input, shape index: {}]
  %s11 = inlined_call_operand.vmem [shape: bf16[16,8], index: 11, kind: input, shape index: {}]
  %s12 = inlined_call_operand.vmem [shape: bf16[1,8], index: 12, kind: input, shape index: {}]
  %s13 = inlined_call_operand.vmem [shape: bf16[16,8], index: 13, kind: input, shape index: {}]
  %s14 = inlined_call_operand.vmem [shape: bf16[16,8], index: 14, kind: input, shape index: {}]
  %s15 = inlined_call_operand.vmem [shape: bf16[1,8], index: 15, kind: input, shape index: {}]
  %s16 = inlined_call_operand.vmem [shape: bf16[16,2], index: 16, kind: input, shape index: {}]
  %s17 = inlined_call_operand.vmem [shape: bf16[8,2], index: 17, kind: input, shape index: {}]
  %s18 = inlined_call_operand.vmem [shape: bf16[8,2], index: 18, kind: input, shape index: {}]
  %s19 = inlined_call_operand.vmem [shape: bf16[8,2], index: 19, kind: input, shape index: {}]
  %s20 = inlined_call_operand.vmem [shape: bf16[8,2], index: 20, kind: input, shape index: {}]
  %s21 = inlined_call_operand.vmem [shape: bf16[1,2], index: 21, kind: input, shape index: {}]
  %s22 = inlined_call_operand.vmem [shape: f32[64,2], index: 22, kind: output, shape index: {}]
  %s23 = sld [smem:[#allocation0]]
  $region98: #{gas_forward_pallas.3} parent=0
    _
  %s25 = ssub.s32 1, %s23
  %s26 = scalar_select 0, %s25, %s23
  // Predicated region
  $region2: #{gas_forward_pallas.3} parent=0 // pred_check
    _
  $region3: #{gas_forward_pallas.3} parent=0 // pred_check_branch
    %28 = sbr.rel (0) target = $region5
  $region4: #{gas_forward_pallas.3} parent=0 // pred_region
    _
  $region5: #{gas_forward_pallas.3} parent=0 // pred_fallthru
    _
  // Predicated region
  $region6: #{gas_forward_pallas.3} parent=0 // pred_check
    _
  $region7: #{gas_forward_pallas.3} parent=0 // pred_check_branch
    %30 = sbr.rel (0) target = $region9
  $region8: #{gas_forward_pallas.3} parent=0 // pred_region
    _
  $region9: #{gas_forward_pallas.3} parent=0 // pred_fallthru
    _
  // Predicated region
  $region10: #{gas_forward_pallas.3} parent=0 // pred_check
    _
  $region11: #{gas_forward_pallas.3} parent=0 // pred_check_branch
    %32 = sbr.rel (0) target = $region13
  $region12: #{gas_forward_pallas.3} parent=0 // pred_region
    _
  $region13: #{gas_forward_pallas.3} parent=0 // pred_fallthru
    _
  // Predicated region
  $region14: #{gas_forward_pallas.3} parent=0 // pred_check
    _
  $region15: #{gas_forward_pallas.3} parent=0 // pred_check_branch
    %34 = sbr.rel (0) target = $region17
  $region16: #{gas_forward_pallas.3} parent=0 // pred_region
    _
  $region17: #{gas_forward_pallas.3} parent=0 // pred_fallthru
    _
  // Predicated region
  $region18: #{gas_forward_pallas.3} parent=0 // pred_check
    _
  $region19: #{gas_forward_pallas.3} parent=0 // pred_check_branch
    %36 = sbr.rel (0) target = $region21
  $region20: #{gas_forward_pallas.3} parent=0 // pred_region
    _
  $region21: #{gas_forward_pallas.3} parent=0 // pred_fallthru
    _
  // Predicated region
  $region22: #{gas_forward_pallas.3} parent=0 // pred_check
    _
  $region23: #{gas_forward_pallas.3} parent=0 // pred_check_branch
    %38 = sbr.rel (0) target = $region25
  $region24: #{gas_forward_pallas.3} parent=0 // pred_region
    _
  $region25: #{gas_forward_pallas.3} parent=0 // pred_fallthru
    _
  // Predicated region
  $region26: #{gas_forward_pallas.3} parent=0 // pred_check
    _
  $region27: #{gas_forward_pallas.3} parent=0 // pred_check_branch
    %40 = sbr.rel (0) target = $region29
  $region28: #{gas_forward_pallas.3} parent=0 // pred_region
    _
  $region29: #{gas_forward_pallas.3} parent=0 // pred_fallthru
    _
  // Predicated region
  $region30: #{gas_forward_pallas.3} parent=0 // pred_check
    _
  $region31: #{gas_forward_pallas.3} parent=0 // pred_check_branch
    %42 = sbr.rel (0) target = $region33
  $region32: #{gas_forward_pallas.3} parent=0 // pred_region
    _
  $region33: #{gas_forward_pallas.3} parent=0 // pred_fallthru
    _
  // Predicated region
  $region34: #{gas_forward_pallas.3} parent=0 // pred_check
    _
  $region35: #{gas_forward_pallas.3} parent=0 // pred_check_branch
    %44 = sbr.rel (0) target = $region37
  $region36: #{gas_forward_pallas.3} parent=0 // pred_region
    _
  $region37: #{gas_forward_pallas.3} parent=0 // pred_fallthru
    _
  // Predicated region
  $region38: #{gas_forward_pallas.3} parent=0 // pred_check
    _
  $region39: #{gas_forward_pallas.3} parent=0 // pred_check_branch
    %46 = sbr.rel (0) target = $region41
  $region40: #{gas_forward_pallas.3} parent=0 // pred_region
    _
  $region41: #{gas_forward_pallas.3} parent=0 // pred_fallthru
    _
  // Predicated region
  $region42: #{gas_forward_pallas.3} parent=0 // pred_check
    _
  $region43: #{gas_forward_pallas.3} parent=0 // pred_check_branch
    %48 = sbr.rel (0) target = $region45
  $region44: #{gas_forward_pallas.3} parent=0 // pred_region
    _
  $region45: #{gas_forward_pallas.3} parent=0 // pred_fallthru
    _
  // Predicated region
  $region46: #{gas_forward_pallas.3} parent=0 // pred_check
    _
  $region47: #{gas_forward_pallas.3} parent=0 // pred_check_branch
    %50 = sbr.rel (0) target = $region49
  $region48: #{gas_forward_pallas.3} parent=0 // pred_region
    _
  $region49: #{gas_forward_pallas.3} parent=0 // pred_fallthru
    _
  // Predicated region
  $region50: #{gas_forward_pallas.3} parent=0 // pred_check
    _
  $region51: #{gas_forward_pallas.3} parent=0 // pred_check_branch
    %52 = sbr.rel (0) target = $region53
  $region52: #{gas_forward_pallas.3} parent=0 // pred_region
    _
  $region53: #{gas_forward_pallas.3} parent=0 // pred_fallthru
    _
  // Predicated region
  $region54: #{gas_forward_pallas.3} parent=0 // pred_check
    _
  $region55: #{gas_forward_pallas.3} parent=0 // pred_check_branch
    %54 = sbr.rel (0) target = $region57
  $region56: #{gas_forward_pallas.3} parent=0 // pred_region
    _
  $region57: #{gas_forward_pallas.3} parent=0 // pred_fallthru
    _
  // Predicated region
  $region58: #{gas_forward_pallas.3} parent=0 // pred_check
    _
  $region59: #{gas_forward_pallas.3} parent=0 // pred_check_branch
    %56 = sbr.rel (0) target = $region61
  $region60: #{gas_forward_pallas.3} parent=0 // pred_region
    _
  $region61: #{gas_forward_pallas.3} parent=0 // pred_fallthru
    _
  // Predicated region
  $region62: #{gas_forward_pallas.3} parent=0 // pred_check
    _
  $region63: #{gas_forward_pallas.3} parent=0 // pred_check_branch
    %58 = sbr.rel (0) target = $region65
  $region64: #{gas_forward_pallas.3} parent=0 // pred_region
    _
  $region65: #{gas_forward_pallas.3} parent=0 // pred_fallthru
    _
  // Predicated region
  $region66: #{gas_forward_pallas.3} parent=0 // pred_check
    _
  $region67: #{gas_forward_pallas.3} parent=0 // pred_check_branch
    %60 = sbr.rel (0) target = $region69
  $region68: #{gas_forward_pallas.3} parent=0 // pred_region
    _
  $region69: #{gas_forward_pallas.3} parent=0 // pred_fallthru
    _
  // Predicated region
  $region70: #{gas_forward_pallas.3} parent=0 // pred_check
    _
  $region71: #{gas_forward_pallas.3} parent=0 // pred_check_branch
    %62 = sbr.rel (0) target = $region73
  $region72: #{gas_forward_pallas.3} parent=0 // pred_region
    _
  $region73: #{gas_forward_pallas.3} parent=0 // pred_fallthru
    _
  // Predicated region
  $region74: #{gas_forward_pallas.3} parent=0 // pred_check
    _
  $region75: #{gas_forward_pallas.3} parent=0 // pred_check_branch
    %64 = sbr.rel (0) target = $region77
  $region76: #{gas_forward_pallas.3} parent=0 // pred_region
    _
  $region77: #{gas_forward_pallas.3} parent=0 // pred_fallthru
    _
  // Predicated region
  $region78: #{gas_forward_pallas.3} parent=0 // pred_check
    _
  $region79: #{gas_forward_pallas.3} parent=0 // pred_check_branch
    %66 = sbr.rel (0) target = $region81
  $region80: #{gas_forward_pallas.3} parent=0 // pred_region
    _
  $region81: #{gas_forward_pallas.3} parent=0 // pred_fallthru
    _
  // Predicated region
  $region82: #{gas_forward_pallas.3} parent=0 // pred_check
    _
  $region83: #{gas_forward_pallas.3} parent=0 // pred_check_branch
    %68 = sbr.rel (0) target = $region85
  $region84: #{gas_forward_pallas.3} parent=0 // pred_region
    _
  $region85: #{gas_forward_pallas.3} parent=0 // pred_fallthru
    _
  // Predicated region
  $region86: #{gas_forward_pallas.3} parent=0 // pred_check
    _
  $region87: #{gas_forward_pallas.3} parent=0 // pred_check_branch
    %70 = sbr.rel (0) target = $region89
  $region88: #{gas_forward_pallas.3} parent=0 // pred_region
    _
  $region89: #{gas_forward_pallas.3} parent=0 // pred_fallthru
    _
  %v72 = vld [vmem:[%s2] sm:$0xf]
  %v73 = vld [vmem:[%s3] sm:$0xf]
  %v74 = vld [vmem:[%s0] sm:$0xf]
  %v75 = vld [vmem:[%s0 + $0x4] sm:$0xf]
  %v76 = vld [vmem:[%s0 + $0x8] sm:$0xf]
  %v77 = vld [vmem:[%s0 + $0xc] sm:$0xf]
  %v78 = vld [vmem:[%s0 + $0x10] sm:$0xf]
  %v79 = vld [vmem:[%s0 + $0x14] sm:$0xf]
  %v80 = vld [vmem:[%s0 + $0x18] sm:$0xf]
  %v81 = vld [vmem:[%s0 + $0x1c] sm:$0xf]
  %v82 = vld [vmem:[%s1] sm:$0xf]
  %v83 = vld [vmem:[%s1 + $0x4] sm:$0xf]
  %v84 = vld [vmem:[%s1 + $0x8] sm:$0xf]
  %v85 = vld [vmem:[%s1 + $0xc] sm:$0xf]
  %v86 = vld [vmem:[%s1 + $0x10] sm:$0xf]
  %v87 = vld [vmem:[%s1 + $0x14] sm:$0xf]
  %v88 = vld [vmem:[%s1 + $0x18] sm:$0xf]
  %v89 = vld [vmem:[%s1 + $0x1c] sm:$0xf]
  %v90 = vunpack.c.l.bf16 %v74
  %v91 = vunpack.c.l.bf16 %v75
  %v92 = vunpack.c.l.bf16 %v76
  %v93 = vunpack.c.l.bf16 %v77
  %v94 = vunpack.c.l.bf16 %v78
  %v95 = vunpack.c.l.bf16 %v79
  %v96 = vunpack.c.l.bf16 %v80
  %v97 = vunpack.c.l.bf16 %v81
  %v98 = vunpack.c.l.bf16 %v82
  %v99 = vunpack.c.l.bf16 %v83
  %v100 = vunpack.c.l.bf16 %v84
  %v101 = vunpack.c.l.bf16 %v85
  %v102 = vunpack.c.l.bf16 %v86
  %v103 = vunpack.c.l.bf16 %v87
  %v104 = vunpack.c.l.bf16 %v88
  %v105 = vunpack.c.l.bf16 %v89
  %v106 = vld [vmem:[%s4] sm:$0xf]
  %v107 = vld [vmem:[%s4 + $0x4] sm:$0xf]
  %v108 = vld [vmem:[%s5] sm:$0x1]
  %v109 = vunpack.c.l.bf16 %v108
  %v110 = vlaneseq
  %v111 = vshrl.u32 %v110, 7
  %v112 = vsub.s32 0, %v111
  %v113 = vrot.slane %v109, %v112
  %v116 = vunpack.c.l.b16 %v106
  %v117 = vunpack.c.l.b16 %v107
  %v118 = vpack.c.b16 %v117, %v116
  %vm120 = vcmask 130048
  %v122 = vsel %vm120, %v72, 0
  %124 = vmatprep.subr.bf16.mxu0 0
  %125 = vmatpush1.bf16.msra.mxu0 0
  %126 = vmatprep.subr.bf16.mxu0 0
  %127 = vmatpush1.bf16.msra.mxu0 0
  %128 = vmatprep.subr.bf16.mxu0 0
  %129 = vmatpush1.bf16.msra.mxu0 0
  %130 = vmatprep.subr.bf16.mxu0 0
  %131 = vmatpush1.bf16.msra.mxu0 0
  %132 = vmatprep.subr.bf16.mxu0 0
  %133 = vmatpush1.bf16.msra.mxu0 0
  %134 = vmatprep.subr.bf16.mxu0 0
  %135 = vmatpush1.bf16.msra.mxu0 0
  %136 = vmatprep.subr.bf16.mxu0 0
  %137 = vmatpush1.bf16.msra.mxu0 0
  %138 = vmatprep.subr.bf16.mxu0 0
  %139 = vmatpush1.bf16.msra.mxu0 %v118
  %140 = vmatprep.subr.bf16.mxu0 0
  %141 = vmatpush2.bf16.msra.mxu0 0
  %142 = vmatprep.subr.bf16.mxu0 0
  %143 = vmatpush2.bf16.msra.mxu0 0
  %144 = vmatprep.subr.bf16.mxu0 0
  %145 = vmatpush2.bf16.msra.mxu0 0
  %146 = vmatprep.subr.bf16.mxu0 0
  %147 = vmatpush2.bf16.msra.mxu0 0
  %148 = vmatprep.subr.bf16.mxu0 0
  %149 = vmatpush2.bf16.msra.mxu0 0
  %150 = vmatprep.subr.bf16.mxu0 0
  %151 = vmatpush2.bf16.msra.mxu0 0
  %152 = vmatprep.subr.bf16.mxu0 0
  %153 = vmatpush2.bf16.msra.mxu0 0
  %154 = vmatprep.subr.bf16.mxu0 0
  %155 = vmatpush2.bf16.msra.mxu0 0
  %156 = vmatprep.mubr.bf16.mxu0 0
  %157 = vmatmul.mubr.bf16.gmra.mxu0 %v122
  %v158 = vpop.f32.mrf.mxu0
  %v159 = vadd.f32 %v113, %v158
  %v160 = vpop.f32.mrf.mxu0
  %v161 = vpop.f32.mrf.mxu0
  %v162 = vpop.f32.mrf.mxu0
  %163 = vdwg.mxu0
  %v164 = vld [vmem:[%s6] sm:$0xf]
  %v165 = vld [vmem:[%s6 + $0x4] sm:$0xf]
  %v166 = vld [vmem:[%s7] sm:$0x1]
  %v167 = vunpack.c.l.bf16 %v166
  %v168 = vlaneseq
  %v169 = vshrl.u32 %v168, 7
  %v170 = vsub.s32 0, %v169
  %v171 = vrot.slane %v167, %v170
  %v174 = vunpack.c.l.b16 %v164
  %v175 = vunpack.c.l.b16 %v165
  %v176 = vpack.c.b16 %v175, %v174
  %v179 = vsel %vm120, %v73, 0
  %181 = vmatprep.subr.bf16.mxu0 0
  %182 = vmatpush1.bf16.msra.mxu0 0
  %183 = vmatprep.subr.bf16.mxu0 0
  %184 = vmatpush1.bf16.msra.mxu0 0
  %185 = vmatprep.subr.bf16.mxu0 0
  %186 = vmatpush1.bf16.msra.mxu0 0
  %187 = vmatprep.subr.bf16.mxu0 0
  %188 = vmatpush1.bf16.msra.mxu0 0
  %189 = vmatprep.subr.bf16.mxu0 0
  %190 = vmatpush1.bf16.msra.mxu0 0
  %191 = vmatprep.subr.bf16.mxu0 0
  %192 = vmatpush1.bf16.msra.mxu0 0
  %193 = vmatprep.subr.bf16.mxu0 0
  %194 = vmatpush1.bf16.msra.mxu0 0
  %195 = vmatprep.subr.bf16.mxu0 0
  %196 = vmatpush1.bf16.msra.mxu0 %v176
  %197 = vmatprep.subr.bf16.mxu0 0
  %198 = vmatpush2.bf16.msra.mxu0 0
  %199 = vmatprep.subr.bf16.mxu0 0
  %200 = vmatpush2.bf16.msra.mxu0 0
  %201 = vmatprep.subr.bf16.mxu0 0
  %202 = vmatpush2.bf16.msra.mxu0 0
  %203 = vmatprep.subr.bf16.mxu0 0
  %204 = vmatpush2.bf16.msra.mxu0 0
  %205 = vmatprep.subr.bf16.mxu0 0
  %206 = vmatpush2.bf16.msra.mxu0 0
  %207 = vmatprep.subr.bf16.mxu0 0
  %208 = vmatpush2.bf16.msra.mxu0 0
  %209 = vmatprep.subr.bf16.mxu0 0
  %210 = vmatpush2.bf16.msra.mxu0 0
  %211 = vmatprep.subr.bf16.mxu0 0
  %212 = vmatpush2.bf16.msra.mxu0 0
  %213 = vmatprep.mubr.bf16.mxu0 0
  %214 = vmatmul.mubr.bf16.gmra.mxu0 %v179
  %v215 = vpop.f32.mrf.mxu0
  %v216 = vadd.f32 %v171, %v215
  %v217 = vpop.f32.mrf.mxu0
  %v218 = vpop.f32.mrf.mxu0
  %v219 = vpop.f32.mrf.mxu0
  %220 = vdwg.mxu0
  %v222 = vcombine.high %v159, %v159
  %v224 = vunpack.c.l.s4 1966171168
  %v225 = vunpack.c.0.s8 %v224
  %v226 = vlaneseq
  %v227 = vshrl.u32 %v226, 7
  %v228 = vsub.s32 %v225, %v227
  %v229 = vrot.slane %v159, %v228
  %v231 = vunpack.c.l.s4 1966171168
  %v232 = vunpack.c.0.s8 %v231
  %v233 = vlaneseq
  %v234 = vshrl.u32 %v233, 7
  %v235 = vsub.s32 %v232, %v234
  %v236 = vrot.slane %v222, %v235
  %v237 = vcombine.high %v229, %v229
  %v238 = vcombine.high %v236, %v236
  %v240 = vunpack.c.l.s4 1966171168
  %v241 = vunpack.c.0.s8 %v240
  %v242 = vlaneseq
  %v243 = vshrl.u32 %v242, 7
  %v244 = vsub.s32 %v241, %v243
  %v245 = vrot.slane %v229, %v244
  %v247 = vunpack.c.l.s4 1966171168
  %v248 = vunpack.c.0.s8 %v247
  %v249 = vlaneseq
  %v250 = vshrl.u32 %v249, 7
  %v251 = vsub.s32 %v248, %v250
  %v252 = vrot.slane %v236, %v251
  %v254 = vunpack.c.l.s4 1966171168
  %v255 = vunpack.c.0.s8 %v254
  %v256 = vlaneseq
  %v257 = vshrl.u32 %v256, 7
  %v258 = vsub.s32 %v255, %v257
  %v259 = vrot.slane %v237, %v258
  %v261 = vunpack.c.l.s4 1966171168
  %v262 = vunpack.c.0.s8 %v261
  %v263 = vlaneseq
  %v264 = vshrl.u32 %v263, 7
  %v265 = vsub.s32 %v262, %v264
  %v266 = vrot.slane %v238, %v265
  %v267 = vcombine.high %v245, %v245
  %v268 = vcombine.high %v252, %v252
  %v269 = vcombine.high %v259, %v259
  %v270 = vcombine.high %v266, %v266
  %v271 = vlaneseq
  %v272 = vshrl.u32 %v271, 7
  %v273 = vsub.s32 0, %v272
  %v274 = vrot.slane %v245, %v273
  %v275 = vlaneseq
  %v276 = vshrl.u32 %v275, 7
  %v277 = vsub.s32 0, %v276
  %v278 = vrot.slane %v259, %v277
  %v279 = vlaneseq
  %v280 = vshrl.u32 %v279, 7
  %v281 = vsub.s32 0, %v280
  %v282 = vrot.slane %v267, %v281
  %v283 = vlaneseq
  %v284 = vshrl.u32 %v283, 7
  %v285 = vsub.s32 0, %v284
  %v286 = vrot.slane %v269, %v285
  %v287 = vlaneseq
  %v288 = vshrl.u32 %v287, 7
  %v289 = vsub.s32 0, %v288
  %v290 = vrot.slane %v252, %v289
  %v291 = vlaneseq
  %v292 = vshrl.u32 %v291, 7
  %v293 = vsub.s32 0, %v292
  %v294 = vrot.slane %v266, %v293
  %v295 = vlaneseq
  %v296 = vshrl.u32 %v295, 7
  %v297 = vsub.s32 0, %v296
  %v298 = vrot.slane %v268, %v297
  %v299 = vlaneseq
  %v300 = vshrl.u32 %v299, 7
  %v301 = vsub.s32 0, %v300
  %v302 = vrot.slane %v270, %v301
  %v311 = vadd.f32 %v274, %v216
  %v312 = vadd.f32 %v278, %v216
  %v313 = vadd.f32 %v282, %v216
  %v314 = vadd.f32 %v286, %v216
  %v315 = vadd.f32 %v290, %v216
  %v316 = vadd.f32 %v294, %v216
  %v317 = vadd.f32 %v298, %v216
  %v318 = vadd.f32 %v302, %v216
  %v319 = vld [vmem:[%s8] sm:$0xf]
  %v320 = vld [vmem:[%s8 + $0x4] sm:$0xf]
  %v321 = vld [vmem:[%s9] sm:$0x1]
  %v322 = vunpack.c.l.bf16 %v321
  %v323 = vlaneseq
  %v324 = vshrl.u32 %v323, 7
  %v325 = vsub.s32 0, %v324
  %v326 = vrot.slane %v322, %v325
  %v335 = vunpack.c.l.b16 %v74
  %v336 = vunpack.c.l.b16 %v75
  %v337 = vunpack.c.l.b16 %v76
  %v338 = vunpack.c.l.b16 %v77
  %v339 = vunpack.c.l.b16 %v78
  %v340 = vunpack.c.l.b16 %v79
  %v341 = vunpack.c.l.b16 %v80
  %v342 = vunpack.c.l.b16 %v81
  %v343 = vpack.c.b16 %v336, %v335
  %v344 = vpack.c.b16 %v338, %v337
  %v345 = vpack.c.b16 %v340, %v339
  %v346 = vpack.c.b16 %v342, %v341
  %v349 = vunpack.c.l.b16 %v319
  %v350 = vunpack.c.l.b16 %v320
  %v351 = vpack.c.b16 %v350, %v349
  %v354 = vsel %vm120, %v343, 0
  %v357 = vsel %vm120, %v344, 0
  %v360 = vsel %vm120, %v345, 0
  %v363 = vsel %vm120, %v346, 0
  %365 = vmatprep.subr.bf16.mxu0 0
  %366 = vmatpush1.bf16.msra.mxu0 0
  %367 = vmatprep.subr.bf16.mxu0 0
  %368 = vmatpush1.bf16.msra.mxu0 0
  %369 = vmatprep.subr.bf16.mxu0 0
  %370 = vmatpush1.bf16.msra.mxu0 0
  %371 = vmatprep.subr.bf16.mxu0 0
  %372 = vmatpush1.bf16.msra.mxu0 0
  %373 = vmatprep.subr.bf16.mxu0 0
  %374 = vmatpush1.bf16.msra.mxu0 0
  %375 = vmatprep.subr.bf16.mxu0 0
  %376 = vmatpush1.bf16.msra.mxu0 0
  %377 = vmatprep.subr.bf16.mxu0 0
  %378 = vmatpush1.bf16.msra.mxu0 0
  %379 = vmatprep.subr.bf16.mxu0 0
  %380 = vmatpush1.bf16.msra.mxu0 %v351
  %381 = vmatprep.subr.bf16.mxu0 0
  %382 = vmatpush2.bf16.msra.mxu0 0
  %383 = vmatprep.subr.bf16.mxu0 0
  %384 = vmatpush2.bf16.msra.mxu0 0
  %385 = vmatprep.subr.bf16.mxu0 0
  %386 = vmatpush2.bf16.msra.mxu0 0
  %387 = vmatprep.subr.bf16.mxu0 0
  %388 = vmatpush2.bf16.msra.mxu0 0
  %389 = vmatprep.subr.bf16.mxu0 0
  %390 = vmatpush2.bf16.msra.mxu0 0
  %391 = vmatprep.subr.bf16.mxu0 0
  %392 = vmatpush2.bf16.msra.mxu0 0
  %393 = vmatprep.subr.bf16.mxu0 0
  %394 = vmatpush2.bf16.msra.mxu0 0
  %395 = vmatprep.subr.bf16.mxu0 0
  %396 = vmatpush2.bf16.msra.mxu0 0
  %397 = vmatprep.mubr.bf16.mxu0 0
  %398 = vmatmul.mubr.bf16.gmra.mxu0 %v354
  %v399 = vpop.f32.mrf.mxu0
  %v400 = vadd.f32 %v326, %v399
  %v401 = vpop.f32.mrf.mxu0
  %v402 = vpop.f32.mrf.mxu0
  %v403 = vadd.f32 %v326, %v402
  %v404 = vpop.f32.mrf.mxu0
  %405 = vmatprep.mubr.bf16.mxu0 0
  %406 = vmatmul.mubr.bf16.gmra.mxu0 %v357
  %v407 = vpop.f32.mrf.mxu0
  %v408 = vadd.f32 %v326, %v407
  %v409 = vpop.f32.mrf.mxu0
  %v410 = vpop.f32.mrf.mxu0
  %v411 = vadd.f32 %v326, %v410
  %v412 = vpop.f32.mrf.mxu0
  %413 = vmatprep.mubr.bf16.mxu0 0
  %414 = vmatmul.mubr.bf16.gmra.mxu0 %v360
  %v415 = vpop.f32.mrf.mxu0
  %v416 = vadd.f32 %v326, %v415
  %v417 = vpop.f32.mrf.mxu0
  %v418 = vpop.f32.mrf.mxu0
  %v419 = vadd.f32 %v326, %v418
  %v420 = vpop.f32.mrf.mxu0
  %421 = vmatprep.mubr.bf16.mxu0 0
  %422 = vmatmul.mubr.bf16.gmra.mxu0 %v363
  %v423 = vpop.f32.mrf.mxu0
  %v424 = vadd.f32 %v326, %v423
  %v425 = vpop.f32.mrf.mxu0
  %v426 = vpop.f32.mrf.mxu0
  %v427 = vadd.f32 %v326, %v426
  %v428 = vpop.f32.mrf.mxu0
  %429 = vdwg.mxu0
  %v430 = vadd.f32 %v400, %v311
  %v431 = vadd.f32 %v403, %v312
  %v432 = vadd.f32 %v408, %v313
  %v433 = vadd.f32 %v411, %v314
  %v434 = vadd.f32 %v416, %v315
  %v435 = vadd.f32 %v419, %v316
  %v436 = vadd.f32 %v424, %v317
  %v437 = vadd.f32 %v427, %v318
  %v438 = vmax.f32 %v430, 0.0
  %v439 = vmax.f32 %v431, 0.0
  %v440 = vmax.f32 %v432, 0.0
  %v441 = vmax.f32 %v433, 0.0
  %v442 = vmax.f32 %v434, 0.0
  %v443 = vmax.f32 %v435, 0.0
  %v444 = vmax.f32 %v436, 0.0
  %v445 = vmax.f32 %v437, 0.0
  %v446 = vpack.c.bf16 %v216, %v216
  %448 = vrot.lane.b32.xlu0 %v216, 96
  %v449 = vpop.permute.xlu0 %448
  %v451 = vmul.f32 %v90, %v449
  %v452 = vmul.f32 %v91, %v449
  %v453 = vmul.f32 %v92, %v449
  %v454 = vmul.f32 %v93, %v449
  %v455 = vmul.f32 %v94, %v449
  %v456 = vmul.f32 %v95, %v449
  %v457 = vmul.f32 %v96, %v449
  %v458 = vmul.f32 %v97, %v449
  %v459 = vsel %vm120, %v451, 0.0
  %460 = vadd.xlane.f32.xlu0 %v459
  %v461 = vpop.xlane.xlu0 %460
  %v462 = vsel %vm120, %v452, 0.0
  %463 = vadd.xlane.f32.xlu0 %v462
  %v464 = vpop.xlane.xlu0 %463
  %v465 = vsel %vm120, %v453, 0.0
  %466 = vadd.xlane.f32.xlu0 %v465
  %v467 = vpop.xlane.xlu0 %466
  %v468 = vsel %vm120, %v454, 0.0
  %469 = vadd.xlane.f32.xlu0 %v468
  %v470 = vpop.xlane.xlu0 %469
  %v471 = vsel %vm120, %v455, 0.0
  %472 = vadd.xlane.f32.xlu0 %v471
  %v473 = vpop.xlane.xlu0 %472
  %v474 = vsel %vm120, %v456, 0.0
  %475 = vadd.xlane.f32.xlu0 %v474
  %v476 = vpop.xlane.xlu0 %475
  %v477 = vsel %vm120, %v457, 0.0
  %478 = vadd.xlane.f32.xlu0 %v477
  %v479 = vpop.xlane.xlu0 %478
  %v480 = vsel %vm120, %v458, 0.0
  %481 = vadd.xlane.f32.xlu0 %v480
  %v482 = vpop.xlane.xlu0 %481
  %484 = vrot.lane.b32.xlu0 %v446, 112
  %v485 = vpop.permute.xlu0 %484
  %v494 = vlaneseq
  %v495 = vand.u32 %v494, 127
  %v496 = vlaneseq
  %v497 = vshrl.u32 %v496, 7
  %v498 = vsub.s32 %v495, %v497
  %v499 = vrot.slane %v461, %v498
  %v500 = vlaneseq
  %v501 = vshrl.u32 %v500, 7
  %v502 = vsub.s32 %v495, %v501
  %v503 = vrot.slane %v464, %v502
  %v504 = vlaneseq
  %v505 = vshrl.u32 %v504, 7
  %v506 = vsub.s32 %v495, %v505
  %v507 = vrot.slane %v467, %v506
  %v508 = vlaneseq
  %v509 = vshrl.u32 %v508, 7
  %v510 = vsub.s32 %v495, %v509
  %v511 = vrot.slane %v470, %v510
  %v512 = vlaneseq
  %v513 = vshrl.u32 %v512, 7
  %v514 = vsub.s32 %v495, %v513
  %v515 = vrot.slane %v473, %v514
  %v516 = vlaneseq
  %v517 = vshrl.u32 %v516, 7
  %v518 = vsub.s32 %v495, %v517
  %v519 = vrot.slane %v476, %v518
  %v520 = vlaneseq
  %v521 = vshrl.u32 %v520, 7
  %v522 = vsub.s32 %v495, %v521
  %v523 = vrot.slane %v479, %v522
  %v524 = vlaneseq
  %v525 = vshrl.u32 %v524, 7
  %v526 = vsub.s32 %v495, %v525
  %v527 = vrot.slane %v482, %v526
  %vm528 = vcmask 1041409
  %v529 = vsel %vm528, %v503, %v499
  %vm530 = vcmask 1042434
  %v531 = vsel %vm530, %v507, %v529
  %vm532 = vcmask 1043459
  %v533 = vsel %vm532, %v511, %v531
  %vm534 = vcmask 1044484
  %v535 = vsel %vm534, %v515, %v533
  %vm536 = vcmask 1045509
  %v537 = vsel %vm536, %v519, %v535
  %vm538 = vcmask 1046534
  %v539 = vsel %vm538, %v523, %v537
  %vm540 = vcmask 1047559
  %v541 = vsel %vm540, %v527, %v539
  %v544 = vsel %vm120, %v485, 0
  %546 = vmatprep.subr.bf16.mxu0 0
  %547 = vmatpush1.bf16.xpose.msra.mxu0 0
  %548 = vmatprep.subr.bf16.mxu0 0
  %549 = vmatpush1.bf16.xpose.msra.mxu0 0
  %550 = vmatprep.subr.bf16.mxu0 0
  %551 = vmatpush1.bf16.xpose.msra.mxu0 0
  %552 = vmatprep.subr.bf16.mxu0 0
  %553 = vmatpush1.bf16.xpose.msra.mxu0 0
  %554 = vmatprep.subr.bf16.mxu0 0
  %555 = vmatpush1.bf16.xpose.msra.mxu0 0
  %556 = vmatprep.subr.bf16.mxu0 0
  %557 = vmatpush1.bf16.xpose.msra.mxu0 0
  %558 = vmatprep.subr.bf16.mxu0 0
  %559 = vmatpush1.bf16.xpose.msra.mxu0 0
  %560 = vmatprep.subr.bf16.mxu0 0
  %561 = vmatpush1.bf16.xpose.msra.mxu0 %v544
  %562 = vmatprep.subr.bf16.mxu0 0
  %563 = vmatpush2.bf16.xpose.msra.mxu0 0
  %564 = vmatprep.subr.bf16.mxu0 0
  %565 = vmatpush2.bf16.xpose.msra.mxu0 0
  %566 = vmatprep.subr.bf16.mxu0 0
  %567 = vmatpush2.bf16.xpose.msra.mxu0 0
  %568 = vmatprep.subr.bf16.mxu0 0
  %569 = vmatpush2.bf16.xpose.msra.mxu0 0
  %570 = vmatprep.subr.bf16.mxu0 0
  %571 = vmatpush2.bf16.xpose.msra.mxu0 0
  %572 = vmatprep.subr.bf16.mxu0 0
  %573 = vmatpush2.bf16.xpose.msra.mxu0 0
  %574 = vmatprep.subr.bf16.mxu0 0
  %575 = vmatpush2.bf16.xpose.msra.mxu0 0
  %576 = vmatprep.subr.bf16.mxu0 0
  %577 = vmatpush2.bf16.xpose.msra.mxu0 0
  %578 = vmatprep.mubr.bf16.mxu0 0
  %579 = vmatmul.mubr.bf16.gmra.mxu0 %v122
  %v580 = vpop.f32.mrf.mxu0
  %v581 = vadd.f32 %v541, %v580
  %v582 = vpop.f32.mrf.mxu0
  %v583 = vpop.f32.mrf.mxu0
  %v584 = vpop.f32.mrf.mxu0
  %585 = vdwg.mxu0
  %vm586 = vcmask 64512
  %v587 = vsel %vm586, %v581, -inf
  %v588 = vrot.slane %v587, 4
  %v589 = vmax.f32 %v587, %v588
  %v590 = vrot.slane %v589, 2
  %v591 = vmax.f32 %v589, %v590
  %v592 = vrot.slane %v591, 1
  %v593 = vmax.f32 %v591, %v592
  %v594 = vsub.f32 %v581, %v593
  %v595 = vmul.f32 %v594, 1.442695
  %v596 = vpow.pop %v595
  %v597 = vsel %vm586, %v596, 0.0
  %v598 = vrot.slane %v597, 4
  %v599 = vadd.f32 %v597, %v598
  %v600 = vrot.slane %v599, 2
  %v601 = vadd.f32 %v599, %v600
  %v602 = vrot.slane %v601, 1
  %v603 = vadd.f32 %v601, %v602
  %v604 = vrcp.pop %v603
  %v605 = vmul.f32 %v596, %v604
  %v606 = vpack.c.bf16 %v605, %v605
  %607 = vxpose.xlu0.c.b16.start [1/8] %v72, 128
  %608 = vxpose.xlu0.c.b16.cont [2/8] 0, 128
  %609 = vxpose.xlu0.c.b16.cont [3/8] 0, 128
  %610 = vxpose.xlu0.c.b16.cont [4/8] 0, 128
  %611 = vxpose.xlu0.c.b16.cont [5/8] 0, 128
  %612 = vxpose.xlu0.c.b16.cont [6/8] 0, 128
  %613 = vxpose.xlu0.c.b16.cont [7/8] 0, 128
  %614 = vxpose.xlu0.c.b16.end [8/8] 0, 128
  %v615 = vpop.trf.xlu0
  %v616 = vpop.trf.xlu0
  %v617 = vpop.trf.xlu0
  %v618 = vpop.trf.xlu0
  %v619 = vpop.trf.xlu0
  %v620 = vpop.trf.xlu0
  %v621 = vpop.trf.xlu0
  %v622 = vpop.trf.xlu0
  %v624 = vsel %vm586, %v615, 0
  %vm626 = vcmask 1043456
  %v628 = vsel %vm626, %v606, 0
  %630 = vmatprep.subr.bf16.mxu0 0
  %631 = vmatpush1.bf16.msra.mxu0 0
  %632 = vmatprep.subr.bf16.mxu0 0
  %633 = vmatpush1.bf16.msra.mxu0 0
  %634 = vmatprep.subr.bf16.mxu0 0
  %635 = vmatpush1.bf16.msra.mxu0 0
  %636 = vmatprep.subr.bf16.mxu0 0
  %637 = vmatpush1.bf16.msra.mxu0 0
  %638 = vmatprep.subr.bf16.mxu0 0
  %639 = vmatpush1.bf16.msra.mxu0 0
  %640 = vmatprep.subr.bf16.mxu0 0
  %641 = vmatpush1.bf16.msra.mxu0 0
  %642 = vmatprep.subr.bf16.mxu0 0
  %643 = vmatpush1.bf16.msra.mxu0 0
  %644 = vmatprep.subr.bf16.mxu0 0
  %645 = vmatpush1.bf16.msra.mxu0 %v628
  %646 = vmatprep.subr.bf16.mxu0 0
  %647 = vmatpush2.bf16.msra.mxu0 0
  %648 = vmatprep.subr.bf16.mxu0 0
  %649 = vmatpush2.bf16.msra.mxu0 0
  %650 = vmatprep.subr.bf16.mxu0 0
  %651 = vmatpush2.bf16.msra.mxu0 0
  %652 = vmatprep.subr.bf16.mxu0 0
  %653 = vmatpush2.bf16.msra.mxu0 0
  %654 = vmatprep.subr.bf16.mxu0 0
  %655 = vmatpush2.bf16.msra.mxu0 0
  %656 = vmatprep.subr.bf16.mxu0 0
  %657 = vmatpush2.bf16.msra.mxu0 0
  %658 = vmatprep.subr.bf16.mxu0 0
  %659 = vmatpush2.bf16.msra.mxu0 0
  %660 = vmatprep.subr.bf16.mxu0 0
  %661 = vmatpush2.bf16.msra.mxu0 0
  %662 = vmatprep.mubr.bf16.mxu0 0
  %663 = vmatmul.mubr.bf16.gmra.mxu0 %v624
  %v664 = vpop.f32.mrf.mxu0
  %v665 = vadd.f32 0.0, %v664
  %v666 = vpop.f32.mrf.mxu0
  %v667 = vpop.f32.mrf.mxu0
  %v668 = vadd.f32 0.0, %v667
  %v669 = vpop.f32.mrf.mxu0
  %670 = vdwg.mxu0
  %v671 = vlaneseq
  %v672 = vshrl.u32 %v671, 7
  %v673 = vsub.s32 0, %v672
  %v674 = vrot.slane %v605, %v673
  %676 = vbcast.lane.b32.xlu0 %v674, 256
  %v677 = vpop.permute.xlu0 %676
  %v678 = vlaneseq
  %v679 = vshrl.u32 %v678, 7
  %v680 = vsub.s32 1, %v679
  %v681 = vrot.slane %v605, %v680
  %683 = vbcast.lane.b32.xlu0 %v681, 256
  %v684 = vpop.permute.xlu0 %683
  %v685 = vlaneseq
  %v686 = vshrl.u32 %v685, 7
  %v687 = vsub.s32 2, %v686
  %v688 = vrot.slane %v605, %v687
  %690 = vbcast.lane.b32.xlu0 %v688, 256
  %v691 = vpop.permute.xlu0 %690
  %v692 = vlaneseq
  %v693 = vshrl.u32 %v692, 7
  %v694 = vsub.s32 3, %v693
  %v695 = vrot.slane %v605, %v694
  %697 = vbcast.lane.b32.xlu0 %v695, 256
  %v698 = vpop.permute.xlu0 %697
  %v699 = vlaneseq
  %v700 = vshrl.u32 %v699, 7
  %v701 = vsub.s32 4, %v700
  %v702 = vrot.slane %v605, %v701
  %704 = vbcast.lane.b32.xlu0 %v702, 256
  %v705 = vpop.permute.xlu0 %704
  %v706 = vlaneseq
  %v707 = vshrl.u32 %v706, 7
  %v708 = vsub.s32 5, %v707
  %v709 = vrot.slane %v605, %v708
  %711 = vbcast.lane.b32.xlu0 %v709, 256
  %v712 = vpop.permute.xlu0 %711
  %v713 = vlaneseq
  %v714 = vshrl.u32 %v713, 7
  %v715 = vsub.s32 6, %v714
  %v716 = vrot.slane %v605, %v715
  %718 = vbcast.lane.b32.xlu0 %v716, 256
  %v719 = vpop.permute.xlu0 %718
  %v720 = vlaneseq
  %v721 = vshrl.u32 %v720, 7
  %v722 = vsub.s32 7, %v721
  %v723 = vrot.slane %v605, %v722
  %725 = vbcast.lane.b32.xlu0 %v723, 256
  %v726 = vpop.permute.xlu0 %725
  %v727 = vmul.f32 %v90, %v677
  %v728 = vmul.f32 %v91, %v684
  %v729 = vmul.f32 %v92, %v691
  %v730 = vmul.f32 %v93, %v698
  %v731 = vmul.f32 %v94, %v705
  %v732 = vmul.f32 %v95, %v712
  %v733 = vmul.f32 %v96, %v719
  %v734 = vmul.f32 %v97, %v726
  %v735 = vsel %vm120, %v727, 0.0
  %v736 = vsel %vm120, %v728, 0.0
  %v737 = vadd.f32 %v735, %v736
  %v738 = vsel %vm120, %v729, 0.0
  %v739 = vadd.f32 %v737, %v738
  %v740 = vsel %vm120, %v730, 0.0
  %v741 = vadd.f32 %v739, %v740
  %v742 = vsel %vm120, %v731, 0.0
  %v743 = vadd.f32 %v741, %v742
  %v744 = vsel %vm120, %v732, 0.0
  %v745 = vadd.f32 %v743, %v744
  %v746 = vsel %vm120, %v733, 0.0
  %v747 = vadd.f32 %v745, %v746
  %v748 = vsel %vm120, %v734, 0.0
  %v749 = vadd.f32 %v747, %v748
  %v750 = vpack.c.bf16 %v159, %v159
  %751 = vrot.lane.b32.xlu0 %v274, 96
  %v752 = vpop.permute.xlu0 %751
  %753 = vrot.lane.b32.xlu0 %v278, 96
  %v754 = vpop.permute.xlu0 %753
  %755 = vrot.lane.b32.xlu0 %v282, 96
  %v756 = vpop.permute.xlu0 %755
  %757 = vrot.lane.b32.xlu0 %v286, 96
  %v758 = vpop.permute.xlu0 %757
  %759 = vrot.lane.b32.xlu0 %v290, 96
  %v760 = vpop.permute.xlu0 %759
  %761 = vrot.lane.b32.xlu0 %v294, 96
  %v762 = vpop.permute.xlu0 %761
  %763 = vrot.lane.b32.xlu0 %v298, 96
  %v764 = vpop.permute.xlu0 %763
  %765 = vrot.lane.b32.xlu0 %v302, 96
  %v766 = vpop.permute.xlu0 %765
  %v775 = vmul.f32 %v98, %v752
  %v776 = vmul.f32 %v99, %v754
  %v777 = vmul.f32 %v100, %v756
  %v778 = vmul.f32 %v101, %v758
  %v779 = vmul.f32 %v102, %v760
  %v780 = vmul.f32 %v103, %v762
  %v781 = vmul.f32 %v104, %v764
  %v782 = vmul.f32 %v105, %v766
  %v783 = vsel %vm120, %v775, 0.0
  %784 = vadd.xlane.f32.xlu0 %v783
  %v785 = vpop.xlane.xlu0 %784
  %v786 = vsel %vm120, %v776, 0.0
  %787 = vadd.xlane.f32.xlu0 %v786
  %v788 = vpop.xlane.xlu0 %787
  %v789 = vsel %vm120, %v777, 0.0
  %790 = vadd.xlane.f32.xlu0 %v789
  %v791 = vpop.xlane.xlu0 %790
  %v792 = vsel %vm120, %v778, 0.0
  %793 = vadd.xlane.f32.xlu0 %v792
  %v794 = vpop.xlane.xlu0 %793
  %v795 = vsel %vm120, %v779, 0.0
  %796 = vadd.xlane.f32.xlu0 %v795
  %v797 = vpop.xlane.xlu0 %796
  %v798 = vsel %vm120, %v780, 0.0
  %799 = vadd.xlane.f32.xlu0 %v798
  %v800 = vpop.xlane.xlu0 %799
  %v801 = vsel %vm120, %v781, 0.0
  %802 = vadd.xlane.f32.xlu0 %v801
  %v803 = vpop.xlane.xlu0 %802
  %v804 = vsel %vm120, %v782, 0.0
  %805 = vadd.xlane.f32.xlu0 %v804
  %v806 = vpop.xlane.xlu0 %805
  %808 = vrot.lane.b32.xlu0 %v750, 112
  %v809 = vpop.permute.xlu0 %808
  %v818 = vlaneseq
  %v819 = vshrl.u32 %v818, 7
  %v820 = vsub.s32 %v495, %v819
  %v821 = vrot.slane %v785, %v820
  %v822 = vlaneseq
  %v823 = vshrl.u32 %v822, 7
  %v824 = vsub.s32 %v495, %v823
  %v825 = vrot.slane %v788, %v824
  %v826 = vlaneseq
  %v827 = vshrl.u32 %v826, 7
  %v828 = vsub.s32 %v495, %v827
  %v829 = vrot.slane %v791, %v828
  %v830 = vlaneseq
  %v831 = vshrl.u32 %v830, 7
  %v832 = vsub.s32 %v495, %v831
  %v833 = vrot.slane %v794, %v832
  %v834 = vlaneseq
  %v835 = vshrl.u32 %v834, 7
  %v836 = vsub.s32 %v495, %v835
  %v837 = vrot.slane %v797, %v836
  %v838 = vlaneseq
  %v839 = vshrl.u32 %v838, 7
  %v840 = vsub.s32 %v495, %v839
  %v841 = vrot.slane %v800, %v840
  %v842 = vlaneseq
  %v843 = vshrl.u32 %v842, 7
  %v844 = vsub.s32 %v495, %v843
  %v845 = vrot.slane %v803, %v844
  %v846 = vlaneseq
  %v847 = vshrl.u32 %v846, 7
  %v848 = vsub.s32 %v495, %v847
  %v849 = vrot.slane %v806, %v848
  %v850 = vsel %vm528, %v825, %v821
  %v851 = vsel %vm530, %v829, %v850
  %v852 = vsel %vm532, %v833, %v851
  %v853 = vsel %vm534, %v837, %v852
  %v854 = vsel %vm536, %v841, %v853
  %v855 = vsel %vm538, %v845, %v854
  %v856 = vsel %vm540, %v849, %v855
  %v859 = vsel %vm120, %v809, 0
  %861 = vmatprep.subr.bf16.mxu0 0
  %862 = vmatpush1.bf16.xpose.msra.mxu0 0
  %863 = vmatprep.subr.bf16.mxu0 0
  %864 = vmatpush1.bf16.xpose.msra.mxu0 0
  %865 = vmatprep.subr.bf16.mxu0 0
  %866 = vmatpush1.bf16.xpose.msra.mxu0 0
  %867 = vmatprep.subr.bf16.mxu0 0
  %868 = vmatpush1.bf16.xpose.msra.mxu0 0
  %869 = vmatprep.subr.bf16.mxu0 0
  %870 = vmatpush1.bf16.xpose.msra.mxu0 0
  %871 = vmatprep.subr.bf16.mxu0 0
  %872 = vmatpush1.bf16.xpose.msra.mxu0 0
  %873 = vmatprep.subr.bf16.mxu0 0
  %874 = vmatpush1.bf16.xpose.msra.mxu0 0
  %875 = vmatprep.subr.bf16.mxu0 0
  %876 = vmatpush1.bf16.xpose.msra.mxu0 %v179
  %877 = vmatprep.subr.bf16.mxu0 0
  %878 = vmatpush2.bf16.xpose.msra.mxu0 0
  %879 = vmatprep.subr.bf16.mxu0 0
  %880 = vmatpush2.bf16.xpose.msra.mxu0 0
  %881 = vmatprep.subr.bf16.mxu0 0
  %882 = vmatpush2.bf16.xpose.msra.mxu0 0
  %883 = vmatprep.subr.bf16.mxu0 0
  %884 = vmatpush2.bf16.xpose.msra.mxu0 0
  %885 = vmatprep.subr.bf16.mxu0 0
  %886 = vmatpush2.bf16.xpose.msra.mxu0 0
  %887 = vmatprep.subr.bf16.mxu0 0
  %888 = vmatpush2.bf16.xpose.msra.mxu0 0
  %889 = vmatprep.subr.bf16.mxu0 0
  %890 = vmatpush2.bf16.xpose.msra.mxu0 0
  %891 = vmatprep.subr.bf16.mxu0 0
  %892 = vmatpush2.bf16.xpose.msra.mxu0 0
  %893 = vmatprep.mubr.bf16.mxu0 0
  %894 = vmatmul.mubr.bf16.gmra.mxu0 %v859
  %v895 = vpop.f32.mrf.mxu0
  %v896 = vadd.f32 %v856, %v895
  %v897 = vpop.f32.mrf.mxu0
  %v898 = vpop.f32.mrf.mxu0
  %v899 = vpop.f32.mrf.mxu0
  %900 = vdwg.mxu0
  %v901 = vsel %vm586, %v896, -inf
  %902 = vmax.xlane.f32.xlu0 %v901
  %v903 = vpop.xlane.xlu0 %902
  %v904 = vsub.f32 %v896, %v903
  %v905 = vmul.f32 %v904, 1.442695
  %v906 = vpow.pop %v905
  %v907 = vsel %vm586, %v906, 0.0
  %908 = vadd.xlane.f32.xlu0 %v907
  %v909 = vpop.xlane.xlu0 %908
  %v910 = vrcp.pop %v909
  %v911 = vmul.f32 %v906, %v910
  %v912 = vpack.c.bf16 %v911, %v911
  %v914 = vsel %vm586, %v912, 0
  %v916 = vsel %vm626, %v73, 0
  %918 = vmatprep.subr.bf16.mxu0 0
  %919 = vmatpush1.bf16.msra.mxu0 0
  %920 = vmatprep.subr.bf16.mxu0 0
  %921 = vmatpush1.bf16.msra.mxu0 0
  %922 = vmatprep.subr.bf16.mxu0 0
  %923 = vmatpush1.bf16.msra.mxu0 0
  %924 = vmatprep.subr.bf16.mxu0 0
  %925 = vmatpush1.bf16.msra.mxu0 0
  %926 = vmatprep.subr.bf16.mxu0 0
  %927 = vmatpush1.bf16.msra.mxu0 0
  %928 = vmatprep.subr.bf16.mxu0 0
  %929 = vmatpush1.bf16.msra.mxu0 0
  %930 = vmatprep.subr.bf16.mxu0 0
  %931 = vmatpush1.bf16.msra.mxu0 0
  %932 = vmatprep.subr.bf16.mxu0 0
  %933 = vmatpush1.bf16.msra.mxu0 %v916
  %934 = vmatprep.subr.bf16.mxu0 0
  %935 = vmatpush2.bf16.msra.mxu0 0
  %936 = vmatprep.subr.bf16.mxu0 0
  %937 = vmatpush2.bf16.msra.mxu0 0
  %938 = vmatprep.subr.bf16.mxu0 0
  %939 = vmatpush2.bf16.msra.mxu0 0
  %940 = vmatprep.subr.bf16.mxu0 0
  %941 = vmatpush2.bf16.msra.mxu0 0
  %942 = vmatprep.subr.bf16.mxu0 0
  %943 = vmatpush2.bf16.msra.mxu0 0
  %944 = vmatprep.subr.bf16.mxu0 0
  %945 = vmatpush2.bf16.msra.mxu0 0
  %946 = vmatprep.subr.bf16.mxu0 0
  %947 = vmatpush2.bf16.msra.mxu0 0
  %948 = vmatprep.subr.bf16.mxu0 0
  %949 = vmatpush2.bf16.msra.mxu0 0
  %950 = vmatprep.mubr.bf16.mxu0 0
  %951 = vmatmul.mubr.bf16.gmra.mxu0 %v914
  %v952 = vpop.f32.mrf.mxu0
  %v953 = vadd.f32 0.0, %v952
  %v954 = vpop.f32.mrf.mxu0
  %v955 = vpop.f32.mrf.mxu0
  %v956 = vpop.f32.mrf.mxu0
  %957 = vdwg.mxu0
  %v958 = vlaneseq
  %v959 = vshrl.u32 %v958, 7
  %v960 = vsub.s32 0, %v959
  %v961 = vrot.slane %v911, %v960
  %963 = vbcast.lane.b32.xlu0 %v961, 256
  %v964 = vpop.permute.xlu0 %963
  %v965 = vlaneseq
  %v966 = vshrl.u32 %v965, 7
  %v967 = vsub.s32 1, %v966
  %v968 = vrot.slane %v911, %v967
  %970 = vbcast.lane.b32.xlu0 %v968, 256
  %v971 = vpop.permute.xlu0 %970
  %v972 = vlaneseq
  %v973 = vshrl.u32 %v972, 7
  %v974 = vsub.s32 2, %v973
  %v975 = vrot.slane %v911, %v974
  %977 = vbcast.lane.b32.xlu0 %v975, 256
  %v978 = vpop.permute.xlu0 %977
  %v979 = vlaneseq
  %v980 = vshrl.u32 %v979, 7
  %v981 = vsub.s32 3, %v980
  %v982 = vrot.slane %v911, %v981
  %984 = vbcast.lane.b32.xlu0 %v982, 256
  %v985 = vpop.permute.xlu0 %984
  %v986 = vlaneseq
  %v987 = vshrl.u32 %v986, 7
  %v988 = vsub.s32 4, %v987
  %v989 = vrot.slane %v911, %v988
  %991 = vbcast.lane.b32.xlu0 %v989, 256
  %v992 = vpop.permute.xlu0 %991
  %v993 = vlaneseq
  %v994 = vshrl.u32 %v993, 7
  %v995 = vsub.s32 5, %v994
  %v996 = vrot.slane %v911, %v995
  %998 = vbcast.lane.b32.xlu0 %v996, 256
  %v999 = vpop.permute.xlu0 %998
  %v1000 = vlaneseq
  %v1001 = vshrl.u32 %v1000, 7
  %v1002 = vsub.s32 6, %v1001
  %v1003 = vrot.slane %v911, %v1002
  %1005 = vbcast.lane.b32.xlu0 %v1003, 256
  %v1006 = vpop.permute.xlu0 %1005
  %v1007 = vlaneseq
  %v1008 = vshrl.u32 %v1007, 7
  %v1009 = vsub.s32 7, %v1008
  %v1010 = vrot.slane %v911, %v1009
  %1012 = vbcast.lane.b32.xlu0 %v1010, 256
  %v1013 = vpop.permute.xlu0 %1012
  %v1014 = vmul.f32 %v98, %v964
  %v1015 = vmul.f32 %v99, %v971
  %v1016 = vmul.f32 %v100, %v978
  %v1017 = vmul.f32 %v101, %v985
  %v1018 = vmul.f32 %v102, %v992
  %v1019 = vmul.f32 %v103, %v999
  %v1020 = vmul.f32 %v104, %v1006
  %v1021 = vmul.f32 %v105, %v1013
  %v1022 = vsel %vm120, %v1014, 0.0
  %v1023 = vrot.slane %v1022, 4
  %v1024 = vadd.f32 %v1022, %v1023
  %v1025 = vrot.slane %v1024, 2
  %v1026 = vadd.f32 %v1024, %v1025
  %v1027 = vrot.slane %v1026, 1
  %v1028 = vadd.f32 %v1026, %v1027
  %v1029 = vsel %vm120, %v1015, 0.0
  %v1030 = vrot.slane %v1029, 4
  %v1031 = vadd.f32 %v1029, %v1030
  %v1032 = vrot.slane %v1031, 2
  %v1033 = vadd.f32 %v1031, %v1032
  %v1034 = vrot.slane %v1033, 1
  %v1035 = vadd.f32 %v1033, %v1034
  %v1036 = vsel %vm120, %v1016, 0.0
  %v1037 = vrot.slane %v1036, 4
  %v1038 = vadd.f32 %v1036, %v1037
  %v1039 = vrot.slane %v1038, 2
  %v1040 = vadd.f32 %v1038, %v1039
  %v1041 = vrot.slane %v1040, 1
  %v1042 = vadd.f32 %v1040, %v1041
  %v1043 = vsel %vm120, %v1017, 0.0
  %v1044 = vrot.slane %v1043, 4
  %v1045 = vadd.f32 %v1043, %v1044
  %v1046 = vrot.slane %v1045, 2
  %v1047 = vadd.f32 %v1045, %v1046
  %v1048 = vrot.slane %v1047, 1
  %v1049 = vadd.f32 %v1047, %v1048
  %v1050 = vsel %vm120, %v1018, 0.0
  %v1051 = vrot.slane %v1050, 4
  %v1052 = vadd.f32 %v1050, %v1051
  %v1053 = vrot.slane %v1052, 2
  %v1054 = vadd.f32 %v1052, %v1053
  %v1055 = vrot.slane %v1054, 1
  %v1056 = vadd.f32 %v1054, %v1055
  %v1057 = vsel %vm120, %v1019, 0.0
  %v1058 = vrot.slane %v1057, 4
  %v1059 = vadd.f32 %v1057, %v1058
  %v1060 = vrot.slane %v1059, 2
  %v1061 = vadd.f32 %v1059, %v1060
  %v1062 = vrot.slane %v1061, 1
  %v1063 = vadd.f32 %v1061, %v1062
  %v1064 = vsel %vm120, %v1020, 0.0
  %v1065 = vrot.slane %v1064, 4
  %v1066 = vadd.f32 %v1064, %v1065
  %v1067 = vrot.slane %v1066, 2
  %v1068 = vadd.f32 %v1066, %v1067
  %v1069 = vrot.slane %v1068, 1
  %v1070 = vadd.f32 %v1068, %v1069
  %v1071 = vsel %vm120, %v1021, 0.0
  %v1072 = vrot.slane %v1071, 4
  %v1073 = vadd.f32 %v1071, %v1072
  %v1074 = vrot.slane %v1073, 2
  %v1075 = vadd.f32 %v1073, %v1074
  %v1076 = vrot.slane %v1075, 1
  %v1077 = vadd.f32 %v1075, %v1076
  %v1078 = vpack.c.bf16 %v953, %v953
  %v1079 = vld [vmem:[%s10] sm:$0xf]
  %v1080 = vld [vmem:[%s10 + $0x4] sm:$0xf]
  %v1081 = vpack.c.bf16 %v1028, %v1028
  %v1082 = vpack.c.bf16 %v1035, %v1035
  %v1083 = vpack.c.bf16 %v1042, %v1042
  %v1084 = vpack.c.bf16 %v1049, %v1049
  %v1085 = vpack.c.bf16 %v1056, %v1056
  %v1086 = vpack.c.bf16 %v1063, %v1063
  %v1087 = vpack.c.bf16 %v1070, %v1070
  %v1088 = vpack.c.bf16 %v1077, %v1077
  %v1089 = vld [vmem:[%s11] sm:$0xf]
  %v1090 = vld [vmem:[%s11 + $0x4] sm:$0xf]
  %v1099 = vunpack.c.l.b16 %v1081
  %v1100 = vunpack.c.l.b16 %v1082
  %v1101 = vunpack.c.l.b16 %v1083
  %v1102 = vunpack.c.l.b16 %v1084
  %v1103 = vunpack.c.l.b16 %v1085
  %v1104 = vunpack.c.l.b16 %v1086
  %v1105 = vunpack.c.l.b16 %v1087
  %v1106 = vunpack.c.l.b16 %v1088
  %v1107 = vsel %vm528, %v1100, %v1099
  %v1108 = vsel %vm530, %v1101, %v1107
  %v1109 = vsel %vm532, %v1102, %v1108
  %v1110 = vsel %vm534, %v1103, %v1109
  %v1111 = vsel %vm536, %v1104, %v1110
  %v1112 = vsel %vm538, %v1105, %v1111
  %v1113 = vsel %vm540, %v1106, %v1112
  %v1114 = vpack.c.b16 %v1113, %v1113
  %v1117 = vunpack.c.l.b16 %v1089
  %v1118 = vunpack.c.l.b16 %v1090
  %v1119 = vpack.c.b16 %v1118, %v1117
  %v1122 = vsel %vm120, %v1114, 0
  %1124 = vmatprep.subr.bf16.mxu0 0
  %1125 = vmatpush1.bf16.msra.mxu0 0
  %1126 = vmatprep.subr.bf16.mxu0 0
  %1127 = vmatpush1.bf16.msra.mxu0 0
  %1128 = vmatprep.subr.bf16.mxu0 0
  %1129 = vmatpush1.bf16.msra.mxu0 0
  %1130 = vmatprep.subr.bf16.mxu0 0
  %1131 = vmatpush1.bf16.msra.mxu0 0
  %1132 = vmatprep.subr.bf16.mxu0 0
  %1133 = vmatpush1.bf16.msra.mxu0 0
  %1134 = vmatprep.subr.bf16.mxu0 0
  %1135 = vmatpush1.bf16.msra.mxu0 0
  %1136 = vmatprep.subr.bf16.mxu0 0
  %1137 = vmatpush1.bf16.msra.mxu0 0
  %1138 = vmatprep.subr.bf16.mxu0 0
  %1139 = vmatpush1.bf16.msra.mxu0 %v1119
  %1140 = vmatprep.subr.bf16.mxu0 0
  %1141 = vmatpush2.bf16.msra.mxu0 0
  %1142 = vmatprep.subr.bf16.mxu0 0
  %1143 = vmatpush2.bf16.msra.mxu0 0
  %1144 = vmatprep.subr.bf16.mxu0 0
  %1145 = vmatpush2.bf16.msra.mxu0 0
  %1146 = vmatprep.subr.bf16.mxu0 0
  %1147 = vmatpush2.bf16.msra.mxu0 0
  %1148 = vmatprep.subr.bf16.mxu0 0
  %1149 = vmatpush2.bf16.msra.mxu0 0
  %1150 = vmatprep.subr.bf16.mxu0 0
  %1151 = vmatpush2.bf16.msra.mxu0 0
  %1152 = vmatprep.subr.bf16.mxu0 0
  %1153 = vmatpush2.bf16.msra.mxu0 0
  %1154 = vmatprep.subr.bf16.mxu0 0
  %1155 = vmatpush2.bf16.msra.mxu0 0
  %1156 = vmatprep.mubr.bf16.mxu0 0
  %1157 = vmatmul.mubr.bf16.gmra.mxu0 %v1122
  %v1158 = vpop.f32.mrf.mxu0
  %v1159 = vadd.f32 0.0, %v1158
  %v1160 = vpop.f32.mrf.mxu0
  %v1161 = vpop.f32.mrf.mxu0
  %v1162 = vpop.f32.mrf.mxu0
  %1163 = vdwg.mxu0
  %v1166 = vunpack.c.l.b16 %v1079
  %v1167 = vunpack.c.l.b16 %v1080
  %v1168 = vpack.c.b16 %v1167, %v1166
  %v1171 = vsel %vm120, %v1078, 0
  %1173 = vmatprep.subr.bf16.mxu0 0
  %1174 = vmatpush1.bf16.msra.mxu0 0
  %1175 = vmatprep.subr.bf16.mxu0 0
  %1176 = vmatpush1.bf16.msra.mxu0 0
  %1177 = vmatprep.subr.bf16.mxu0 0
  %1178 = vmatpush1.bf16.msra.mxu0 0
  %1179 = vmatprep.subr.bf16.mxu0 0
  %1180 = vmatpush1.bf16.msra.mxu0 0
  %1181 = vmatprep.subr.bf16.mxu0 0
  %1182 = vmatpush1.bf16.msra.mxu0 0
  %1183 = vmatprep.subr.bf16.mxu0 0
  %1184 = vmatpush1.bf16.msra.mxu0 0
  %1185 = vmatprep.subr.bf16.mxu0 0
  %1186 = vmatpush1.bf16.msra.mxu0 0
  %1187 = vmatprep.subr.bf16.mxu0 0
  %1188 = vmatpush1.bf16.msra.mxu0 %v1168
  %1189 = vmatprep.subr.bf16.mxu0 0
  %1190 = vmatpush2.bf16.msra.mxu0 0
  %1191 = vmatprep.subr.bf16.mxu0 0
  %1192 = vmatpush2.bf16.msra.mxu0 0
  %1193 = vmatprep.subr.bf16.mxu0 0
  %1194 = vmatpush2.bf16.msra.mxu0 0
  %1195 = vmatprep.subr.bf16.mxu0 0
  %1196 = vmatpush2.bf16.msra.mxu0 0
  %1197 = vmatprep.subr.bf16.mxu0 0
  %1198 = vmatpush2.bf16.msra.mxu0 0
  %1199 = vmatprep.subr.bf16.mxu0 0
  %1200 = vmatpush2.bf16.msra.mxu0 0
  %1201 = vmatprep.subr.bf16.mxu0 0
  %1202 = vmatpush2.bf16.msra.mxu0 0
  %1203 = vmatprep.subr.bf16.mxu0 0
  %1204 = vmatpush2.bf16.msra.mxu0 0
  %1205 = vmatprep.mubr.bf16.mxu0 0
  %1206 = vmatmul.mubr.bf16.gmra.mxu0 %v1171
  %v1207 = vpop.f32.mrf.mxu0
  %v1208 = vadd.f32 %v1159, %v1207
  %v1209 = vpop.f32.mrf.mxu0
  %v1210 = vpop.f32.mrf.mxu0
  %v1211 = vpop.f32.mrf.mxu0
  %1212 = vdwg.mxu0
  %v1213 = vld [vmem:[%s12] sm:$0x1]
  %v1214 = vunpack.c.l.bf16 %v1213
  %v1215 = vlaneseq
  %v1216 = vshrl.u32 %v1215, 7
  %v1217 = vsub.s32 0, %v1216
  %v1218 = vrot.slane %v1214, %v1217
  %v1219 = vadd.f32 %v1208, %v1218
  %v1220 = vmax.f32 %v1219, 0.0
  %v1221 = vpack.c.bf16 %v668, %v665
  %v1222 = vld [vmem:[%s13] sm:$0xf]
  %v1223 = vld [vmem:[%s13 + $0x4] sm:$0xf]
  %v1224 = vpack.c.bf16 %v749, %v749
  %v1225 = vld [vmem:[%s14] sm:$0xf]
  %v1226 = vld [vmem:[%s14 + $0x4] sm:$0xf]
  %v1229 = vunpack.c.l.b16 %v1225
  %v1230 = vunpack.c.l.b16 %v1226
  %v1231 = vpack.c.b16 %v1230, %v1229
  %v1234 = vsel %vm120, %v1224, 0
  %1236 = vmatprep.subr.bf16.mxu0 0
  %1237 = vmatpush1.bf16.msra.mxu0 0
  %1238 = vmatprep.subr.bf16.mxu0 0
  %1239 = vmatpush1.bf16.msra.mxu0 0
  %1240 = vmatprep.subr.bf16.mxu0 0
  %1241 = vmatpush1.bf16.msra.mxu0 0
  %1242 = vmatprep.subr.bf16.mxu0 0
  %1243 = vmatpush1.bf16.msra.mxu0 0
  %1244 = vmatprep.subr.bf16.mxu0 0
  %1245 = vmatpush1.bf16.msra.mxu0 0
  %1246 = vmatprep.subr.bf16.mxu0 0
  %1247 = vmatpush1.bf16.msra.mxu0 0
  %1248 = vmatprep.subr.bf16.mxu0 0
  %1249 = vmatpush1.bf16.msra.mxu0 0
  %1250 = vmatprep.subr.bf16.mxu0 0
  %1251 = vmatpush1.bf16.msra.mxu0 %v1231
  %1252 = vmatprep.subr.bf16.mxu0 0
  %1253 = vmatpush2.bf16.msra.mxu0 0
  %1254 = vmatprep.subr.bf16.mxu0 0
  %1255 = vmatpush2.bf16.msra.mxu0 0
  %1256 = vmatprep.subr.bf16.mxu0 0
  %1257 = vmatpush2.bf16.msra.mxu0 0
  %1258 = vmatprep.subr.bf16.mxu0 0
  %1259 = vmatpush2.bf16.msra.mxu0 0
  %1260 = vmatprep.subr.bf16.mxu0 0
  %1261 = vmatpush2.bf16.msra.mxu0 0
  %1262 = vmatprep.subr.bf16.mxu0 0
  %1263 = vmatpush2.bf16.msra.mxu0 0
  %1264 = vmatprep.subr.bf16.mxu0 0
  %1265 = vmatpush2.bf16.msra.mxu0 0
  %1266 = vmatprep.subr.bf16.mxu0 0
  %1267 = vmatpush2.bf16.msra.mxu0 0
  %1268 = vmatprep.mubr.bf16.mxu0 0
  %1269 = vmatmul.mubr.bf16.gmra.mxu0 %v1234
  %v1270 = vpop.f32.mrf.mxu0
  %v1271 = vadd.f32 0.0, %v1270
  %v1272 = vpop.f32.mrf.mxu0
  %v1273 = vpop.f32.mrf.mxu0
  %v1274 = vpop.f32.mrf.mxu0
  %1275 = vdwg.mxu0
  %1276 = vxpose.xlu0.c.b16.start [1/8] %v1221, 128
  %1277 = vxpose.xlu0.c.b16.cont [2/8] 0, 128
  %1278 = vxpose.xlu0.c.b16.cont [3/8] 0, 128
  %1279 = vxpose.xlu0.c.b16.cont [4/8] 0, 128
  %1280 = vxpose.xlu0.c.b16.cont [5/8] 0, 128
  %1281 = vxpose.xlu0.c.b16.cont [6/8] 0, 128
  %1282 = vxpose.xlu0.c.b16.cont [7/8] 0, 128
  %1283 = vxpose.xlu0.c.b16.end [8/8] 0, 128
  %v1284 = vpop.trf.xlu0
  %v1285 = vpop.trf.xlu0
  %v1286 = vpop.trf.xlu0
  %v1287 = vpop.trf.xlu0
  %v1288 = vpop.trf.xlu0
  %v1289 = vpop.trf.xlu0
  %v1290 = vpop.trf.xlu0
  %v1291 = vpop.trf.xlu0
  %v1294 = vunpack.c.l.b16 %v1222
  %v1295 = vunpack.c.l.b16 %v1223
  %v1296 = vpack.c.b16 %v1295, %v1294
  %v1299 = vsel %vm120, %v1284, 0
  %1301 = vmatprep.subr.bf16.mxu0 0
  %1302 = vmatpush1.bf16.msra.mxu0 0
  %1303 = vmatprep.subr.bf16.mxu0 0
  %1304 = vmatpush1.bf16.msra.mxu0 0
  %1305 = vmatprep.subr.bf16.mxu0 0
  %1306 = vmatpush1.bf16.msra.mxu0 0
  %1307 = vmatprep.subr.bf16.mxu0 0
  %1308 = vmatpush1.bf16.msra.mxu0 0
  %1309 = vmatprep.subr.bf16.mxu0 0
  %1310 = vmatpush1.bf16.msra.mxu0 0
  %1311 = vmatprep.subr.bf16.mxu0 0
  %1312 = vmatpush1.bf16.msra.mxu0 0
  %1313 = vmatprep.subr.bf16.mxu0 0
  %1314 = vmatpush1.bf16.msra.mxu0 0
  %1315 = vmatprep.subr.bf16.mxu0 0
  %1316 = vmatpush1.bf16.msra.mxu0 %v1296
  %1317 = vmatprep.subr.bf16.mxu0 0
  %1318 = vmatpush2.bf16.msra.mxu0 0
  %1319 = vmatprep.subr.bf16.mxu0 0
  %1320 = vmatpush2.bf16.msra.mxu0 0
  %1321 = vmatprep.subr.bf16.mxu0 0
  %1322 = vmatpush2.bf16.msra.mxu0 0
  %1323 = vmatprep.subr.bf16.mxu0 0
  %1324 = vmatpush2.bf16.msra.mxu0 0
  %1325 = vmatprep.subr.bf16.mxu0 0
  %1326 = vmatpush2.bf16.msra.mxu0 0
  %1327 = vmatprep.subr.bf16.mxu0 0
  %1328 = vmatpush2.bf16.msra.mxu0 0
  %1329 = vmatprep.subr.bf16.mxu0 0
  %1330 = vmatpush2.bf16.msra.mxu0 0
  %1331 = vmatprep.subr.bf16.mxu0 0
  %1332 = vmatpush2.bf16.msra.mxu0 0
  %1333 = vmatprep.mubr.bf16.mxu0 0
  %1334 = vmatmul.mubr.bf16.gmra.mxu0 %v1299
  %v1335 = vpop.f32.mrf.mxu0
  %v1336 = vadd.f32 %v1271, %v1335
  %v1337 = vpop.f32.mrf.mxu0
  %v1338 = vpop.f32.mrf.mxu0
  %v1339 = vpop.f32.mrf.mxu0
  %1340 = vdwg.mxu0
  %v1341 = vld [vmem:[%s15] sm:$0x1]
  %v1342 = vunpack.c.l.bf16 %v1341
  %v1343 = vlaneseq
  %v1344 = vshrl.u32 %v1343, 7
  %v1345 = vsub.s32 0, %v1344
  %v1346 = vrot.slane %v1342, %v1345
  %v1347 = vadd.f32 %v1336, %v1346
  %v1348 = vmax.f32 %v1347, 0.0
  %v1349 = vpack.c.bf16 %v439, %v438
  %v1350 = vpack.c.bf16 %v441, %v440
  %v1351 = vpack.c.bf16 %v443, %v442
  %v1352 = vpack.c.bf16 %v445, %v444
  %v1353 = vld [vmem:[%s16] sm:$0xf]
  %v1354 = vld [vmem:[%s16 + $0x4] sm:$0xf]
  %v1357 = vunpack.c.l.b16 %v1353
  %v1358 = vunpack.c.l.b16 %v1354
  %v1359 = vpack.c.b16 %v1358, %v1357
  %v1362 = vsel %vm120, %v1349, 0
  %v1365 = vsel %vm120, %v1350, 0
  %v1368 = vsel %vm120, %v1351, 0
  %v1371 = vsel %vm120, %v1352, 0
  %1373 = vmatprep.subr.bf16.mxu0 0
  %1374 = vmatpush1.bf16.msra.mxu0 0
  %1375 = vmatprep.subr.bf16.mxu0 0
  %1376 = vmatpush1.bf16.msra.mxu0 0
  %1377 = vmatprep.subr.bf16.mxu0 0
  %1378 = vmatpush1.bf16.msra.mxu0 0
  %1379 = vmatprep.subr.bf16.mxu0 0
  %1380 = vmatpush1.bf16.msra.mxu0 0
  %1381 = vmatprep.subr.bf16.mxu0 0
  %1382 = vmatpush1.bf16.msra.mxu0 0
  %1383 = vmatprep.subr.bf16.mxu0 0
  %1384 = vmatpush1.bf16.msra.mxu0 0
  %1385 = vmatprep.subr.bf16.mxu0 0
  %1386 = vmatpush1.bf16.msra.mxu0 0
  %1387 = vmatprep.subr.bf16.mxu0 0
  %1388 = vmatpush1.bf16.msra.mxu0 %v1359
  %1389 = vmatprep.subr.bf16.mxu0 0
  %1390 = vmatpush2.bf16.msra.mxu0 0
  %1391 = vmatprep.subr.bf16.mxu0 0
  %1392 = vmatpush2.bf16.msra.mxu0 0
  %1393 = vmatprep.subr.bf16.mxu0 0
  %1394 = vmatpush2.bf16.msra.mxu0 0
  %1395 = vmatprep.subr.bf16.mxu0 0
  %1396 = vmatpush2.bf16.msra.mxu0 0
  %1397 = vmatprep.subr.bf16.mxu0 0
  %1398 = vmatpush2.bf16.msra.mxu0 0
  %1399 = vmatprep.subr.bf16.mxu0 0
  %1400 = vmatpush2.bf16.msra.mxu0 0
  %1401 = vmatprep.subr.bf16.mxu0 0
  %1402 = vmatpush2.bf16.msra.mxu0 0
  %1403 = vmatprep.subr.bf16.mxu0 0
  %1404 = vmatpush2.bf16.msra.mxu0 0
  %1405 = vmatprep.mubr.bf16.mxu0 0
  %1406 = vmatmul.mubr.bf16.gmra.mxu0 %v1362
  %v1407 = vpop.f32.mrf.mxu0
  %v1408 = vadd.f32 0.0, %v1407
  %v1409 = vpop.f32.mrf.mxu0
  %v1410 = vpop.f32.mrf.mxu0
  %v1411 = vadd.f32 0.0, %v1410
  %v1412 = vpop.f32.mrf.mxu0
  %1413 = vmatprep.mubr.bf16.mxu0 0
  %1414 = vmatmul.mubr.bf16.gmra.mxu0 %v1365
  %v1415 = vpop.f32.mrf.mxu0
  %v1416 = vadd.f32 0.0, %v1415
  %v1417 = vpop.f32.mrf.mxu0
  %v1418 = vpop.f32.mrf.mxu0
  %v1419 = vadd.f32 0.0, %v1418
  %v1420 = vpop.f32.mrf.mxu0
  %1421 = vmatprep.mubr.bf16.mxu0 0
  %1422 = vmatmul.mubr.bf16.gmra.mxu0 %v1368
  %v1423 = vpop.f32.mrf.mxu0
  %v1424 = vadd.f32 0.0, %v1423
  %v1425 = vpop.f32.mrf.mxu0
  %v1426 = vpop.f32.mrf.mxu0
  %v1427 = vadd.f32 0.0, %v1426
  %v1428 = vpop.f32.mrf.mxu0
  %1429 = vmatprep.mubr.bf16.mxu0 0
  %1430 = vmatmul.mubr.bf16.gmra.mxu0 %v1371
  %v1431 = vpop.f32.mrf.mxu0
  %v1432 = vadd.f32 0.0, %v1431
  %v1433 = vpop.f32.mrf.mxu0
  %v1434 = vpop.f32.mrf.mxu0
  %v1435 = vadd.f32 0.0, %v1434
  %v1436 = vpop.f32.mrf.mxu0
  %1437 = vdwg.mxu0
  %v1438 = vld [vmem:[%s17] sm:$0xf]
  %v1439 = vpack.c.bf16 %v1220, %v1220
  %v1440 = vld [vmem:[%s18] sm:$0xf]
  %v1442 = vsel %vm586, %v1439, 0
  %v1445 = vsel %vm626, %v1440, 0
  %1447 = vmatprep.subr.bf16.mxu0 0
  %1448 = vmatpush1.bf16.msra.mxu0 0
  %1449 = vmatprep.subr.bf16.mxu0 0
  %1450 = vmatpush1.bf16.msra.mxu0 0
  %1451 = vmatprep.subr.bf16.mxu0 0
  %1452 = vmatpush1.bf16.msra.mxu0 0
  %1453 = vmatprep.subr.bf16.mxu0 0
  %1454 = vmatpush1.bf16.msra.mxu0 0
  %1455 = vmatprep.subr.bf16.mxu0 0
  %1456 = vmatpush1.bf16.msra.mxu0 0
  %1457 = vmatprep.subr.bf16.mxu0 0
  %1458 = vmatpush1.bf16.msra.mxu0 0
  %1459 = vmatprep.subr.bf16.mxu0 0
  %1460 = vmatpush1.bf16.msra.mxu0 0
  %1461 = vmatprep.subr.bf16.mxu0 0
  %1462 = vmatpush1.bf16.msra.mxu0 %v1445
  %1463 = vmatprep.subr.bf16.mxu0 0
  %1464 = vmatpush2.bf16.msra.mxu0 0
  %1465 = vmatprep.subr.bf16.mxu0 0
  %1466 = vmatpush2.bf16.msra.mxu0 0
  %1467 = vmatprep.subr.bf16.mxu0 0
  %1468 = vmatpush2.bf16.msra.mxu0 0
  %1469 = vmatprep.subr.bf16.mxu0 0
  %1470 = vmatpush2.bf16.msra.mxu0 0
  %1471 = vmatprep.subr.bf16.mxu0 0
  %1472 = vmatpush2.bf16.msra.mxu0 0
  %1473 = vmatprep.subr.bf16.mxu0 0
  %1474 = vmatpush2.bf16.msra.mxu0 0
  %1475 = vmatprep.subr.bf16.mxu0 0
  %1476 = vmatpush2.bf16.msra.mxu0 0
  %1477 = vmatprep.subr.bf16.mxu0 0
  %1478 = vmatpush2.bf16.msra.mxu0 0
  %1479 = vmatprep.mubr.bf16.mxu0 0
  %1480 = vmatmul.mubr.bf16.gmra.mxu0 %v1442
  %v1481 = vpop.f32.mrf.mxu0
  %v1482 = vadd.f32 0.0, %v1481
  %v1483 = vpop.f32.mrf.mxu0
  %v1484 = vpop.f32.mrf.mxu0
  %v1485 = vpop.f32.mrf.mxu0
  %1486 = vdwg.mxu0
  %1487 = vrot.lane.b32.xlu0 %v750, 80
  %v1488 = vpop.permute.xlu0 %1487
  %v1490 = vsel %vm586, %v1488, 0
  %v1493 = vsel %vm626, %v1438, 0
  %1495 = vmatprep.subr.bf16.mxu0 0
  %1496 = vmatpush1.bf16.msra.mxu0 0
  %1497 = vmatprep.subr.bf16.mxu0 0
  %1498 = vmatpush1.bf16.msra.mxu0 0
  %1499 = vmatprep.subr.bf16.mxu0 0
  %1500 = vmatpush1.bf16.msra.mxu0 0
  %1501 = vmatprep.subr.bf16.mxu0 0
  %1502 = vmatpush1.bf16.msra.mxu0 0
  %1503 = vmatprep.subr.bf16.mxu0 0
  %1504 = vmatpush1.bf16.msra.mxu0 0
  %1505 = vmatprep.subr.bf16.mxu0 0
  %1506 = vmatpush1.bf16.msra.mxu0 0
  %1507 = vmatprep.subr.bf16.mxu0 0
  %1508 = vmatpush1.bf16.msra.mxu0 0
  %1509 = vmatprep.subr.bf16.mxu0 0
  %1510 = vmatpush1.bf16.msra.mxu0 %v1493
  %1511 = vmatprep.subr.bf16.mxu0 0
  %1512 = vmatpush2.bf16.msra.mxu0 0
  %1513 = vmatprep.subr.bf16.mxu0 0
  %1514 = vmatpush2.bf16.msra.mxu0 0
  %1515 = vmatprep.subr.bf16.mxu0 0
  %1516 = vmatpush2.bf16.msra.mxu0 0
  %1517 = vmatprep.subr.bf16.mxu0 0
  %1518 = vmatpush2.bf16.msra.mxu0 0
  %1519 = vmatprep.subr.bf16.mxu0 0
  %1520 = vmatpush2.bf16.msra.mxu0 0
  %1521 = vmatprep.subr.bf16.mxu0 0
  %1522 = vmatpush2.bf16.msra.mxu0 0
  %1523 = vmatprep.subr.bf16.mxu0 0
  %1524 = vmatpush2.bf16.msra.mxu0 0
  %1525 = vmatprep.subr.bf16.mxu0 0
  %1526 = vmatpush2.bf16.msra.mxu0 0
  %1527 = vmatprep.mubr.bf16.mxu0 0
  %1528 = vmatmul.mubr.bf16.gmra.mxu0 %v1490
  %v1529 = vpop.f32.mrf.mxu0
  %v1530 = vadd.f32 %v1482, %v1529
  %v1531 = vpop.f32.mrf.mxu0
  %v1532 = vpop.f32.mrf.mxu0
  %v1533 = vpop.f32.mrf.mxu0
  %1534 = vdwg.mxu0
  %v1535 = vld [vmem:[%s19] sm:$0xf]
  %v1536 = vpack.c.bf16 %v1348, %v1348
  %v1537 = vld [vmem:[%s20] sm:$0xf]
  %v1539 = vsel %vm586, %v1536, 0
  %v1542 = vsel %vm626, %v1537, 0
  %1544 = vmatprep.subr.bf16.mxu0 0
  %1545 = vmatpush1.bf16.msra.mxu0 0
  %1546 = vmatprep.subr.bf16.mxu0 0
  %1547 = vmatpush1.bf16.msra.mxu0 0
  %1548 = vmatprep.subr.bf16.mxu0 0
  %1549 = vmatpush1.bf16.msra.mxu0 0
  %1550 = vmatprep.subr.bf16.mxu0 0
  %1551 = vmatpush1.bf16.msra.mxu0 0
  %1552 = vmatprep.subr.bf16.mxu0 0
  %1553 = vmatpush1.bf16.msra.mxu0 0
  %1554 = vmatprep.subr.bf16.mxu0 0
  %1555 = vmatpush1.bf16.msra.mxu0 0
  %1556 = vmatprep.subr.bf16.mxu0 0
  %1557 = vmatpush1.bf16.msra.mxu0 0
  %1558 = vmatprep.subr.bf16.mxu0 0
  %1559 = vmatpush1.bf16.msra.mxu0 %v1542
  %1560 = vmatprep.subr.bf16.mxu0 0
  %1561 = vmatpush2.bf16.msra.mxu0 0
  %1562 = vmatprep.subr.bf16.mxu0 0
  %1563 = vmatpush2.bf16.msra.mxu0 0
  %1564 = vmatprep.subr.bf16.mxu0 0
  %1565 = vmatpush2.bf16.msra.mxu0 0
  %1566 = vmatprep.subr.bf16.mxu0 0
  %1567 = vmatpush2.bf16.msra.mxu0 0
  %1568 = vmatprep.subr.bf16.mxu0 0
  %1569 = vmatpush2.bf16.msra.mxu0 0
  %1570 = vmatprep.subr.bf16.mxu0 0
  %1571 = vmatpush2.bf16.msra.mxu0 0
  %1572 = vmatprep.subr.bf16.mxu0 0
  %1573 = vmatpush2.bf16.msra.mxu0 0
  %1574 = vmatprep.subr.bf16.mxu0 0
  %1575 = vmatpush2.bf16.msra.mxu0 0
  %1576 = vmatprep.mubr.bf16.mxu0 0
  %1577 = vmatmul.mubr.bf16.gmra.mxu0 %v1539
  %v1578 = vpop.f32.mrf.mxu0
  %v1579 = vadd.f32 0.0, %v1578
  %v1580 = vpop.f32.mrf.mxu0
  %v1581 = vpop.f32.mrf.mxu0
  %v1582 = vpop.f32.mrf.mxu0
  %1583 = vdwg.mxu0
  %1584 = vrot.lane.b32.xlu0 %v446, 80
  %v1585 = vpop.permute.xlu0 %1584
  %v1587 = vsel %vm586, %v1585, 0
  %v1590 = vsel %vm626, %v1535, 0
  %1592 = vmatprep.subr.bf16.mxu0 0
  %1593 = vmatpush1.bf16.msra.mxu0 0
  %1594 = vmatprep.subr.bf16.mxu0 0
  %1595 = vmatpush1.bf16.msra.mxu0 0
  %1596 = vmatprep.subr.bf16.mxu0 0
  %1597 = vmatpush1.bf16.msra.mxu0 0
  %1598 = vmatprep.subr.bf16.mxu0 0
  %1599 = vmatpush1.bf16.msra.mxu0 0
  %1600 = vmatprep.subr.bf16.mxu0 0
  %1601 = vmatpush1.bf16.msra.mxu0 0
  %1602 = vmatprep.subr.bf16.mxu0 0
  %1603 = vmatpush1.bf16.msra.mxu0 0
  %1604 = vmatprep.subr.bf16.mxu0 0
  %1605 = vmatpush1.bf16.msra.mxu0 0
  %1606 = vmatprep.subr.bf16.mxu0 0
  %1607 = vmatpush1.bf16.msra.mxu0 %v1590
  %1608 = vmatprep.subr.bf16.mxu0 0
  %1609 = vmatpush2.bf16.msra.mxu0 0
  %1610 = vmatprep.subr.bf16.mxu0 0
  %1611 = vmatpush2.bf16.msra.mxu0 0
  %1612 = vmatprep.subr.bf16.mxu0 0
  %1613 = vmatpush2.bf16.msra.mxu0 0
  %1614 = vmatprep.subr.bf16.mxu0 0
  %1615 = vmatpush2.bf16.msra.mxu0 0
  %1616 = vmatprep.subr.bf16.mxu0 0
  %1617 = vmatpush2.bf16.msra.mxu0 0
  %1618 = vmatprep.subr.bf16.mxu0 0
  %1619 = vmatpush2.bf16.msra.mxu0 0
  %1620 = vmatprep.subr.bf16.mxu0 0
  %1621 = vmatpush2.bf16.msra.mxu0 0
  %1622 = vmatprep.subr.bf16.mxu0 0
  %1623 = vmatpush2.bf16.msra.mxu0 0
  %1624 = vmatprep.mubr.bf16.mxu0 0
  %1625 = vmatmul.mubr.bf16.gmra.mxu0 %v1587
  %v1626 = vpop.f32.mrf.mxu0
  %v1627 = vadd.f32 %v1579, %v1626
  %v1628 = vpop.f32.mrf.mxu0
  %v1629 = vpop.f32.mrf.mxu0
  %v1630 = vpop.f32.mrf.mxu0
  %1631 = vdwg.mxu0
  %v1632 = vld [vmem:[%s21] sm:$0x1]
  %v1633 = vunpack.c.l.bf16 %v1632
  %v1634 = vlaneseq
  %v1635 = vshrl.u32 %v1634, 7
  %v1636 = vsub.s32 0, %v1635
  %v1637 = vrot.slane %v1633, %v1636
  %v1638 = vadd.f32 %v1627, %v1637
  %v1640 = vcombine.high %v1530, %v1530
  %v1642 = vunpack.c.l.s4 1966171168
  %v1643 = vunpack.c.0.s8 %v1642
  %v1644 = vlaneseq
  %v1645 = vshrl.u32 %v1644, 7
  %v1646 = vsub.s32 %v1643, %v1645
  %v1647 = vrot.slane %v1530, %v1646
  %v1649 = vunpack.c.l.s4 1966171168
  %v1650 = vunpack.c.0.s8 %v1649
  %v1651 = vlaneseq
  %v1652 = vshrl.u32 %v1651, 7
  %v1653 = vsub.s32 %v1650, %v1652
  %v1654 = vrot.slane %v1640, %v1653
  %v1655 = vcombine.high %v1647, %v1647
  %v1656 = vcombine.high %v1654, %v1654
  %v1658 = vunpack.c.l.s4 1966171168
  %v1659 = vunpack.c.0.s8 %v1658
  %v1660 = vlaneseq
  %v1661 = vshrl.u32 %v1660, 7
  %v1662 = vsub.s32 %v1659, %v1661
  %v1663 = vrot.slane %v1647, %v1662
  %v1665 = vunpack.c.l.s4 1966171168
  %v1666 = vunpack.c.0.s8 %v1665
  %v1667 = vlaneseq
  %v1668 = vshrl.u32 %v1667, 7
  %v1669 = vsub.s32 %v1666, %v1668
  %v1670 = vrot.slane %v1654, %v1669
  %v1672 = vunpack.c.l.s4 1966171168
  %v1673 = vunpack.c.0.s8 %v1672
  %v1674 = vlaneseq
  %v1675 = vshrl.u32 %v1674, 7
  %v1676 = vsub.s32 %v1673, %v1675
  %v1677 = vrot.slane %v1655, %v1676
  %v1679 = vunpack.c.l.s4 1966171168
  %v1680 = vunpack.c.0.s8 %v1679
  %v1681 = vlaneseq
  %v1682 = vshrl.u32 %v1681, 7
  %v1683 = vsub.s32 %v1680, %v1682
  %v1684 = vrot.slane %v1656, %v1683
  %v1685 = vcombine.high %v1663, %v1663
  %v1686 = vcombine.high %v1670, %v1670
  %v1687 = vcombine.high %v1677, %v1677
  %v1688 = vcombine.high %v1684, %v1684
  %v1689 = vlaneseq
  %v1690 = vshrl.u32 %v1689, 7
  %v1691 = vsub.s32 0, %v1690
  %v1692 = vrot.slane %v1663, %v1691
  %v1693 = vlaneseq
  %v1694 = vshrl.u32 %v1693, 7
  %v1695 = vsub.s32 0, %v1694
  %v1696 = vrot.slane %v1677, %v1695
  %v1697 = vlaneseq
  %v1698 = vshrl.u32 %v1697, 7
  %v1699 = vsub.s32 0, %v1698
  %v1700 = vrot.slane %v1685, %v1699
  %v1701 = vlaneseq
  %v1702 = vshrl.u32 %v1701, 7
  %v1703 = vsub.s32 0, %v1702
  %v1704 = vrot.slane %v1687, %v1703
  %v1705 = vlaneseq
  %v1706 = vshrl.u32 %v1705, 7
  %v1707 = vsub.s32 0, %v1706
  %v1708 = vrot.slane %v1670, %v1707
  %v1709 = vlaneseq
  %v1710 = vshrl.u32 %v1709, 7
  %v1711 = vsub.s32 0, %v1710
  %v1712 = vrot.slane %v1684, %v1711
  %v1713 = vlaneseq
  %v1714 = vshrl.u32 %v1713, 7
  %v1715 = vsub.s32 0, %v1714
  %v1716 = vrot.slane %v1686, %v1715
  %v1717 = vlaneseq
  %v1718 = vshrl.u32 %v1717, 7
  %v1719 = vsub.s32 0, %v1718
  %v1720 = vrot.slane %v1688, %v1719
  %v1729 = vadd.f32 %v1408, %v1692
  %v1730 = vadd.f32 %v1411, %v1696
  %v1731 = vadd.f32 %v1416, %v1700
  %v1732 = vadd.f32 %v1419, %v1704
  %v1733 = vadd.f32 %v1424, %v1708
  %v1734 = vadd.f32 %v1427, %v1712
  %v1735 = vadd.f32 %v1432, %v1716
  %v1736 = vadd.f32 %v1435, %v1720
  %v1737 = vadd.f32 %v1729, %v1638
  %v1738 = vadd.f32 %v1730, %v1638
  %v1739 = vadd.f32 %v1731, %v1638
  %v1740 = vadd.f32 %v1732, %v1638
  %v1741 = vadd.f32 %v1733, %v1638
  %v1742 = vadd.f32 %v1734, %v1638
  %v1743 = vadd.f32 %v1735, %v1638
  %v1744 = vadd.f32 %v1736, %v1638
  %vm1745 = vcmask 15360
  %1746 = vst.msk [vmem:[%s22] sm:$0xff] %vm1745, %v1737
  %1747 = vst.msk [vmem:[%s22 + $0x8] sm:$0xff] %vm1745, %v1738
  %1748 = vst.msk [vmem:[%s22 + $0x10] sm:$0xff] %vm1745, %v1739
  %1749 = vst.msk [vmem:[%s22 + $0x18] sm:$0xff] %vm1745, %v1740
  %1750 = vst.msk [vmem:[%s22 + $0x20] sm:$0xff] %vm1745, %v1741
  %1751 = vst.msk [vmem:[%s22 + $0x28] sm:$0xff] %vm1745, %v1742
  %1752 = vst.msk [vmem:[%s22 + $0x30] sm:$0xff] %vm1745, %v1743
  %1753 = vst.msk [vmem:[%s22 + $0x38] sm:$0xff] %vm1745, %v1744
  // Predicated region
  $region90: #{gas_forward_pallas.3} parent=0 // pred_check
    _
  $region91: #{gas_forward_pallas.3} parent=0 // pred_check_branch
    %1755 = sbr.rel (0) target = $region93
  $region92: #{gas_forward_pallas.3} parent=0 // pred_region
    _
  $region93: #{gas_forward_pallas.3} parent=0 // pred_fallthru
    _
  // Predicated region
  $region94: #{gas_forward_pallas.3} parent=0 // pred_check
    _
  $region95: #{gas_forward_pallas.3} parent=0 // pred_check_branch
    %1757 = sbr.rel (0) target = $region97
  $region96: #{gas_forward_pallas.3} parent=0 // pred_region
    _
  $region97: #{gas_forward_pallas.3} parent=0 // pred_fallthru
    _

</llo_original>
